<compile_context>
chip_gen: v6e
topology: v6e:2x2x1
jax: 0.10.0
libtpu: 0.0.40
codegen_flags: <defaults>
</compile_context>

<pallas_src>
import jax
import jax.numpy as jnp
import numpy as np
from jax.experimental import pallas as pl
from jax.experimental.pallas import tpu as pltpu

# ------------------------------- config -------------------------------------
VOCAB = 50        # config.vocab_size
SEQ = 8           # config.max_position_embeddings / sequence length
HIDDEN = 32       # config.hidden_size
NUM_HEADS = 4     # config.num_attention_heads
HEAD_DIM = HIDDEN // NUM_HEADS
FFN = 64          # config.intermediate_size
NUM_LAYERS = 2    # config.num_encoders_layers
BATCH = 2
BS = BATCH * SEQ
LN_EPS = 1e-5     # torch.nn.LayerNorm default
SCALE = 1.0 / (HEAD_DIM ** 0.5)

_STACKED_ORDER = ("ln1_g", "ln1_b", "wq", "bq", "wk", "bk", "wv", "bv",
                  "wo", "bo", "ln2_g", "ln2_b", "w1", "b1", "w2", "b2")


# ----------------------------- kernel helpers --------------------------------
def _layernorm(x, g, b):
    mu = jnp.mean(x, axis=-1, keepdims=True)
    var = jnp.mean(jnp.square(x - mu), axis=-1, keepdims=True)
    return (x - mu) * jax.lax.rsqrt(var + LN_EPS) * g + b


# ----------------------------- fused kernel ----------------------------------
def _fused_encoder_kernel(ids_ref,              # SMEM  (B*S,) int32
                          tok_ref, pos_ref,     # VMEM  (V,H) f32, (S,H) f32
                          ln1g_ref, ln1b_ref,
                          wq_ref, bq_ref, wk_ref, bk_ref, wv_ref, bv_ref,
                          wo_ref, bo_ref,
                          ln2g_ref, ln2b_ref, w1_ref, b1_ref, w2_ref, b2_ref,
                          out_ref,              # VMEM  (B,S,H) f32
                          x_scratch):           # VMEM  (B*S,H) f32 scratch
    # ---- embedding: gather token rows (SMEM ids -> VMEM table) + positional add
    for r in range(BS):
        tok_id = ids_ref[r]
        x_scratch[pl.ds(r, 1), :] = (tok_ref[pl.ds(tok_id, 1), :]
                                     + pos_ref[pl.ds(r % SEQ, 1), :])

    x = x_scratch[...]                                          # (B*S, H) f32

    # ---- NUM_LAYERS pre-LN transformer encoder layers (static unroll) ----
    for l in range(NUM_LAYERS):
        # ----- x = x + attention(LN1(x)) -----
        h = _layernorm(x, ln1g_ref[l], ln1b_ref[l])
        hb = h.astype(jnp.bfloat16)                             # bf16 operands, f32 acc
        q = jnp.dot(hb, wq_ref[l], preferred_element_type=jnp.float32) + bq_ref[l]
        k = jnp.dot(hb, wk_ref[l], preferred_element_type=jnp.float32) + bk_ref[l]
        v = jnp.dot(hb, wv_ref[l], preferred_element_type=jnp.float32) + bv_ref[l]

        q3 = q.reshape(BATCH, SEQ, HIDDEN)
        k3 = k.reshape(BATCH, SEQ, HIDDEN)
        v3 = v.reshape(BATCH, SEQ, HIDDEN)
        wo_l = wo_ref[l]                                        # (H, H) bf16

        attn = jnp.zeros((BS, HIDDEN), jnp.float32)
        for hd in range(NUM_HEADS):                             # static, 4 heads
            lo = hd * HEAD_DIM
            qh = q3[:, :, lo:lo + HEAD_DIM].astype(jnp.bfloat16)
            kh = k3[:, :, lo:lo + HEAD_DIM].astype(jnp.bfloat16)
            vh = v3[:, :, lo:lo + HEAD_DIM].astype(jnp.bfloat16)
            s = jnp.einsum("bqd,bkd->bqk", qh, kh,
                           preferred_element_type=jnp.float32) * SCALE
            s = s - jnp.max(s, axis=-1, keepdims=True)
            p = jnp.exp(s)
            p = p * pl.reciprocal(jnp.sum(p, axis=-1, keepdims=True), approx=True)
            oh = jnp.einsum("bqk,bkd->bqd", p.astype(jnp.bfloat16), vh,
                            preferred_element_type=jnp.float32)
            oh2 = oh.reshape(BS, HEAD_DIM).astype(jnp.bfloat16)
            # accumulate through the per-head slice of Wo (== concat + one matmul)
            attn = attn + jnp.dot(oh2, wo_l[lo:lo + HEAD_DIM, :],
                                  preferred_element_type=jnp.float32)
        x = x + attn + bo_ref[l]

        # ----- x = x + FFN(LN2(x)) -----
        h2 = _layernorm(x, ln2g_ref[l], ln2b_ref[l])
        ff = jnp.dot(h2.astype(jnp.bfloat16), w1_ref[l],
                     preferred_element_type=jnp.float32) + b1_ref[l]
        ff = jax.nn.gelu(ff, approximate=True)
        ff = jnp.dot(ff.astype(jnp.bfloat16), w2_ref[l],
                     preferred_element_type=jnp.float32) + b2_ref[l]
        x = x + ff

    out_ref[...] = x.reshape(BATCH, SEQ, HIDDEN)


# ------------------------------- model wrapper --------------------------------
def forward(ids, params):
    ids_flat = ids.reshape(-1).astype(jnp.int32)                # (B*S,) -> SMEM
    weights = [params[name] for name in _STACKED_ORDER]
    n_vmem_inputs = 2 + len(weights)                            # tok_emb, pos_emb, weights

    return pl.pallas_call(
        _fused_encoder_kernel,
        out_shape=jax.ShapeDtypeStruct((BATCH, SEQ, HIDDEN), jnp.float32),
        in_specs=([pl.BlockSpec(memory_space=pltpu.MemorySpace.SMEM)]
                  + [pl.BlockSpec(memory_space=pltpu.MemorySpace.VMEM)] * n_vmem_inputs),
        out_specs=pl.BlockSpec(memory_space=pltpu.MemorySpace.VMEM),
        scratch_shapes=[pltpu.VMEM((BS, HIDDEN), jnp.float32)],
    )(ids_flat, params["tok_emb"], params["pos_emb"], *weights)


def init_params(key):
    kt, kp, kl = jax.random.split(key, 3)
    ks = jax.random.split(kl, 12)

    def w(k, *shape):
        return jax.random.normal(k, (NUM_LAYERS,) + shape, jnp.float32) * 0.02

    return {
        "tok_emb": jax.random.normal(kt, (VOCAB, HIDDEN), jnp.float32) * 0.02,
        "pos_emb": jax.random.normal(kp, (SEQ, HIDDEN), jnp.float32) * 0.02,
        "ln1_g": jnp.ones((NUM_LAYERS, 1, HIDDEN), jnp.float32),
        "ln1_b": jnp.zeros((NUM_LAYERS, 1, HIDDEN), jnp.float32),
        "ln2_g": jnp.ones((NUM_LAYERS, 1, HIDDEN), jnp.float32),
        "ln2_b": jnp.zeros((NUM_LAYERS, 1, HIDDEN), jnp.float32),
        # matmul weights stored as bf16 (MXU-native operands); biases/LN in f32
        "wq": w(ks[0], HIDDEN, HIDDEN).astype(jnp.bfloat16), "bq": w(ks[1], 1, HIDDEN),
        "wk": w(ks[2], HIDDEN, HIDDEN).astype(jnp.bfloat16), "bk": w(ks[3], 1, HIDDEN),
        "wv": w(ks[4], HIDDEN, HIDDEN).astype(jnp.bfloat16), "bv": w(ks[5], 1, HIDDEN),
        "wo": w(ks[6], HIDDEN, HIDDEN).astype(jnp.bfloat16), "bo": w(ks[7], 1, HIDDEN),
        "w1": w(ks[8], HIDDEN, FFN).astype(jnp.bfloat16),    "b1": w(ks[9], 1, FFN),
        "w2": w(ks[10], FFN, HIDDEN).astype(jnp.bfloat16),   "b2": w(ks[11], 1, HIDDEN),
    }


# ------------------------------ plain-JAX reference ---------------------------
def _ref_ln(x, g, b):
    mu = jnp.mean(x, axis=-1, keepdims=True)
    var = jnp.mean(jnp.square(x - mu), axis=-1, keepdims=True)
    return (x - mu) * jax.lax.rsqrt(var + LN_EPS) * g + b


def reference_forward(ids, params):
    x = params["tok_emb"][ids] + params["pos_emb"][None]
    B, S, H = x.shape
    for l in range(NUM_LAYERS):
        wq = params["wq"][l].astype(jnp.float32)
        wk = params["wk"][l].astype(jnp.float32)
        wv = params["wv"][l].astype(jnp.float32)
        wo = params["wo"][l].astype(jnp.float32)
        w1 = params["w1"][l].astype(jnp.float32)
        w2 = params["w2"][l].astype(jnp.float32)

        h = _ref_ln(x, params["ln1_g"][l], params["ln1_b"][l])
        q = h @ wq + params["bq"][l]
        k = h @ wk + params["bk"][l]
        v = h @ wv + params["bv"][l]
        qh = q.reshape(B, S, NUM_HEADS, HEAD_DIM).transpose(0, 2, 1, 3)
        kh = k.reshape(B, S, NUM_HEADS, HEAD_DIM).transpose(0, 2, 1, 3)
        vh = v.reshape(B, S, NUM_HEADS, HEAD_DIM).transpose(0, 2, 1, 3)
        s = jnp.einsum("bhqd,bhkd->bhqk", qh, kh) / (HEAD_DIM ** 0.5)
        pmat = jax.nn.softmax(s, axis=-1)
        o = jnp.einsum("bhqk,bhkd->bhqd", pmat, vh)
        o = o.transpose(0, 2, 1, 3).reshape(B, S, H)
        x = x + (o @ wo + params["bo"][l])

        h2 = _ref_ln(x, params["ln2_g"][l], params["ln2_b"][l])
        ff = jax.nn.gelu(h2 @ w1 + params["b1"][l], approximate=True)
        x = x + (ff @ w2 + params["b2"][l])
    return x


# ------------------------------------ main -------------------------------------
if __name__ == "__main__":
    key = jax.random.PRNGKey(0)
    pkey, ikey = jax.random.split(key)
    params = init_params(pkey)
    ids = jax.random.randint(ikey, (BATCH, SEQ), 0, VOCAB, dtype=jnp.int32)

    out = jax.block_until_ready(forward(ids, params))
    ref = reference_forward(ids, params)

    assert out.shape == (BATCH, SEQ, HIDDEN)
    # Tolerance accounts for bf16 MXU operands + approx-reciprocal softmax in the
    # kernel vs the all-f32 reference; measured error is ~1e-3 at these shapes.
    assert np.allclose(np.asarray(out), np.asarray(ref), atol=1e-2, rtol=1e-2), (
        float(np.max(np.abs(np.asarray(out) - np.asarray(ref)))))
    print("KERNEL_OK")
</pallas_src>

<mosaic_0001>
module attributes {stable_mosaic.version = 11 : i64} {
  func.func @_fused_encoder_kernel(%arg0: memref<16xi32, #tpu.memory_space<smem>>, %arg1: memref<50x32xf32, #tpu.memory_space<vmem>>, %arg2: memref<8x32xf32, #tpu.memory_space<vmem>>, %arg3: memref<2x1x32xf32, #tpu.memory_space<vmem>>, %arg4: memref<2x1x32xf32, #tpu.memory_space<vmem>>, %arg5: memref<2x32x32xbf16, #tpu.memory_space<vmem>>, %arg6: memref<2x1x32xf32, #tpu.memory_space<vmem>>, %arg7: memref<2x32x32xbf16, #tpu.memory_space<vmem>>, %arg8: memref<2x1x32xf32, #tpu.memory_space<vmem>>, %arg9: memref<2x32x32xbf16, #tpu.memory_space<vmem>>, %arg10: memref<2x1x32xf32, #tpu.memory_space<vmem>>, %arg11: memref<2x32x32xbf16, #tpu.memory_space<vmem>>, %arg12: memref<2x1x32xf32, #tpu.memory_space<vmem>>, %arg13: memref<2x1x32xf32, #tpu.memory_space<vmem>>, %arg14: memref<2x1x32xf32, #tpu.memory_space<vmem>>, %arg15: memref<2x32x64xbf16, #tpu.memory_space<vmem>>, %arg16: memref<2x1x64xf32, #tpu.memory_space<vmem>>, %arg17: memref<2x64x32xbf16, #tpu.memory_space<vmem>>, %arg18: memref<2x1x32xf32, #tpu.memory_space<vmem>>, %arg19: memref<2x8x32xf32, #tpu.memory_space<vmem>>, %arg20: memref<16x32xf32, #tpu.memory_space<vmem>>) attributes {dimension_semantics = [], scalar_prefetch = 0 : i64, scratch_operands = 1 : i64, tpu.core_type = #tpu.core_type<tc>} {
    %c0 = arith.constant 0 : index
    %0 = memref.load %arg0[%c0] : memref<16xi32, #tpu.memory_space<smem>>
    %1 = arith.index_cast %0 : i32 to index
    %c0_0 = arith.constant 0 : index
    %2 = vector.load %arg1[%1, %c0_0] : memref<50x32xf32, #tpu.memory_space<vmem>>, vector<1x32xf32>
    %c0_1 = arith.constant 0 : index
    %c0_2 = arith.constant 0 : index
    %3 = vector.load %arg2[%c0_1, %c0_2] : memref<8x32xf32, #tpu.memory_space<vmem>>, vector<1x32xf32>
    %4 = arith.addf %2, %3 : vector<1x32xf32>
    %c0_3 = arith.constant 0 : index
    %c0_4 = arith.constant 0 : index
    %5 = vector.load %arg20[%c0_3, %c0_4] : memref<16x32xf32, #tpu.memory_space<vmem>>, vector<1x32xf32>
    tpu.vector_store %arg20[%c0_3, %c0_4], %4 {strides = array<i32>} : memref<16x32xf32, #tpu.memory_space<vmem>>, vector<1x32xf32>,
    %c1 = arith.constant 1 : index
    %6 = memref.load %arg0[%c1] : memref<16xi32, #tpu.memory_space<smem>>
    %7 = arith.index_cast %6 : i32 to index
    %c0_5 = arith.constant 0 : index
    %8 = vector.load %arg1[%7, %c0_5] : memref<50x32xf32, #tpu.memory_space<vmem>>, vector<1x32xf32>
    %c1_6 = arith.constant 1 : index
    %c0_7 = arith.constant 0 : index
    %9 = vector.load %arg2[%c1_6, %c0_7] : memref<8x32xf32, #tpu.memory_space<vmem>>, vector<1x32xf32>
    %10 = arith.addf %8, %9 : vector<1x32xf32>
    %c1_8 = arith.constant 1 : index
    %c0_9 = arith.constant 0 : index
    %11 = vector.load %arg20[%c1_8, %c0_9] : memref<16x32xf32, #tpu.memory_space<vmem>>, vector<1x32xf32>
    tpu.vector_store %arg20[%c1_8, %c0_9], %10 {strides = array<i32>} : memref<16x32xf32, #tpu.memory_space<vmem>>, vector<1x32xf32>,
    %c2 = arith.constant 2 : index
    %12 = memref.load %arg0[%c2] : memref<16xi32, #tpu.memory_space<smem>>
    %13 = arith.index_cast %12 : i32 to index
    %c0_10 = arith.constant 0 : index
    %14 = vector.load %arg1[%13, %c0_10] : memref<50x32xf32, #tpu.memory_space<vmem>>, vector<1x32xf32>
    %c2_11 = arith.constant 2 : index
    %c0_12 = arith.constant 0 : index
    %15 = vector.load %arg2[%c2_11, %c0_12] : memref<8x32xf32, #tpu.memory_space<vmem>>, vector<1x32xf32>
    %16 = arith.addf %14, %15 : vector<1x32xf32>
    %c2_13 = arith.constant 2 : index
    %c0_14 = arith.constant 0 : index
    %17 = vector.load %arg20[%c2_13, %c0_14] : memref<16x32xf32, #tpu.memory_space<vmem>>, vector<1x32xf32>
    tpu.vector_store %arg20[%c2_13, %c0_14], %16 {strides = array<i32>} : memref<16x32xf32, #tpu.memory_space<vmem>>, vector<1x32xf32>,
    %c3 = arith.constant 3 : index
    %18 = memref.load %arg0[%c3] : memref<16xi32, #tpu.memory_space<smem>>
    %19 = arith.index_cast %18 : i32 to index
    %c0_15 = arith.constant 0 : index
    %20 = vector.load %arg1[%19, %c0_15] : memref<50x32xf32, #tpu.memory_space<vmem>>, vector<1x32xf32>
    %c3_16 = arith.constant 3 : index
    %c0_17 = arith.constant 0 : index
    %21 = vector.load %arg2[%c3_16, %c0_17] : memref<8x32xf32, #tpu.memory_space<vmem>>, vector<1x32xf32>
    %22 = arith.addf %20, %21 : vector<1x32xf32>
    %c3_18 = arith.constant 3 : index
    %c0_19 = arith.constant 0 : index
    %23 = vector.load %arg20[%c3_18, %c0_19] : memref<16x32xf32, #tpu.memory_space<vmem>>, vector<1x32xf32>
    tpu.vector_store %arg20[%c3_18, %c0_19], %22 {strides = array<i32>} : memref<16x32xf32, #tpu.memory_space<vmem>>, vector<1x32xf32>,
    %c4 = arith.constant 4 : index
    %24 = memref.load %arg0[%c4] : memref<16xi32, #tpu.memory_space<smem>>
    %25 = arith.index_cast %24 : i32 to index
    %c0_20 = arith.constant 0 : index
    %26 = vector.load %arg1[%25, %c0_20] : memref<50x32xf32, #tpu.memory_space<vmem>>, vector<1x32xf32>
    %c4_21 = arith.constant 4 : index
    %c0_22 = arith.constant 0 : index
    %27 = vector.load %arg2[%c4_21, %c0_22] : memref<8x32xf32, #tpu.memory_space<vmem>>, vector<1x32xf32>
    %28 = arith.addf %26, %27 : vector<1x32xf32>
    %c4_23 = arith.constant 4 : index
    %c0_24 = arith.constant 0 : index
    %29 = vector.load %arg20[%c4_23, %c0_24] : memref<16x32xf32, #tpu.memory_space<vmem>>, vector<1x32xf32>
    tpu.vector_store %arg20[%c4_23, %c0_24], %28 {strides = array<i32>} : memref<16x32xf32, #tpu.memory_space<vmem>>, vector<1x32xf32>,
    %c5 = arith.constant 5 : index
    %30 = memref.load %arg0[%c5] : memref<16xi32, #tpu.memory_space<smem>>
    %31 = arith.index_cast %30 : i32 to index
    %c0_25 = arith.constant 0 : index
    %32 = vector.load %arg1[%31, %c0_25] : memref<50x32xf32, #tpu.memory_space<vmem>>, vector<1x32xf32>
    %c5_26 = arith.constant 5 : index
    %c0_27 = arith.constant 0 : index
    %33 = vector.load %arg2[%c5_26, %c0_27] : memref<8x32xf32, #tpu.memory_space<vmem>>, vector<1x32xf32>
    %34 = arith.addf %32, %33 : vector<1x32xf32>
    %c5_28 = arith.constant 5 : index
    %c0_29 = arith.constant 0 : index
    %35 = vector.load %arg20[%c5_28, %c0_29] : memref<16x32xf32, #tpu.memory_space<vmem>>, vector<1x32xf32>
    tpu.vector_store %arg20[%c5_28, %c0_29], %34 {strides = array<i32>} : memref<16x32xf32, #tpu.memory_space<vmem>>, vector<1x32xf32>,
    %c6 = arith.constant 6 : index
    %36 = memref.load %arg0[%c6] : memref<16xi32, #tpu.memory_space<smem>>
    %37 = arith.index_cast %36 : i32 to index
    %c0_30 = arith.constant 0 : index
    %38 = vector.load %arg1[%37, %c0_30] : memref<50x32xf32, #tpu.memory_space<vmem>>, vector<1x32xf32>
    %c6_31 = arith.constant 6 : index
    %c0_32 = arith.constant 0 : index
    %39 = vector.load %arg2[%c6_31, %c0_32] : memref<8x32xf32, #tpu.memory_space<vmem>>, vector<1x32xf32>
    %40 = arith.addf %38, %39 : vector<1x32xf32>
    %c6_33 = arith.constant 6 : index
    %c0_34 = arith.constant 0 : index
    %41 = vector.load %arg20[%c6_33, %c0_34] : memref<16x32xf32, #tpu.memory_space<vmem>>, vector<1x32xf32>
    tpu.vector_store %arg20[%c6_33, %c0_34], %40 {strides = array<i32>} : memref<16x32xf32, #tpu.memory_space<vmem>>, vector<1x32xf32>,
    %c7 = arith.constant 7 : index
    %42 = memref.load %arg0[%c7] : memref<16xi32, #tpu.memory_space<smem>>
    %43 = arith.index_cast %42 : i32 to index
    %c0_35 = arith.constant 0 : index
    %44 = vector.load %arg1[%43, %c0_35] : memref<50x32xf32, #tpu.memory_space<vmem>>, vector<1x32xf32>
    %c7_36 = arith.constant 7 : index
    %c0_37 = arith.constant 0 : index
    %45 = vector.load %arg2[%c7_36, %c0_37] : memref<8x32xf32, #tpu.memory_space<vmem>>, vector<1x32xf32>
    %46 = arith.addf %44, %45 : vector<1x32xf32>
    %c7_38 = arith.constant 7 : index
    %c0_39 = arith.constant 0 : index
    %47 = vector.load %arg20[%c7_38, %c0_39] : memref<16x32xf32, #tpu.memory_space<vmem>>, vector<1x32xf32>
    tpu.vector_store %arg20[%c7_38, %c0_39], %46 {strides = array<i32>} : memref<16x32xf32, #tpu.memory_space<vmem>>, vector<1x32xf32>,
    %c8 = arith.constant 8 : index
    %48 = memref.load %arg0[%c8] : memref<16xi32, #tpu.memory_space<smem>>
    %49 = arith.index_cast %48 : i32 to index
    %c0_40 = arith.constant 0 : index
    %50 = vector.load %arg1[%49, %c0_40] : memref<50x32xf32, #tpu.memory_space<vmem>>, vector<1x32xf32>
    %c0_41 = arith.constant 0 : index
    %c0_42 = arith.constant 0 : index
    %51 = vector.load %arg2[%c0_41, %c0_42] : memref<8x32xf32, #tpu.memory_space<vmem>>, vector<1x32xf32>
    %52 = arith.addf %50, %51 : vector<1x32xf32>
    %c8_43 = arith.constant 8 : index
    %c0_44 = arith.constant 0 : index
    %53 = vector.load %arg20[%c8_43, %c0_44] : memref<16x32xf32, #tpu.memory_space<vmem>>, vector<1x32xf32>
    tpu.vector_store %arg20[%c8_43, %c0_44], %52 {strides = array<i32>} : memref<16x32xf32, #tpu.memory_space<vmem>>, vector<1x32xf32>,
    %c9 = arith.constant 9 : index
    %54 = memref.load %arg0[%c9] : memref<16xi32, #tpu.memory_space<smem>>
    %55 = arith.index_cast %54 : i32 to index
    %c0_45 = arith.constant 0 : index
    %56 = vector.load %arg1[%55, %c0_45] : memref<50x32xf32, #tpu.memory_space<vmem>>, vector<1x32xf32>
    %c1_46 = arith.constant 1 : index
    %c0_47 = arith.constant 0 : index
    %57 = vector.load %arg2[%c1_46, %c0_47] : memref<8x32xf32, #tpu.memory_space<vmem>>, vector<1x32xf32>
    %58 = arith.addf %56, %57 : vector<1x32xf32>
    %c9_48 = arith.constant 9 : index
    %c0_49 = arith.constant 0 : index
    %59 = vector.load %arg20[%c9_48, %c0_49] : memref<16x32xf32, #tpu.memory_space<vmem>>, vector<1x32xf32>
    tpu.vector_store %arg20[%c9_48, %c0_49], %58 {strides = array<i32>} : memref<16x32xf32, #tpu.memory_space<vmem>>, vector<1x32xf32>,
    %c10 = arith.constant 10 : index
    %60 = memref.load %arg0[%c10] : memref<16xi32, #tpu.memory_space<smem>>
    %61 = arith.index_cast %60 : i32 to index
    %c0_50 = arith.constant 0 : index
    %62 = vector.load %arg1[%61, %c0_50] : memref<50x32xf32, #tpu.memory_space<vmem>>, vector<1x32xf32>
    %c2_51 = arith.constant 2 : index
    %c0_52 = arith.constant 0 : index
    %63 = vector.load %arg2[%c2_51, %c0_52] : memref<8x32xf32, #tpu.memory_space<vmem>>, vector<1x32xf32>
    %64 = arith.addf %62, %63 : vector<1x32xf32>
    %c10_53 = arith.constant 10 : index
    %c0_54 = arith.constant 0 : index
    %65 = vector.load %arg20[%c10_53, %c0_54] : memref<16x32xf32, #tpu.memory_space<vmem>>, vector<1x32xf32>
    tpu.vector_store %arg20[%c10_53, %c0_54], %64 {strides = array<i32>} : memref<16x32xf32, #tpu.memory_space<vmem>>, vector<1x32xf32>,
    %c11 = arith.constant 11 : index
    %66 = memref.load %arg0[%c11] : memref<16xi32, #tpu.memory_space<smem>>
    %67 = arith.index_cast %66 : i32 to index
    %c0_55 = arith.constant 0 : index
    %68 = vector.load %arg1[%67, %c0_55] : memref<50x32xf32, #tpu.memory_space<vmem>>, vector<1x32xf32>
    %c3_56 = arith.constant 3 : index
    %c0_57 = arith.constant 0 : index
    %69 = vector.load %arg2[%c3_56, %c0_57] : memref<8x32xf32, #tpu.memory_space<vmem>>, vector<1x32xf32>
    %70 = arith.addf %68, %69 : vector<1x32xf32>
    %c11_58 = arith.constant 11 : index
    %c0_59 = arith.constant 0 : index
    %71 = vector.load %arg20[%c11_58, %c0_59] : memref<16x32xf32, #tpu.memory_space<vmem>>, vector<1x32xf32>
    tpu.vector_store %arg20[%c11_58, %c0_59], %70 {strides = array<i32>} : memref<16x32xf32, #tpu.memory_space<vmem>>, vector<1x32xf32>,
    %c12 = arith.constant 12 : index
    %72 = memref.load %arg0[%c12] : memref<16xi32, #tpu.memory_space<smem>>
    %73 = arith.index_cast %72 : i32 to index
    %c0_60 = arith.constant 0 : index
    %74 = vector.load %arg1[%73, %c0_60] : memref<50x32xf32, #tpu.memory_space<vmem>>, vector<1x32xf32>
    %c4_61 = arith.constant 4 : index
    %c0_62 = arith.constant 0 : index
    %75 = vector.load %arg2[%c4_61, %c0_62] : memref<8x32xf32, #tpu.memory_space<vmem>>, vector<1x32xf32>
    %76 = arith.addf %74, %75 : vector<1x32xf32>
    %c12_63 = arith.constant 12 : index
    %c0_64 = arith.constant 0 : index
    %77 = vector.load %arg20[%c12_63, %c0_64] : memref<16x32xf32, #tpu.memory_space<vmem>>, vector<1x32xf32>
    tpu.vector_store %arg20[%c12_63, %c0_64], %76 {strides = array<i32>} : memref<16x32xf32, #tpu.memory_space<vmem>>, vector<1x32xf32>,
    %c13 = arith.constant 13 : index
    %78 = memref.load %arg0[%c13] : memref<16xi32, #tpu.memory_space<smem>>
    %79 = arith.index_cast %78 : i32 to index
    %c0_65 = arith.constant 0 : index
    %80 = vector.load %arg1[%79, %c0_65] : memref<50x32xf32, #tpu.memory_space<vmem>>, vector<1x32xf32>
    %c5_66 = arith.constant 5 : index
    %c0_67 = arith.constant 0 : index
    %81 = vector.load %arg2[%c5_66, %c0_67] : memref<8x32xf32, #tpu.memory_space<vmem>>, vector<1x32xf32>
    %82 = arith.addf %80, %81 : vector<1x32xf32>
    %c13_68 = arith.constant 13 : index
    %c0_69 = arith.constant 0 : index
    %83 = vector.load %arg20[%c13_68, %c0_69] : memref<16x32xf32, #tpu.memory_space<vmem>>, vector<1x32xf32>
    tpu.vector_store %arg20[%c13_68, %c0_69], %82 {strides = array<i32>} : memref<16x32xf32, #tpu.memory_space<vmem>>, vector<1x32xf32>,
    %c14 = arith.constant 14 : index
    %84 = memref.load %arg0[%c14] : memref<16xi32, #tpu.memory_space<smem>>
    %85 = arith.index_cast %84 : i32 to index
    %c0_70 = arith.constant 0 : index
    %86 = vector.load %arg1[%85, %c0_70] : memref<50x32xf32, #tpu.memory_space<vmem>>, vector<1x32xf32>
    %c6_71 = arith.constant 6 : index
    %c0_72 = arith.constant 0 : index
    %87 = vector.load %arg2[%c6_71, %c0_72] : memref<8x32xf32, #tpu.memory_space<vmem>>, vector<1x32xf32>
    %88 = arith.addf %86, %87 : vector<1x32xf32>
    %c14_73 = arith.constant 14 : index
    %c0_74 = arith.constant 0 : index
    %89 = vector.load %arg20[%c14_73, %c0_74] : memref<16x32xf32, #tpu.memory_space<vmem>>, vector<1x32xf32>
    tpu.vector_store %arg20[%c14_73, %c0_74], %88 {strides = array<i32>} : memref<16x32xf32, #tpu.memory_space<vmem>>, vector<1x32xf32>,
    %c15 = arith.constant 15 : index
    %90 = memref.load %arg0[%c15] : memref<16xi32, #tpu.memory_space<smem>>
    %91 = arith.index_cast %90 : i32 to index
    %c0_75 = arith.constant 0 : index
    %92 = vector.load %arg1[%91, %c0_75] : memref<50x32xf32, #tpu.memory_space<vmem>>, vector<1x32xf32>
    %c7_76 = arith.constant 7 : index
    %c0_77 = arith.constant 0 : index
    %93 = vector.load %arg2[%c7_76, %c0_77] : memref<8x32xf32, #tpu.memory_space<vmem>>, vector<1x32xf32>
    %94 = arith.addf %92, %93 : vector<1x32xf32>
    %c15_78 = arith.constant 15 : index
    %c0_79 = arith.constant 0 : index
    %95 = vector.load %arg20[%c15_78, %c0_79] : memref<16x32xf32, #tpu.memory_space<vmem>>, vector<1x32xf32>
    tpu.vector_store %arg20[%c15_78, %c0_79], %94 {strides = array<i32>} : memref<16x32xf32, #tpu.memory_space<vmem>>, vector<1x32xf32>,
    %c0_80 = arith.constant 0 : index
    %c0_81 = arith.constant 0 : index
    %96 = vector.load %arg20[%c0_80, %c0_81] : memref<16x32xf32, #tpu.memory_space<vmem>>, vector<16x32xf32>
    %c0_82 = arith.constant 0 : index
    %c0_83 = arith.constant 0 : index
    %c0_84 = arith.constant 0 : index
    %97 = vector.load %arg3[%c0_82, %c0_83, %c0_84] : memref<2x1x32xf32, #tpu.memory_space<vmem>>, vector<1x1x32xf32>
    %98 = vector.shape_cast %97 : vector<1x1x32xf32> to vector<1x32xf32>
    %c0_85 = arith.constant 0 : index
    %c0_86 = arith.constant 0 : index
    %c0_87 = arith.constant 0 : index
    %99 = vector.load %arg4[%c0_85, %c0_86, %c0_87] : memref<2x1x32xf32, #tpu.memory_space<vmem>>, vector<1x1x32xf32>
    %100 = vector.shape_cast %99 : vector<1x1x32xf32> to vector<1x32xf32>
    %cst = arith.constant dense<0.000000e+00> : vector<16xf32>
    %101 = vector.multi_reduction <add>, %96, %cst [1] : vector<16x32xf32> to vector<16xf32>
    %102 = vector.shape_cast %101 : vector<16xf32> to vector<16x1xf32>
    %cst_88 = arith.constant 3.200000e+01 : f32
    %103 = vector.broadcast %cst_88 : f32 to vector<16x1xf32>
    %104 = arith.divf %102, %103 : vector<16x1xf32>
    %105 = vector.broadcast %104 : vector<16x1xf32> to vector<16x32xf32>
    %106 = arith.subf %96, %105 : vector<16x32xf32>
    %107 = arith.mulf %106, %106 : vector<16x32xf32>
    %cst_89 = arith.constant dense<0.000000e+00> : vector<16xf32>
    %108 = vector.multi_reduction <add>, %107, %cst_89 [1] : vector<16x32xf32> to vector<16xf32>
    %109 = vector.shape_cast %108 : vector<16xf32> to vector<16x1xf32>
    %cst_90 = arith.constant 3.200000e+01 : f32
    %110 = vector.broadcast %cst_90 : f32 to vector<16x1xf32>
    %111 = arith.divf %109, %110 : vector<16x1xf32>
    %112 = vector.broadcast %104 : vector<16x1xf32> to vector<16x32xf32>
    %113 = arith.subf %96, %112 : vector<16x32xf32>
    %cst_91 = arith.constant 9.99999974E-6 : f32
    %114 = vector.broadcast %cst_91 : f32 to vector<16x1xf32>
    %115 = arith.addf %111, %114 : vector<16x1xf32>
    %116 = math.rsqrt %115 : vector<16x1xf32>
    %117 = vector.broadcast %116 : vector<16x1xf32> to vector<16x32xf32>
    %118 = arith.mulf %113, %117 : vector<16x32xf32>
    %119 = vector.broadcast %98 : vector<1x32xf32> to vector<16x32xf32>
    %120 = arith.mulf %118, %119 : vector<16x32xf32>
    %121 = vector.broadcast %100 : vector<1x32xf32> to vector<16x32xf32>
    %122 = arith.addf %120, %121 : vector<16x32xf32>
    %123 = arith.truncf %122 : vector<16x32xf32> to vector<16x32xbf16>
    %c0_92 = arith.constant 0 : index
    %c0_93 = arith.constant 0 : index
    %c0_94 = arith.constant 0 : index
    %124 = vector.load %arg5[%c0_92, %c0_93, %c0_94] : memref<2x32x32xbf16, #tpu.memory_space<vmem>>, vector<1x32x32xbf16>
    %125 = vector.shape_cast %124 : vector<1x32x32xbf16> to vector<32x32xbf16>
    %cst_95 = arith.constant dense<0.000000e+00> : vector<16x32xf32>
    %126 = tpu.matmul %123, %125, %cst_95 {dimension_numbers = #tpu.dot_dimension_numbers<[1], [0], [0], [1], [0, 0, 1, 1], [], []>} : vector<16x32xbf16>, vector<32x32xbf16>, vector<16x32xf32> -> vector<16x32xf32>
    %c0_96 = arith.constant 0 : index
    %c0_97 = arith.constant 0 : index
    %c0_98 = arith.constant 0 : index
    %127 = vector.load %arg6[%c0_96, %c0_97, %c0_98] : memref<2x1x32xf32, #tpu.memory_space<vmem>>, vector<1x1x32xf32>
    %128 = vector.shape_cast %127 : vector<1x1x32xf32> to vector<1x32xf32>
    %129 = vector.broadcast %128 : vector<1x32xf32> to vector<16x32xf32>
    %130 = arith.addf %126, %129 : vector<16x32xf32>
    %c0_99 = arith.constant 0 : index
    %c0_100 = arith.constant 0 : index
    %c0_101 = arith.constant 0 : index
    %131 = vector.load %arg7[%c0_99, %c0_100, %c0_101] : memref<2x32x32xbf16, #tpu.memory_space<vmem>>, vector<1x32x32xbf16>
    %132 = vector.shape_cast %131 : vector<1x32x32xbf16> to vector<32x32xbf16>
    %cst_102 = arith.constant dense<0.000000e+00> : vector<16x32xf32>
    %133 = tpu.matmul %123, %132, %cst_102 {dimension_numbers = #tpu.dot_dimension_numbers<[1], [0], [0], [1], [0, 0, 1, 1], [], []>} : vector<16x32xbf16>, vector<32x32xbf16>, vector<16x32xf32> -> vector<16x32xf32>
    %c0_103 = arith.constant 0 : index
    %c0_104 = arith.constant 0 : index
    %c0_105 = arith.constant 0 : index
    %134 = vector.load %arg8[%c0_103, %c0_104, %c0_105] : memref<2x1x32xf32, #tpu.memory_space<vmem>>, vector<1x1x32xf32>
    %135 = vector.shape_cast %134 : vector<1x1x32xf32> to vector<1x32xf32>
    %136 = vector.broadcast %135 : vector<1x32xf32> to vector<16x32xf32>
    %137 = arith.addf %133, %136 : vector<16x32xf32>
    %c0_106 = arith.constant 0 : index
    %c0_107 = arith.constant 0 : index
    %c0_108 = arith.constant 0 : index
    %138 = vector.load %arg9[%c0_106, %c0_107, %c0_108] : memref<2x32x32xbf16, #tpu.memory_space<vmem>>, vector<1x32x32xbf16>
    %139 = vector.shape_cast %138 : vector<1x32x32xbf16> to vector<32x32xbf16>
    %cst_109 = arith.constant dense<0.000000e+00> : vector<16x32xf32>
    %140 = tpu.matmul %123, %139, %cst_109 {dimension_numbers = #tpu.dot_dimension_numbers<[1], [0], [0], [1], [0, 0, 1, 1], [], []>} : vector<16x32xbf16>, vector<32x32xbf16>, vector<16x32xf32> -> vector<16x32xf32>
    %c0_110 = arith.constant 0 : index
    %c0_111 = arith.constant 0 : index
    %c0_112 = arith.constant 0 : index
    %141 = vector.load %arg10[%c0_110, %c0_111, %c0_112] : memref<2x1x32xf32, #tpu.memory_space<vmem>>, vector<1x1x32xf32>
    %142 = vector.shape_cast %141 : vector<1x1x32xf32> to vector<1x32xf32>
    %143 = vector.broadcast %142 : vector<1x32xf32> to vector<16x32xf32>
    %144 = arith.addf %140, %143 : vector<16x32xf32>
    %145 = vector.shape_cast %130 : vector<16x32xf32> to vector<2x8x32xf32>
    %146 = vector.shape_cast %137 : vector<16x32xf32> to vector<2x8x32xf32>
    %147 = vector.shape_cast %144 : vector<16x32xf32> to vector<2x8x32xf32>
    %c0_113 = arith.constant 0 : index
    %c0_114 = arith.constant 0 : index
    %c0_115 = arith.constant 0 : index
    %148 = vector.load %arg11[%c0_113, %c0_114, %c0_115] : memref<2x32x32xbf16, #tpu.memory_space<vmem>>, vector<1x32x32xbf16>
    %149 = vector.shape_cast %148 : vector<1x32x32xbf16> to vector<32x32xbf16>
    %cst_116 = arith.constant 0.000000e+00 : f32
    %150 = vector.broadcast %cst_116 : f32 to vector<16x32xf32>
    %151 = vector.extract_strided_slice %145 {offsets = [0, 0, 0], sizes = [2, 8, 8], strides = [1, 1, 1]} : vector<2x8x32xf32> to vector<2x8x8xf32>
    %152 = arith.truncf %151 : vector<2x8x8xf32> to vector<2x8x8xbf16>
    %153 = vector.extract_strided_slice %146 {offsets = [0, 0, 0], sizes = [2, 8, 8], strides = [1, 1, 1]} : vector<2x8x32xf32> to vector<2x8x8xf32>
    %154 = arith.truncf %153 : vector<2x8x8xf32> to vector<2x8x8xbf16>
    %155 = vector.extract_strided_slice %147 {offsets = [0, 0, 0], sizes = [2, 8, 8], strides = [1, 1, 1]} : vector<2x8x32xf32> to vector<2x8x8xf32>
    %156 = arith.truncf %155 : vector<2x8x8xf32> to vector<2x8x8xbf16>
    "tpu.trace_start"() <{level = 10 : i32, message = "bqd,bkd->bqk"}> : () -> ()
    %cst_117 = arith.constant dense<0.000000e+00> : vector<2x8x8xf32>
    %157 = tpu.matmul %152, %154, %cst_117 {dimension_numbers = #tpu.dot_dimension_numbers<[2], [2], [1], [1], [0, 0, 0, 1, 1, 1], [0], [0]>} : vector<2x8x8xbf16>, vector<2x8x8xbf16>, vector<2x8x8xf32> -> vector<2x8x8xf32>
    "tpu.trace_stop"() : () -> ()
    %cst_118 = arith.constant 0.353553385 : f32
    %158 = vector.broadcast %cst_118 : f32 to vector<2x8x8xf32>
    %159 = arith.mulf %157, %158 : vector<2x8x8xf32>
    %cst_119 = arith.constant dense<0xFF800000> : vector<2x8xf32>
    %160 = vector.multi_reduction <maximumf>, %159, %cst_119 [2] : vector<2x8x8xf32> to vector<2x8xf32>
    %161 = vector.shape_cast %160 : vector<2x8xf32> to vector<2x8x1xf32>
    %162 = vector.broadcast %161 : vector<2x8x1xf32> to vector<2x8x8xf32>
    %163 = arith.subf %159, %162 : vector<2x8x8xf32>
    %164 = math.exp %163 : vector<2x8x8xf32>
    %cst_120 = arith.constant dense<0.000000e+00> : vector<2x8xf32>
    %165 = vector.multi_reduction <add>, %164, %cst_120 [2] : vector<2x8x8xf32> to vector<2x8xf32>
    %166 = vector.shape_cast %165 : vector<2x8xf32> to vector<2x8x1xf32>
    %167 = tpu.reciprocal %166 {approx = true} : vector<2x8x1xf32> -> vector<2x8x1xf32>
    %168 = vector.broadcast %167 : vector<2x8x1xf32> to vector<2x8x8xf32>
    %169 = arith.mulf %164, %168 : vector<2x8x8xf32>
    %170 = arith.truncf %169 : vector<2x8x8xf32> to vector<2x8x8xbf16>
    "tpu.trace_start"() <{level = 10 : i32, message = "bqk,bkd->bqd"}> : () -> ()
    %cst_121 = arith.constant dense<0.000000e+00> : vector<2x8x8xf32>
    %171 = tpu.matmul %170, %156, %cst_121 {dimension_numbers = #tpu.dot_dimension_numbers<[2], [1], [1], [2], [0, 0, 0, 1, 1, 2], [0], [0]>} : vector<2x8x8xbf16>, vector<2x8x8xbf16>, vector<2x8x8xf32> -> vector<2x8x8xf32>
    "tpu.trace_stop"() : () -> ()
    %172 = vector.shape_cast %171 : vector<2x8x8xf32> to vector<16x8xf32>
    %173 = arith.truncf %172 : vector<16x8xf32> to vector<16x8xbf16>
    %174 = vector.extract_strided_slice %149 {offsets = [0, 0], sizes = [8, 32], strides = [1, 1]} : vector<32x32xbf16> to vector<8x32xbf16>
    %cst_122 = arith.constant dense<0.000000e+00> : vector<16x32xf32>
    %175 = tpu.matmul %173, %174, %cst_122 {dimension_numbers = #tpu.dot_dimension_numbers<[1], [0], [0], [1], [0, 0, 1, 1], [], []>} : vector<16x8xbf16>, vector<8x32xbf16>, vector<16x32xf32> -> vector<16x32xf32>
    %176 = arith.addf %150, %175 : vector<16x32xf32>
    %177 = vector.extract_strided_slice %145 {offsets = [0, 0, 8], sizes = [2, 8, 8], strides = [1, 1, 1]} : vector<2x8x32xf32> to vector<2x8x8xf32>
    %178 = arith.truncf %177 : vector<2x8x8xf32> to vector<2x8x8xbf16>
    %179 = vector.extract_strided_slice %146 {offsets = [0, 0, 8], sizes = [2, 8, 8], strides = [1, 1, 1]} : vector<2x8x32xf32> to vector<2x8x8xf32>
    %180 = arith.truncf %179 : vector<2x8x8xf32> to vector<2x8x8xbf16>
    %181 = vector.extract_strided_slice %147 {offsets = [0, 0, 8], sizes = [2, 8, 8], strides = [1, 1, 1]} : vector<2x8x32xf32> to vector<2x8x8xf32>
    %182 = arith.truncf %181 : vector<2x8x8xf32> to vector<2x8x8xbf16>
    "tpu.trace_start"() <{level = 10 : i32, message = "bqd,bkd->bqk"}> : () -> ()
    %cst_123 = arith.constant dense<0.000000e+00> : vector<2x8x8xf32>
    %183 = tpu.matmul %178, %180, %cst_123 {dimension_numbers = #tpu.dot_dimension_numbers<[2], [2], [1], [1], [0, 0, 0, 1, 1, 1], [0], [0]>} : vector<2x8x8xbf16>, vector<2x8x8xbf16>, vector<2x8x8xf32> -> vector<2x8x8xf32>
    "tpu.trace_stop"() : () -> ()
    %cst_124 = arith.constant 0.353553385 : f32
    %184 = vector.broadcast %cst_124 : f32 to vector<2x8x8xf32>
    %185 = arith.mulf %183, %184 : vector<2x8x8xf32>
    %cst_125 = arith.constant dense<0xFF800000> : vector<2x8xf32>
    %186 = vector.multi_reduction <maximumf>, %185, %cst_125 [2] : vector<2x8x8xf32> to vector<2x8xf32>
    %187 = vector.shape_cast %186 : vector<2x8xf32> to vector<2x8x1xf32>
    %188 = vector.broadcast %187 : vector<2x8x1xf32> to vector<2x8x8xf32>
    %189 = arith.subf %185, %188 : vector<2x8x8xf32>
    %190 = math.exp %189 : vector<2x8x8xf32>
    %cst_126 = arith.constant dense<0.000000e+00> : vector<2x8xf32>
    %191 = vector.multi_reduction <add>, %190, %cst_126 [2] : vector<2x8x8xf32> to vector<2x8xf32>
    %192 = vector.shape_cast %191 : vector<2x8xf32> to vector<2x8x1xf32>
    %193 = tpu.reciprocal %192 {approx = true} : vector<2x8x1xf32> -> vector<2x8x1xf32>
    %194 = vector.broadcast %193 : vector<2x8x1xf32> to vector<2x8x8xf32>
    %195 = arith.mulf %190, %194 : vector<2x8x8xf32>
    %196 = arith.truncf %195 : vector<2x8x8xf32> to vector<2x8x8xbf16>
    "tpu.trace_start"() <{level = 10 : i32, message = "bqk,bkd->bqd"}> : () -> ()
    %cst_127 = arith.constant dense<0.000000e+00> : vector<2x8x8xf32>
    %197 = tpu.matmul %196, %182, %cst_127 {dimension_numbers = #tpu.dot_dimension_numbers<[2], [1], [1], [2], [0, 0, 0, 1, 1, 2], [0], [0]>} : vector<2x8x8xbf16>, vector<2x8x8xbf16>, vector<2x8x8xf32> -> vector<2x8x8xf32>
    "tpu.trace_stop"() : () -> ()
    %198 = vector.shape_cast %197 : vector<2x8x8xf32> to vector<16x8xf32>
    %199 = arith.truncf %198 : vector<16x8xf32> to vector<16x8xbf16>
    %200 = vector.extract_strided_slice %149 {offsets = [8, 0], sizes = [8, 32], strides = [1, 1]} : vector<32x32xbf16> to vector<8x32xbf16>
    %cst_128 = arith.constant dense<0.000000e+00> : vector<16x32xf32>
    %201 = tpu.matmul %199, %200, %cst_128 {dimension_numbers = #tpu.dot_dimension_numbers<[1], [0], [0], [1], [0, 0, 1, 1], [], []>} : vector<16x8xbf16>, vector<8x32xbf16>, vector<16x32xf32> -> vector<16x32xf32>
    %202 = arith.addf %176, %201 : vector<16x32xf32>
    %203 = vector.extract_strided_slice %145 {offsets = [0, 0, 16], sizes = [2, 8, 8], strides = [1, 1, 1]} : vector<2x8x32xf32> to vector<2x8x8xf32>
    %204 = arith.truncf %203 : vector<2x8x8xf32> to vector<2x8x8xbf16>
    %205 = vector.extract_strided_slice %146 {offsets = [0, 0, 16], sizes = [2, 8, 8], strides = [1, 1, 1]} : vector<2x8x32xf32> to vector<2x8x8xf32>
    %206 = arith.truncf %205 : vector<2x8x8xf32> to vector<2x8x8xbf16>
    %207 = vector.extract_strided_slice %147 {offsets = [0, 0, 16], sizes = [2, 8, 8], strides = [1, 1, 1]} : vector<2x8x32xf32> to vector<2x8x8xf32>
    %208 = arith.truncf %207 : vector<2x8x8xf32> to vector<2x8x8xbf16>
    "tpu.trace_start"() <{level = 10 : i32, message = "bqd,bkd->bqk"}> : () -> ()
    %cst_129 = arith.constant dense<0.000000e+00> : vector<2x8x8xf32>
    %209 = tpu.matmul %204, %206, %cst_129 {dimension_numbers = #tpu.dot_dimension_numbers<[2], [2], [1], [1], [0, 0, 0, 1, 1, 1], [0], [0]>} : vector<2x8x8xbf16>, vector<2x8x8xbf16>, vector<2x8x8xf32> -> vector<2x8x8xf32>
    "tpu.trace_stop"() : () -> ()
    %cst_130 = arith.constant 0.353553385 : f32
    %210 = vector.broadcast %cst_130 : f32 to vector<2x8x8xf32>
    %211 = arith.mulf %209, %210 : vector<2x8x8xf32>
    %cst_131 = arith.constant dense<0xFF800000> : vector<2x8xf32>
    %212 = vector.multi_reduction <maximumf>, %211, %cst_131 [2] : vector<2x8x8xf32> to vector<2x8xf32>
    %213 = vector.shape_cast %212 : vector<2x8xf32> to vector<2x8x1xf32>
    %214 = vector.broadcast %213 : vector<2x8x1xf32> to vector<2x8x8xf32>
    %215 = arith.subf %211, %214 : vector<2x8x8xf32>
    %216 = math.exp %215 : vector<2x8x8xf32>
    %cst_132 = arith.constant dense<0.000000e+00> : vector<2x8xf32>
    %217 = vector.multi_reduction <add>, %216, %cst_132 [2] : vector<2x8x8xf32> to vector<2x8xf32>
    %218 = vector.shape_cast %217 : vector<2x8xf32> to vector<2x8x1xf32>
    %219 = tpu.reciprocal %218 {approx = true} : vector<2x8x1xf32> -> vector<2x8x1xf32>
    %220 = vector.broadcast %219 : vector<2x8x1xf32> to vector<2x8x8xf32>
    %221 = arith.mulf %216, %220 : vector<2x8x8xf32>
    %222 = arith.truncf %221 : vector<2x8x8xf32> to vector<2x8x8xbf16>
    "tpu.trace_start"() <{level = 10 : i32, message = "bqk,bkd->bqd"}> : () -> ()
    %cst_133 = arith.constant dense<0.000000e+00> : vector<2x8x8xf32>
    %223 = tpu.matmul %222, %208, %cst_133 {dimension_numbers = #tpu.dot_dimension_numbers<[2], [1], [1], [2], [0, 0, 0, 1, 1, 2], [0], [0]>} : vector<2x8x8xbf16>, vector<2x8x8xbf16>, vector<2x8x8xf32> -> vector<2x8x8xf32>
    "tpu.trace_stop"() : () -> ()
    %224 = vector.shape_cast %223 : vector<2x8x8xf32> to vector<16x8xf32>
    %225 = arith.truncf %224 : vector<16x8xf32> to vector<16x8xbf16>
    %226 = vector.extract_strided_slice %149 {offsets = [16, 0], sizes = [8, 32], strides = [1, 1]} : vector<32x32xbf16> to vector<8x32xbf16>
    %cst_134 = arith.constant dense<0.000000e+00> : vector<16x32xf32>
    %227 = tpu.matmul %225, %226, %cst_134 {dimension_numbers = #tpu.dot_dimension_numbers<[1], [0], [0], [1], [0, 0, 1, 1], [], []>} : vector<16x8xbf16>, vector<8x32xbf16>, vector<16x32xf32> -> vector<16x32xf32>
    %228 = arith.addf %202, %227 : vector<16x32xf32>
    %229 = vector.extract_strided_slice %145 {offsets = [0, 0, 24], sizes = [2, 8, 8], strides = [1, 1, 1]} : vector<2x8x32xf32> to vector<2x8x8xf32>
    %230 = arith.truncf %229 : vector<2x8x8xf32> to vector<2x8x8xbf16>
    %231 = vector.extract_strided_slice %146 {offsets = [0, 0, 24], sizes = [2, 8, 8], strides = [1, 1, 1]} : vector<2x8x32xf32> to vector<2x8x8xf32>
    %232 = arith.truncf %231 : vector<2x8x8xf32> to vector<2x8x8xbf16>
    %233 = vector.extract_strided_slice %147 {offsets = [0, 0, 24], sizes = [2, 8, 8], strides = [1, 1, 1]} : vector<2x8x32xf32> to vector<2x8x8xf32>
    %234 = arith.truncf %233 : vector<2x8x8xf32> to vector<2x8x8xbf16>
    "tpu.trace_start"() <{level = 10 : i32, message = "bqd,bkd->bqk"}> : () -> ()
    %cst_135 = arith.constant dense<0.000000e+00> : vector<2x8x8xf32>
    %235 = tpu.matmul %230, %232, %cst_135 {dimension_numbers = #tpu.dot_dimension_numbers<[2], [2], [1], [1], [0, 0, 0, 1, 1, 1], [0], [0]>} : vector<2x8x8xbf16>, vector<2x8x8xbf16>, vector<2x8x8xf32> -> vector<2x8x8xf32>
    "tpu.trace_stop"() : () -> ()
    %cst_136 = arith.constant 0.353553385 : f32
    %236 = vector.broadcast %cst_136 : f32 to vector<2x8x8xf32>
    %237 = arith.mulf %235, %236 : vector<2x8x8xf32>
    %cst_137 = arith.constant dense<0xFF800000> : vector<2x8xf32>
    %238 = vector.multi_reduction <maximumf>, %237, %cst_137 [2] : vector<2x8x8xf32> to vector<2x8xf32>
    %239 = vector.shape_cast %238 : vector<2x8xf32> to vector<2x8x1xf32>
    %240 = vector.broadcast %239 : vector<2x8x1xf32> to vector<2x8x8xf32>
    %241 = arith.subf %237, %240 : vector<2x8x8xf32>
    %242 = math.exp %241 : vector<2x8x8xf32>
    %cst_138 = arith.constant dense<0.000000e+00> : vector<2x8xf32>
    %243 = vector.multi_reduction <add>, %242, %cst_138 [2] : vector<2x8x8xf32> to vector<2x8xf32>
    %244 = vector.shape_cast %243 : vector<2x8xf32> to vector<2x8x1xf32>
    %245 = tpu.reciprocal %244 {approx = true} : vector<2x8x1xf32> -> vector<2x8x1xf32>
    %246 = vector.broadcast %245 : vector<2x8x1xf32> to vector<2x8x8xf32>
    %247 = arith.mulf %242, %246 : vector<2x8x8xf32>
    %248 = arith.truncf %247 : vector<2x8x8xf32> to vector<2x8x8xbf16>
    "tpu.trace_start"() <{level = 10 : i32, message = "bqk,bkd->bqd"}> : () -> ()
    %cst_139 = arith.constant dense<0.000000e+00> : vector<2x8x8xf32>
    %249 = tpu.matmul %248, %234, %cst_139 {dimension_numbers = #tpu.dot_dimension_numbers<[2], [1], [1], [2], [0, 0, 0, 1, 1, 2], [0], [0]>} : vector<2x8x8xbf16>, vector<2x8x8xbf16>, vector<2x8x8xf32> -> vector<2x8x8xf32>
    "tpu.trace_stop"() : () -> ()
    %250 = vector.shape_cast %249 : vector<2x8x8xf32> to vector<16x8xf32>
    %251 = arith.truncf %250 : vector<16x8xf32> to vector<16x8xbf16>
    %252 = vector.extract_strided_slice %149 {offsets = [24, 0], sizes = [8, 32], strides = [1, 1]} : vector<32x32xbf16> to vector<8x32xbf16>
    %cst_140 = arith.constant dense<0.000000e+00> : vector<16x32xf32>
    %253 = tpu.matmul %251, %252, %cst_140 {dimension_numbers = #tpu.dot_dimension_numbers<[1], [0], [0], [1], [0, 0, 1, 1], [], []>} : vector<16x8xbf16>, vector<8x32xbf16>, vector<16x32xf32> -> vector<16x32xf32>
    %254 = arith.addf %228, %253 : vector<16x32xf32>
    %255 = arith.addf %96, %254 : vector<16x32xf32>
    %c0_141 = arith.constant 0 : index
    %c0_142 = arith.constant 0 : index
    %c0_143 = arith.constant 0 : index
    %256 = vector.load %arg12[%c0_141, %c0_142, %c0_143] : memref<2x1x32xf32, #tpu.memory_space<vmem>>, vector<1x1x32xf32>
    %257 = vector.shape_cast %256 : vector<1x1x32xf32> to vector<1x32xf32>
    %258 = vector.broadcast %257 : vector<1x32xf32> to vector<16x32xf32>
    %259 = arith.addf %255, %258 : vector<16x32xf32>
    %c0_144 = arith.constant 0 : index
    %c0_145 = arith.constant 0 : index
    %c0_146 = arith.constant 0 : index
    %260 = vector.load %arg13[%c0_144, %c0_145, %c0_146] : memref<2x1x32xf32, #tpu.memory_space<vmem>>, vector<1x1x32xf32>
    %261 = vector.shape_cast %260 : vector<1x1x32xf32> to vector<1x32xf32>
    %c0_147 = arith.constant 0 : index
    %c0_148 = arith.constant 0 : index
    %c0_149 = arith.constant 0 : index
    %262 = vector.load %arg14[%c0_147, %c0_148, %c0_149] : memref<2x1x32xf32, #tpu.memory_space<vmem>>, vector<1x1x32xf32>
    %263 = vector.shape_cast %262 : vector<1x1x32xf32> to vector<1x32xf32>
    %cst_150 = arith.constant dense<0.000000e+00> : vector<16xf32>
    %264 = vector.multi_reduction <add>, %259, %cst_150 [1] : vector<16x32xf32> to vector<16xf32>
    %265 = vector.shape_cast %264 : vector<16xf32> to vector<16x1xf32>
    %cst_151 = arith.constant 3.200000e+01 : f32
    %266 = vector.broadcast %cst_151 : f32 to vector<16x1xf32>
    %267 = arith.divf %265, %266 : vector<16x1xf32>
    %268 = vector.broadcast %267 : vector<16x1xf32> to vector<16x32xf32>
    %269 = arith.subf %259, %268 : vector<16x32xf32>
    %270 = arith.mulf %269, %269 : vector<16x32xf32>
    %cst_152 = arith.constant dense<0.000000e+00> : vector<16xf32>
    %271 = vector.multi_reduction <add>, %270, %cst_152 [1] : vector<16x32xf32> to vector<16xf32>
    %272 = vector.shape_cast %271 : vector<16xf32> to vector<16x1xf32>
    %cst_153 = arith.constant 3.200000e+01 : f32
    %273 = vector.broadcast %cst_153 : f32 to vector<16x1xf32>
    %274 = arith.divf %272, %273 : vector<16x1xf32>
    %275 = vector.broadcast %267 : vector<16x1xf32> to vector<16x32xf32>
    %276 = arith.subf %259, %275 : vector<16x32xf32>
    %cst_154 = arith.constant 9.99999974E-6 : f32
    %277 = vector.broadcast %cst_154 : f32 to vector<16x1xf32>
    %278 = arith.addf %274, %277 : vector<16x1xf32>
    %279 = math.rsqrt %278 : vector<16x1xf32>
    %280 = vector.broadcast %279 : vector<16x1xf32> to vector<16x32xf32>
    %281 = arith.mulf %276, %280 : vector<16x32xf32>
    %282 = vector.broadcast %261 : vector<1x32xf32> to vector<16x32xf32>
    %283 = arith.mulf %281, %282 : vector<16x32xf32>
    %284 = vector.broadcast %263 : vector<1x32xf32> to vector<16x32xf32>
    %285 = arith.addf %283, %284 : vector<16x32xf32>
    %286 = arith.truncf %285 : vector<16x32xf32> to vector<16x32xbf16>
    %c0_155 = arith.constant 0 : index
    %c0_156 = arith.constant 0 : index
    %c0_157 = arith.constant 0 : index
    %287 = vector.load %arg15[%c0_155, %c0_156, %c0_157] : memref<2x32x64xbf16, #tpu.memory_space<vmem>>, vector<1x32x64xbf16>
    %288 = vector.shape_cast %287 : vector<1x32x64xbf16> to vector<32x64xbf16>
    %cst_158 = arith.constant dense<0.000000e+00> : vector<16x64xf32>
    %289 = tpu.matmul %286, %288, %cst_158 {dimension_numbers = #tpu.dot_dimension_numbers<[1], [0], [0], [1], [0, 0, 1, 1], [], []>} : vector<16x32xbf16>, vector<32x64xbf16>, vector<16x64xf32> -> vector<16x64xf32>
    %c0_159 = arith.constant 0 : index
    %c0_160 = arith.constant 0 : index
    %c0_161 = arith.constant 0 : index
    %290 = vector.load %arg16[%c0_159, %c0_160, %c0_161] : memref<2x1x64xf32, #tpu.memory_space<vmem>>, vector<1x1x64xf32>
    %291 = vector.shape_cast %290 : vector<1x1x64xf32> to vector<1x64xf32>
    %292 = vector.broadcast %291 : vector<1x64xf32> to vector<16x64xf32>
    %293 = arith.addf %289, %292 : vector<16x64xf32>
    %294 = arith.mulf %293, %293 : vector<16x64xf32>
    %295 = arith.mulf %293, %294 : vector<16x64xf32>
    %cst_162 = arith.constant 4.471500e-02 : f32
    %296 = vector.broadcast %cst_162 : f32 to vector<16x64xf32>
    %297 = arith.mulf %296, %295 : vector<16x64xf32>
    %298 = arith.addf %293, %297 : vector<16x64xf32>
    %cst_163 = arith.constant 0.797884583 : f32
    %299 = vector.broadcast %cst_163 : f32 to vector<16x64xf32>
    %300 = arith.mulf %299, %298 : vector<16x64xf32>
    %301 = math.tanh %300 : vector<16x64xf32>
    %cst_164 = arith.constant 1.000000e+00 : f32
    %302 = vector.broadcast %cst_164 : f32 to vector<16x64xf32>
    %303 = arith.addf %302, %301 : vector<16x64xf32>
    %cst_165 = arith.constant 5.000000e-01 : f32
    %304 = vector.broadcast %cst_165 : f32 to vector<16x64xf32>
    %305 = arith.mulf %304, %303 : vector<16x64xf32>
    %306 = arith.mulf %293, %305 : vector<16x64xf32>
    %307 = arith.truncf %306 : vector<16x64xf32> to vector<16x64xbf16>
    %c0_166 = arith.constant 0 : index
    %c0_167 = arith.constant 0 : index
    %c0_168 = arith.constant 0 : index
    %308 = vector.load %arg17[%c0_166, %c0_167, %c0_168] : memref<2x64x32xbf16, #tpu.memory_space<vmem>>, vector<1x64x32xbf16>
    %309 = vector.shape_cast %308 : vector<1x64x32xbf16> to vector<64x32xbf16>
    %cst_169 = arith.constant dense<0.000000e+00> : vector<16x32xf32>
    %310 = tpu.matmul %307, %309, %cst_169 {dimension_numbers = #tpu.dot_dimension_numbers<[1], [0], [0], [1], [0, 0, 1, 1], [], []>} : vector<16x64xbf16>, vector<64x32xbf16>, vector<16x32xf32> -> vector<16x32xf32>
    %c0_170 = arith.constant 0 : index
    %c0_171 = arith.constant 0 : index
    %c0_172 = arith.constant 0 : index
    %311 = vector.load %arg18[%c0_170, %c0_171, %c0_172] : memref<2x1x32xf32, #tpu.memory_space<vmem>>, vector<1x1x32xf32>
    %312 = vector.shape_cast %311 : vector<1x1x32xf32> to vector<1x32xf32>
    %313 = vector.broadcast %312 : vector<1x32xf32> to vector<16x32xf32>
    %314 = arith.addf %310, %313 : vector<16x32xf32>
    %315 = arith.addf %259, %314 : vector<16x32xf32>
    %c1_173 = arith.constant 1 : index
    %c0_174 = arith.constant 0 : index
    %c0_175 = arith.constant 0 : index
    %316 = vector.load %arg3[%c1_173, %c0_174, %c0_175] : memref<2x1x32xf32, #tpu.memory_space<vmem>>, vector<1x1x32xf32>
    %317 = vector.shape_cast %316 : vector<1x1x32xf32> to vector<1x32xf32>
    %c1_176 = arith.constant 1 : index
    %c0_177 = arith.constant 0 : index
    %c0_178 = arith.constant 0 : index
    %318 = vector.load %arg4[%c1_176, %c0_177, %c0_178] : memref<2x1x32xf32, #tpu.memory_space<vmem>>, vector<1x1x32xf32>
    %319 = vector.shape_cast %318 : vector<1x1x32xf32> to vector<1x32xf32>
    %cst_179 = arith.constant dense<0.000000e+00> : vector<16xf32>
    %320 = vector.multi_reduction <add>, %315, %cst_179 [1] : vector<16x32xf32> to vector<16xf32>
    %321 = vector.shape_cast %320 : vector<16xf32> to vector<16x1xf32>
    %cst_180 = arith.constant 3.200000e+01 : f32
    %322 = vector.broadcast %cst_180 : f32 to vector<16x1xf32>
    %323 = arith.divf %321, %322 : vector<16x1xf32>
    %324 = vector.broadcast %323 : vector<16x1xf32> to vector<16x32xf32>
    %325 = arith.subf %315, %324 : vector<16x32xf32>
    %326 = arith.mulf %325, %325 : vector<16x32xf32>
    %cst_181 = arith.constant dense<0.000000e+00> : vector<16xf32>
    %327 = vector.multi_reduction <add>, %326, %cst_181 [1] : vector<16x32xf32> to vector<16xf32>
    %328 = vector.shape_cast %327 : vector<16xf32> to vector<16x1xf32>
    %cst_182 = arith.constant 3.200000e+01 : f32
    %329 = vector.broadcast %cst_182 : f32 to vector<16x1xf32>
    %330 = arith.divf %328, %329 : vector<16x1xf32>
    %331 = vector.broadcast %323 : vector<16x1xf32> to vector<16x32xf32>
    %332 = arith.subf %315, %331 : vector<16x32xf32>
    %cst_183 = arith.constant 9.99999974E-6 : f32
    %333 = vector.broadcast %cst_183 : f32 to vector<16x1xf32>
    %334 = arith.addf %330, %333 : vector<16x1xf32>
    %335 = math.rsqrt %334 : vector<16x1xf32>
    %336 = vector.broadcast %335 : vector<16x1xf32> to vector<16x32xf32>
    %337 = arith.mulf %332, %336 : vector<16x32xf32>
    %338 = vector.broadcast %317 : vector<1x32xf32> to vector<16x32xf32>
    %339 = arith.mulf %337, %338 : vector<16x32xf32>
    %340 = vector.broadcast %319 : vector<1x32xf32> to vector<16x32xf32>
    %341 = arith.addf %339, %340 : vector<16x32xf32>
    %342 = arith.truncf %341 : vector<16x32xf32> to vector<16x32xbf16>
    %c1_184 = arith.constant 1 : index
    %c0_185 = arith.constant 0 : index
    %c0_186 = arith.constant 0 : index
    %343 = vector.load %arg5[%c1_184, %c0_185, %c0_186] : memref<2x32x32xbf16, #tpu.memory_space<vmem>>, vector<1x32x32xbf16>
    %344 = vector.shape_cast %343 : vector<1x32x32xbf16> to vector<32x32xbf16>
    %cst_187 = arith.constant dense<0.000000e+00> : vector<16x32xf32>
    %345 = tpu.matmul %342, %344, %cst_187 {dimension_numbers = #tpu.dot_dimension_numbers<[1], [0], [0], [1], [0, 0, 1, 1], [], []>} : vector<16x32xbf16>, vector<32x32xbf16>, vector<16x32xf32> -> vector<16x32xf32>
    %c1_188 = arith.constant 1 : index
    %c0_189 = arith.constant 0 : index
    %c0_190 = arith.constant 0 : index
    %346 = vector.load %arg6[%c1_188, %c0_189, %c0_190] : memref<2x1x32xf32, #tpu.memory_space<vmem>>, vector<1x1x32xf32>
    %347 = vector.shape_cast %346 : vector<1x1x32xf32> to vector<1x32xf32>
    %348 = vector.broadcast %347 : vector<1x32xf32> to vector<16x32xf32>
    %349 = arith.addf %345, %348 : vector<16x32xf32>
    %c1_191 = arith.constant 1 : index
    %c0_192 = arith.constant 0 : index
    %c0_193 = arith.constant 0 : index
    %350 = vector.load %arg7[%c1_191, %c0_192, %c0_193] : memref<2x32x32xbf16, #tpu.memory_space<vmem>>, vector<1x32x32xbf16>
    %351 = vector.shape_cast %350 : vector<1x32x32xbf16> to vector<32x32xbf16>
    %cst_194 = arith.constant dense<0.000000e+00> : vector<16x32xf32>
    %352 = tpu.matmul %342, %351, %cst_194 {dimension_numbers = #tpu.dot_dimension_numbers<[1], [0], [0], [1], [0, 0, 1, 1], [], []>} : vector<16x32xbf16>, vector<32x32xbf16>, vector<16x32xf32> -> vector<16x32xf32>
    %c1_195 = arith.constant 1 : index
    %c0_196 = arith.constant 0 : index
    %c0_197 = arith.constant 0 : index
    %353 = vector.load %arg8[%c1_195, %c0_196, %c0_197] : memref<2x1x32xf32, #tpu.memory_space<vmem>>, vector<1x1x32xf32>
    %354 = vector.shape_cast %353 : vector<1x1x32xf32> to vector<1x32xf32>
    %355 = vector.broadcast %354 : vector<1x32xf32> to vector<16x32xf32>
    %356 = arith.addf %352, %355 : vector<16x32xf32>
    %c1_198 = arith.constant 1 : index
    %c0_199 = arith.constant 0 : index
    %c0_200 = arith.constant 0 : index
    %357 = vector.load %arg9[%c1_198, %c0_199, %c0_200] : memref<2x32x32xbf16, #tpu.memory_space<vmem>>, vector<1x32x32xbf16>
    %358 = vector.shape_cast %357 : vector<1x32x32xbf16> to vector<32x32xbf16>
    %cst_201 = arith.constant dense<0.000000e+00> : vector<16x32xf32>
    %359 = tpu.matmul %342, %358, %cst_201 {dimension_numbers = #tpu.dot_dimension_numbers<[1], [0], [0], [1], [0, 0, 1, 1], [], []>} : vector<16x32xbf16>, vector<32x32xbf16>, vector<16x32xf32> -> vector<16x32xf32>
    %c1_202 = arith.constant 1 : index
    %c0_203 = arith.constant 0 : index
    %c0_204 = arith.constant 0 : index
    %360 = vector.load %arg10[%c1_202, %c0_203, %c0_204] : memref<2x1x32xf32, #tpu.memory_space<vmem>>, vector<1x1x32xf32>
    %361 = vector.shape_cast %360 : vector<1x1x32xf32> to vector<1x32xf32>
    %362 = vector.broadcast %361 : vector<1x32xf32> to vector<16x32xf32>
    %363 = arith.addf %359, %362 : vector<16x32xf32>
    %364 = vector.shape_cast %349 : vector<16x32xf32> to vector<2x8x32xf32>
    %365 = vector.shape_cast %356 : vector<16x32xf32> to vector<2x8x32xf32>
    %366 = vector.shape_cast %363 : vector<16x32xf32> to vector<2x8x32xf32>
    %c1_205 = arith.constant 1 : index
    %c0_206 = arith.constant 0 : index
    %c0_207 = arith.constant 0 : index
    %367 = vector.load %arg11[%c1_205, %c0_206, %c0_207] : memref<2x32x32xbf16, #tpu.memory_space<vmem>>, vector<1x32x32xbf16>
    %368 = vector.shape_cast %367 : vector<1x32x32xbf16> to vector<32x32xbf16>
    %cst_208 = arith.constant 0.000000e+00 : f32
    %369 = vector.broadcast %cst_208 : f32 to vector<16x32xf32>
    %370 = vector.extract_strided_slice %364 {offsets = [0, 0, 0], sizes = [2, 8, 8], strides = [1, 1, 1]} : vector<2x8x32xf32> to vector<2x8x8xf32>
    %371 = arith.truncf %370 : vector<2x8x8xf32> to vector<2x8x8xbf16>
    %372 = vector.extract_strided_slice %365 {offsets = [0, 0, 0], sizes = [2, 8, 8], strides = [1, 1, 1]} : vector<2x8x32xf32> to vector<2x8x8xf32>
    %373 = arith.truncf %372 : vector<2x8x8xf32> to vector<2x8x8xbf16>
    %374 = vector.extract_strided_slice %366 {offsets = [0, 0, 0], sizes = [2, 8, 8], strides = [1, 1, 1]} : vector<2x8x32xf32> to vector<2x8x8xf32>
    %375 = arith.truncf %374 : vector<2x8x8xf32> to vector<2x8x8xbf16>
    "tpu.trace_start"() <{level = 10 : i32, message = "bqd,bkd->bqk"}> : () -> ()
    %cst_209 = arith.constant dense<0.000000e+00> : vector<2x8x8xf32>
    %376 = tpu.matmul %371, %373, %cst_209 {dimension_numbers = #tpu.dot_dimension_numbers<[2], [2], [1], [1], [0, 0, 0, 1, 1, 1], [0], [0]>} : vector<2x8x8xbf16>, vector<2x8x8xbf16>, vector<2x8x8xf32> -> vector<2x8x8xf32>
    "tpu.trace_stop"() : () -> ()
    %cst_210 = arith.constant 0.353553385 : f32
    %377 = vector.broadcast %cst_210 : f32 to vector<2x8x8xf32>
    %378 = arith.mulf %376, %377 : vector<2x8x8xf32>
    %cst_211 = arith.constant dense<0xFF800000> : vector<2x8xf32>
    %379 = vector.multi_reduction <maximumf>, %378, %cst_211 [2] : vector<2x8x8xf32> to vector<2x8xf32>
    %380 = vector.shape_cast %379 : vector<2x8xf32> to vector<2x8x1xf32>
    %381 = vector.broadcast %380 : vector<2x8x1xf32> to vector<2x8x8xf32>
    %382 = arith.subf %378, %381 : vector<2x8x8xf32>
    %383 = math.exp %382 : vector<2x8x8xf32>
    %cst_212 = arith.constant dense<0.000000e+00> : vector<2x8xf32>
    %384 = vector.multi_reduction <add>, %383, %cst_212 [2] : vector<2x8x8xf32> to vector<2x8xf32>
    %385 = vector.shape_cast %384 : vector<2x8xf32> to vector<2x8x1xf32>
    %386 = tpu.reciprocal %385 {approx = true} : vector<2x8x1xf32> -> vector<2x8x1xf32>
    %387 = vector.broadcast %386 : vector<2x8x1xf32> to vector<2x8x8xf32>
    %388 = arith.mulf %383, %387 : vector<2x8x8xf32>
    %389 = arith.truncf %388 : vector<2x8x8xf32> to vector<2x8x8xbf16>
    "tpu.trace_start"() <{level = 10 : i32, message = "bqk,bkd->bqd"}> : () -> ()
    %cst_213 = arith.constant dense<0.000000e+00> : vector<2x8x8xf32>
    %390 = tpu.matmul %389, %375, %cst_213 {dimension_numbers = #tpu.dot_dimension_numbers<[2], [1], [1], [2], [0, 0, 0, 1, 1, 2], [0], [0]>} : vector<2x8x8xbf16>, vector<2x8x8xbf16>, vector<2x8x8xf32> -> vector<2x8x8xf32>
    "tpu.trace_stop"() : () -> ()
    %391 = vector.shape_cast %390 : vector<2x8x8xf32> to vector<16x8xf32>
    %392 = arith.truncf %391 : vector<16x8xf32> to vector<16x8xbf16>
    %393 = vector.extract_strided_slice %368 {offsets = [0, 0], sizes = [8, 32], strides = [1, 1]} : vector<32x32xbf16> to vector<8x32xbf16>
    %cst_214 = arith.constant dense<0.000000e+00> : vector<16x32xf32>
    %394 = tpu.matmul %392, %393, %cst_214 {dimension_numbers = #tpu.dot_dimension_numbers<[1], [0], [0], [1], [0, 0, 1, 1], [], []>} : vector<16x8xbf16>, vector<8x32xbf16>, vector<16x32xf32> -> vector<16x32xf32>
    %395 = arith.addf %369, %394 : vector<16x32xf32>
    %396 = vector.extract_strided_slice %364 {offsets = [0, 0, 8], sizes = [2, 8, 8], strides = [1, 1, 1]} : vector<2x8x32xf32> to vector<2x8x8xf32>
    %397 = arith.truncf %396 : vector<2x8x8xf32> to vector<2x8x8xbf16>
    %398 = vector.extract_strided_slice %365 {offsets = [0, 0, 8], sizes = [2, 8, 8], strides = [1, 1, 1]} : vector<2x8x32xf32> to vector<2x8x8xf32>
    %399 = arith.truncf %398 : vector<2x8x8xf32> to vector<2x8x8xbf16>
    %400 = vector.extract_strided_slice %366 {offsets = [0, 0, 8], sizes = [2, 8, 8], strides = [1, 1, 1]} : vector<2x8x32xf32> to vector<2x8x8xf32>
    %401 = arith.truncf %400 : vector<2x8x8xf32> to vector<2x8x8xbf16>
    "tpu.trace_start"() <{level = 10 : i32, message = "bqd,bkd->bqk"}> : () -> ()
    %cst_215 = arith.constant dense<0.000000e+00> : vector<2x8x8xf32>
    %402 = tpu.matmul %397, %399, %cst_215 {dimension_numbers = #tpu.dot_dimension_numbers<[2], [2], [1], [1], [0, 0, 0, 1, 1, 1], [0], [0]>} : vector<2x8x8xbf16>, vector<2x8x8xbf16>, vector<2x8x8xf32> -> vector<2x8x8xf32>
    "tpu.trace_stop"() : () -> ()
    %cst_216 = arith.constant 0.353553385 : f32
    %403 = vector.broadcast %cst_216 : f32 to vector<2x8x8xf32>
    %404 = arith.mulf %402, %403 : vector<2x8x8xf32>
    %cst_217 = arith.constant dense<0xFF800000> : vector<2x8xf32>
    %405 = vector.multi_reduction <maximumf>, %404, %cst_217 [2] : vector<2x8x8xf32> to vector<2x8xf32>
    %406 = vector.shape_cast %405 : vector<2x8xf32> to vector<2x8x1xf32>
    %407 = vector.broadcast %406 : vector<2x8x1xf32> to vector<2x8x8xf32>
    %408 = arith.subf %404, %407 : vector<2x8x8xf32>
    %409 = math.exp %408 : vector<2x8x8xf32>
    %cst_218 = arith.constant dense<0.000000e+00> : vector<2x8xf32>
    %410 = vector.multi_reduction <add>, %409, %cst_218 [2] : vector<2x8x8xf32> to vector<2x8xf32>
    %411 = vector.shape_cast %410 : vector<2x8xf32> to vector<2x8x1xf32>
    %412 = tpu.reciprocal %411 {approx = true} : vector<2x8x1xf32> -> vector<2x8x1xf32>
    %413 = vector.broadcast %412 : vector<2x8x1xf32> to vector<2x8x8xf32>
    %414 = arith.mulf %409, %413 : vector<2x8x8xf32>
    %415 = arith.truncf %414 : vector<2x8x8xf32> to vector<2x8x8xbf16>
    "tpu.trace_start"() <{level = 10 : i32, message = "bqk,bkd->bqd"}> : () -> ()
    %cst_219 = arith.constant dense<0.000000e+00> : vector<2x8x8xf32>
    %416 = tpu.matmul %415, %401, %cst_219 {dimension_numbers = #tpu.dot_dimension_numbers<[2], [1], [1], [2], [0, 0, 0, 1, 1, 2], [0], [0]>} : vector<2x8x8xbf16>, vector<2x8x8xbf16>, vector<2x8x8xf32> -> vector<2x8x8xf32>
    "tpu.trace_stop"() : () -> ()
    %417 = vector.shape_cast %416 : vector<2x8x8xf32> to vector<16x8xf32>
    %418 = arith.truncf %417 : vector<16x8xf32> to vector<16x8xbf16>
    %419 = vector.extract_strided_slice %368 {offsets = [8, 0], sizes = [8, 32], strides = [1, 1]} : vector<32x32xbf16> to vector<8x32xbf16>
    %cst_220 = arith.constant dense<0.000000e+00> : vector<16x32xf32>
    %420 = tpu.matmul %418, %419, %cst_220 {dimension_numbers = #tpu.dot_dimension_numbers<[1], [0], [0], [1], [0, 0, 1, 1], [], []>} : vector<16x8xbf16>, vector<8x32xbf16>, vector<16x32xf32> -> vector<16x32xf32>
    %421 = arith.addf %395, %420 : vector<16x32xf32>
    %422 = vector.extract_strided_slice %364 {offsets = [0, 0, 16], sizes = [2, 8, 8], strides = [1, 1, 1]} : vector<2x8x32xf32> to vector<2x8x8xf32>
    %423 = arith.truncf %422 : vector<2x8x8xf32> to vector<2x8x8xbf16>
    %424 = vector.extract_strided_slice %365 {offsets = [0, 0, 16], sizes = [2, 8, 8], strides = [1, 1, 1]} : vector<2x8x32xf32> to vector<2x8x8xf32>
    %425 = arith.truncf %424 : vector<2x8x8xf32> to vector<2x8x8xbf16>
    %426 = vector.extract_strided_slice %366 {offsets = [0, 0, 16], sizes = [2, 8, 8], strides = [1, 1, 1]} : vector<2x8x32xf32> to vector<2x8x8xf32>
    %427 = arith.truncf %426 : vector<2x8x8xf32> to vector<2x8x8xbf16>
    "tpu.trace_start"() <{level = 10 : i32, message = "bqd,bkd->bqk"}> : () -> ()
    %cst_221 = arith.constant dense<0.000000e+00> : vector<2x8x8xf32>
    %428 = tpu.matmul %423, %425, %cst_221 {dimension_numbers = #tpu.dot_dimension_numbers<[2], [2], [1], [1], [0, 0, 0, 1, 1, 1], [0], [0]>} : vector<2x8x8xbf16>, vector<2x8x8xbf16>, vector<2x8x8xf32> -> vector<2x8x8xf32>
    "tpu.trace_stop"() : () -> ()
    %cst_222 = arith.constant 0.353553385 : f32
    %429 = vector.broadcast %cst_222 : f32 to vector<2x8x8xf32>
    %430 = arith.mulf %428, %429 : vector<2x8x8xf32>
    %cst_223 = arith.constant dense<0xFF800000> : vector<2x8xf32>
    %431 = vector.multi_reduction <maximumf>, %430, %cst_223 [2] : vector<2x8x8xf32> to vector<2x8xf32>
    %432 = vector.shape_cast %431 : vector<2x8xf32> to vector<2x8x1xf32>
    %433 = vector.broadcast %432 : vector<2x8x1xf32> to vector<2x8x8xf32>
    %434 = arith.subf %430, %433 : vector<2x8x8xf32>
    %435 = math.exp %434 : vector<2x8x8xf32>
    %cst_224 = arith.constant dense<0.000000e+00> : vector<2x8xf32>
    %436 = vector.multi_reduction <add>, %435, %cst_224 [2] : vector<2x8x8xf32> to vector<2x8xf32>
    %437 = vector.shape_cast %436 : vector<2x8xf32> to vector<2x8x1xf32>
    %438 = tpu.reciprocal %437 {approx = true} : vector<2x8x1xf32> -> vector<2x8x1xf32>
    %439 = vector.broadcast %438 : vector<2x8x1xf32> to vector<2x8x8xf32>
    %440 = arith.mulf %435, %439 : vector<2x8x8xf32>
    %441 = arith.truncf %440 : vector<2x8x8xf32> to vector<2x8x8xbf16>
    "tpu.trace_start"() <{level = 10 : i32, message = "bqk,bkd->bqd"}> : () -> ()
    %cst_225 = arith.constant dense<0.000000e+00> : vector<2x8x8xf32>
    %442 = tpu.matmul %441, %427, %cst_225 {dimension_numbers = #tpu.dot_dimension_numbers<[2], [1], [1], [2], [0, 0, 0, 1, 1, 2], [0], [0]>} : vector<2x8x8xbf16>, vector<2x8x8xbf16>, vector<2x8x8xf32> -> vector<2x8x8xf32>
    "tpu.trace_stop"() : () -> ()
    %443 = vector.shape_cast %442 : vector<2x8x8xf32> to vector<16x8xf32>
    %444 = arith.truncf %443 : vector<16x8xf32> to vector<16x8xbf16>
    %445 = vector.extract_strided_slice %368 {offsets = [16, 0], sizes = [8, 32], strides = [1, 1]} : vector<32x32xbf16> to vector<8x32xbf16>
    %cst_226 = arith.constant dense<0.000000e+00> : vector<16x32xf32>
    %446 = tpu.matmul %444, %445, %cst_226 {dimension_numbers = #tpu.dot_dimension_numbers<[1], [0], [0], [1], [0, 0, 1, 1], [], []>} : vector<16x8xbf16>, vector<8x32xbf16>, vector<16x32xf32> -> vector<16x32xf32>
    %447 = arith.addf %421, %446 : vector<16x32xf32>
    %448 = vector.extract_strided_slice %364 {offsets = [0, 0, 24], sizes = [2, 8, 8], strides = [1, 1, 1]} : vector<2x8x32xf32> to vector<2x8x8xf32>
    %449 = arith.truncf %448 : vector<2x8x8xf32> to vector<2x8x8xbf16>
    %450 = vector.extract_strided_slice %365 {offsets = [0, 0, 24], sizes = [2, 8, 8], strides = [1, 1, 1]} : vector<2x8x32xf32> to vector<2x8x8xf32>
    %451 = arith.truncf %450 : vector<2x8x8xf32> to vector<2x8x8xbf16>
    %452 = vector.extract_strided_slice %366 {offsets = [0, 0, 24], sizes = [2, 8, 8], strides = [1, 1, 1]} : vector<2x8x32xf32> to vector<2x8x8xf32>
    %453 = arith.truncf %452 : vector<2x8x8xf32> to vector<2x8x8xbf16>
    "tpu.trace_start"() <{level = 10 : i32, message = "bqd,bkd->bqk"}> : () -> ()
    %cst_227 = arith.constant dense<0.000000e+00> : vector<2x8x8xf32>
    %454 = tpu.matmul %449, %451, %cst_227 {dimension_numbers = #tpu.dot_dimension_numbers<[2], [2], [1], [1], [0, 0, 0, 1, 1, 1], [0], [0]>} : vector<2x8x8xbf16>, vector<2x8x8xbf16>, vector<2x8x8xf32> -> vector<2x8x8xf32>
    "tpu.trace_stop"() : () -> ()
    %cst_228 = arith.constant 0.353553385 : f32
    %455 = vector.broadcast %cst_228 : f32 to vector<2x8x8xf32>
    %456 = arith.mulf %454, %455 : vector<2x8x8xf32>
    %cst_229 = arith.constant dense<0xFF800000> : vector<2x8xf32>
    %457 = vector.multi_reduction <maximumf>, %456, %cst_229 [2] : vector<2x8x8xf32> to vector<2x8xf32>
    %458 = vector.shape_cast %457 : vector<2x8xf32> to vector<2x8x1xf32>
    %459 = vector.broadcast %458 : vector<2x8x1xf32> to vector<2x8x8xf32>
    %460 = arith.subf %456, %459 : vector<2x8x8xf32>
    %461 = math.exp %460 : vector<2x8x8xf32>
    %cst_230 = arith.constant dense<0.000000e+00> : vector<2x8xf32>
    %462 = vector.multi_reduction <add>, %461, %cst_230 [2] : vector<2x8x8xf32> to vector<2x8xf32>
    %463 = vector.shape_cast %462 : vector<2x8xf32> to vector<2x8x1xf32>
    %464 = tpu.reciprocal %463 {approx = true} : vector<2x8x1xf32> -> vector<2x8x1xf32>
    %465 = vector.broadcast %464 : vector<2x8x1xf32> to vector<2x8x8xf32>
    %466 = arith.mulf %461, %465 : vector<2x8x8xf32>
    %467 = arith.truncf %466 : vector<2x8x8xf32> to vector<2x8x8xbf16>
    "tpu.trace_start"() <{level = 10 : i32, message = "bqk,bkd->bqd"}> : () -> ()
    %cst_231 = arith.constant dense<0.000000e+00> : vector<2x8x8xf32>
    %468 = tpu.matmul %467, %453, %cst_231 {dimension_numbers = #tpu.dot_dimension_numbers<[2], [1], [1], [2], [0, 0, 0, 1, 1, 2], [0], [0]>} : vector<2x8x8xbf16>, vector<2x8x8xbf16>, vector<2x8x8xf32> -> vector<2x8x8xf32>
    "tpu.trace_stop"() : () -> ()
    %469 = vector.shape_cast %468 : vector<2x8x8xf32> to vector<16x8xf32>
    %470 = arith.truncf %469 : vector<16x8xf32> to vector<16x8xbf16>
    %471 = vector.extract_strided_slice %368 {offsets = [24, 0], sizes = [8, 32], strides = [1, 1]} : vector<32x32xbf16> to vector<8x32xbf16>
    %cst_232 = arith.constant dense<0.000000e+00> : vector<16x32xf32>
    %472 = tpu.matmul %470, %471, %cst_232 {dimension_numbers = #tpu.dot_dimension_numbers<[1], [0], [0], [1], [0, 0, 1, 1], [], []>} : vector<16x8xbf16>, vector<8x32xbf16>, vector<16x32xf32> -> vector<16x32xf32>
    %473 = arith.addf %447, %472 : vector<16x32xf32>
    %474 = arith.addf %315, %473 : vector<16x32xf32>
    %c1_233 = arith.constant 1 : index
    %c0_234 = arith.constant 0 : index
    %c0_235 = arith.constant 0 : index
    %475 = vector.load %arg12[%c1_233, %c0_234, %c0_235] : memref<2x1x32xf32, #tpu.memory_space<vmem>>, vector<1x1x32xf32>
    %476 = vector.shape_cast %475 : vector<1x1x32xf32> to vector<1x32xf32>
    %477 = vector.broadcast %476 : vector<1x32xf32> to vector<16x32xf32>
    %478 = arith.addf %474, %477 : vector<16x32xf32>
    %c1_236 = arith.constant 1 : index
    %c0_237 = arith.constant 0 : index
    %c0_238 = arith.constant 0 : index
    %479 = vector.load %arg13[%c1_236, %c0_237, %c0_238] : memref<2x1x32xf32, #tpu.memory_space<vmem>>, vector<1x1x32xf32>
    %480 = vector.shape_cast %479 : vector<1x1x32xf32> to vector<1x32xf32>
    %c1_239 = arith.constant 1 : index
    %c0_240 = arith.constant 0 : index
    %c0_241 = arith.constant 0 : index
    %481 = vector.load %arg14[%c1_239, %c0_240, %c0_241] : memref<2x1x32xf32, #tpu.memory_space<vmem>>, vector<1x1x32xf32>
    %482 = vector.shape_cast %481 : vector<1x1x32xf32> to vector<1x32xf32>
    %cst_242 = arith.constant dense<0.000000e+00> : vector<16xf32>
    %483 = vector.multi_reduction <add>, %478, %cst_242 [1] : vector<16x32xf32> to vector<16xf32>
    %484 = vector.shape_cast %483 : vector<16xf32> to vector<16x1xf32>
    %cst_243 = arith.constant 3.200000e+01 : f32
    %485 = vector.broadcast %cst_243 : f32 to vector<16x1xf32>
    %486 = arith.divf %484, %485 : vector<16x1xf32>
    %487 = vector.broadcast %486 : vector<16x1xf32> to vector<16x32xf32>
    %488 = arith.subf %478, %487 : vector<16x32xf32>
    %489 = arith.mulf %488, %488 : vector<16x32xf32>
    %cst_244 = arith.constant dense<0.000000e+00> : vector<16xf32>
    %490 = vector.multi_reduction <add>, %489, %cst_244 [1] : vector<16x32xf32> to vector<16xf32>
    %491 = vector.shape_cast %490 : vector<16xf32> to vector<16x1xf32>
    %cst_245 = arith.constant 3.200000e+01 : f32
    %492 = vector.broadcast %cst_245 : f32 to vector<16x1xf32>
    %493 = arith.divf %491, %492 : vector<16x1xf32>
    %494 = vector.broadcast %486 : vector<16x1xf32> to vector<16x32xf32>
    %495 = arith.subf %478, %494 : vector<16x32xf32>
    %cst_246 = arith.constant 9.99999974E-6 : f32
    %496 = vector.broadcast %cst_246 : f32 to vector<16x1xf32>
    %497 = arith.addf %493, %496 : vector<16x1xf32>
    %498 = math.rsqrt %497 : vector<16x1xf32>
    %499 = vector.broadcast %498 : vector<16x1xf32> to vector<16x32xf32>
    %500 = arith.mulf %495, %499 : vector<16x32xf32>
    %501 = vector.broadcast %480 : vector<1x32xf32> to vector<16x32xf32>
    %502 = arith.mulf %500, %501 : vector<16x32xf32>
    %503 = vector.broadcast %482 : vector<1x32xf32> to vector<16x32xf32>
    %504 = arith.addf %502, %503 : vector<16x32xf32>
    %505 = arith.truncf %504 : vector<16x32xf32> to vector<16x32xbf16>
    %c1_247 = arith.constant 1 : index
    %c0_248 = arith.constant 0 : index
    %c0_249 = arith.constant 0 : index
    %506 = vector.load %arg15[%c1_247, %c0_248, %c0_249] : memref<2x32x64xbf16, #tpu.memory_space<vmem>>, vector<1x32x64xbf16>
    %507 = vector.shape_cast %506 : vector<1x32x64xbf16> to vector<32x64xbf16>
    %cst_250 = arith.constant dense<0.000000e+00> : vector<16x64xf32>
    %508 = tpu.matmul %505, %507, %cst_250 {dimension_numbers = #tpu.dot_dimension_numbers<[1], [0], [0], [1], [0, 0, 1, 1], [], []>} : vector<16x32xbf16>, vector<32x64xbf16>, vector<16x64xf32> -> vector<16x64xf32>
    %c1_251 = arith.constant 1 : index
    %c0_252 = arith.constant 0 : index
    %c0_253 = arith.constant 0 : index
    %509 = vector.load %arg16[%c1_251, %c0_252, %c0_253] : memref<2x1x64xf32, #tpu.memory_space<vmem>>, vector<1x1x64xf32>
    %510 = vector.shape_cast %509 : vector<1x1x64xf32> to vector<1x64xf32>
    %511 = vector.broadcast %510 : vector<1x64xf32> to vector<16x64xf32>
    %512 = arith.addf %508, %511 : vector<16x64xf32>
    %513 = arith.mulf %512, %512 : vector<16x64xf32>
    %514 = arith.mulf %512, %513 : vector<16x64xf32>
    %cst_254 = arith.constant 4.471500e-02 : f32
    %515 = vector.broadcast %cst_254 : f32 to vector<16x64xf32>
    %516 = arith.mulf %515, %514 : vector<16x64xf32>
    %517 = arith.addf %512, %516 : vector<16x64xf32>
    %cst_255 = arith.constant 0.797884583 : f32
    %518 = vector.broadcast %cst_255 : f32 to vector<16x64xf32>
    %519 = arith.mulf %518, %517 : vector<16x64xf32>
    %520 = math.tanh %519 : vector<16x64xf32>
    %cst_256 = arith.constant 1.000000e+00 : f32
    %521 = vector.broadcast %cst_256 : f32 to vector<16x64xf32>
    %522 = arith.addf %521, %520 : vector<16x64xf32>
    %cst_257 = arith.constant 5.000000e-01 : f32
    %523 = vector.broadcast %cst_257 : f32 to vector<16x64xf32>
    %524 = arith.mulf %523, %522 : vector<16x64xf32>
    %525 = arith.mulf %512, %524 : vector<16x64xf32>
    %526 = arith.truncf %525 : vector<16x64xf32> to vector<16x64xbf16>
    %c1_258 = arith.constant 1 : index
    %c0_259 = arith.constant 0 : index
    %c0_260 = arith.constant 0 : index
    %527 = vector.load %arg17[%c1_258, %c0_259, %c0_260] : memref<2x64x32xbf16, #tpu.memory_space<vmem>>, vector<1x64x32xbf16>
    %528 = vector.shape_cast %527 : vector<1x64x32xbf16> to vector<64x32xbf16>
    %cst_261 = arith.constant dense<0.000000e+00> : vector<16x32xf32>
    %529 = tpu.matmul %526, %528, %cst_261 {dimension_numbers = #tpu.dot_dimension_numbers<[1], [0], [0], [1], [0, 0, 1, 1], [], []>} : vector<16x64xbf16>, vector<64x32xbf16>, vector<16x32xf32> -> vector<16x32xf32>
    %c1_262 = arith.constant 1 : index
    %c0_263 = arith.constant 0 : index
    %c0_264 = arith.constant 0 : index
    %530 = vector.load %arg18[%c1_262, %c0_263, %c0_264] : memref<2x1x32xf32, #tpu.memory_space<vmem>>, vector<1x1x32xf32>
    %531 = vector.shape_cast %530 : vector<1x1x32xf32> to vector<1x32xf32>
    %532 = vector.broadcast %531 : vector<1x32xf32> to vector<16x32xf32>
    %533 = arith.addf %529, %532 : vector<16x32xf32>
    %534 = arith.addf %478, %533 : vector<16x32xf32>
    %535 = vector.shape_cast %534 : vector<16x32xf32> to vector<2x8x32xf32>
    %c0_265 = arith.constant 0 : index
    %c0_266 = arith.constant 0 : index
    %c0_267 = arith.constant 0 : index
    %536 = vector.load %arg19[%c0_265, %c0_266, %c0_267] : memref<2x8x32xf32, #tpu.memory_space<vmem>>, vector<2x8x32xf32>
    tpu.vector_store %arg19[%c0_265, %c0_266, %c0_267], %535 {strides = array<i32>} : memref<2x8x32xf32, #tpu.memory_space<vmem>>, vector<2x8x32xf32>,
    return
  }
}

</mosaic_0001>

<llo_original>
// kernel: tpu_custom_call.1
$region0: #{tpu_custom_call.1}
  #allocation0 [shape = 'u32[]', space=smem, size = 0x4, offset = 0x4, fixed_abs, tag = 'smem constant byte address 0x4 - core index']
  #allocation1 [shape = 'u32[144,128]{1,0:T(1,128)}', space=vmem, size = 0x12000, scoped, tag = 'internal scratch']
  #allocation2 [shape = 'f32[16,32]{1,0:T(8,128)}', space=vmem, size = 0x2000, scoped, tag = 'scratch operand']
  %s0 = inlined_call_operand.hbm [shape: s32[16], index: 0, kind: input, shape index: {}]
  %s1 = inlined_call_operand.vmem [shape: f32[50,32], index: 1, kind: input, shape index: {}]
  %s2 = inlined_call_operand.hbm [shape: f32[8,32], index: 2, kind: input, shape index: {}]
  %s3 = inlined_call_operand.hbm [shape: f32[2,1,32], index: 3, kind: input, shape index: {}]
  %s4 = inlined_call_operand.hbm [shape: f32[2,1,32], index: 4, kind: input, shape index: {}]
  %s5 = inlined_call_operand.vmem [shape: bf16[2,32,32], index: 5, kind: input, shape index: {}]
  %s6 = inlined_call_operand.vmem [shape: f32[2,1,32], index: 6, kind: input, shape index: {}]
  %s7 = inlined_call_operand.vmem [shape: bf16[2,32,32], index: 7, kind: input, shape index: {}]
  %s8 = inlined_call_operand.vmem [shape: f32[2,1,32], index: 8, kind: input, shape index: {}]
  %s9 = inlined_call_operand.vmem [shape: bf16[2,32,32], index: 9, kind: input, shape index: {}]
  %s10 = inlined_call_operand.vmem [shape: f32[2,1,32], index: 10, kind: input, shape index: {}]
  %s11 = inlined_call_operand.vmem [shape: bf16[2,32,32], index: 11, kind: input, shape index: {}]
  %s12 = inlined_call_operand.vmem [shape: f32[2,1,32], index: 12, kind: input, shape index: {}]
  %s13 = inlined_call_operand.vmem [shape: f32[2,1,32], index: 13, kind: input, shape index: {}]
  %s14 = inlined_call_operand.vmem [shape: f32[2,1,32], index: 14, kind: input, shape index: {}]
  %s15 = inlined_call_operand.vmem [shape: bf16[2,32,64], index: 15, kind: input, shape index: {}]
  %s16 = inlined_call_operand.vmem [shape: f32[2,1,64], index: 16, kind: input, shape index: {}]
  %s17 = inlined_call_operand.vmem [shape: bf16[2,64,32], index: 17, kind: input, shape index: {}]
  %s18 = inlined_call_operand.vmem [shape: f32[2,1,32], index: 18, kind: input, shape index: {}]
  %s19 = inlined_call_operand.hbm [shape: f32[2,8,32], index: 19, kind: output, shape index: {}]
  %s20 = sld [smem:[#allocation0]]
  $region102: #{tpu_custom_call.1} parent=0
    _
  %s22 = ssub.s32 1, %s20
  %s23 = scalar_select 0, %s22, %s20
  $region1: #{tpu_custom_call.1} parent=0
    #allocation3 [shape = 'u8[512]{0}', space=smem, size = 0x200, scoped, tag = 'input window, operand 0, single buffered']
    #allocation4 [shape = 's32[1]{0}', space=sflag, size = 0x4, scoped, tag = 'scoped memory for tpu_custom_call.1']
    #allocation5 [shape = 's32[1]{0}', space=sflag, size = 0x4, scoped, tag = 'scoped memory for tpu_custom_call.1']
    #allocation6 [shape = 's32[1]{0}', space=sflag, size = 0x4, scoped, tag = 'scoped memory for tpu_custom_call.1']
    #allocation7 [shape = 'u8[4096]{0}', space=vmem, size = 0x1000, scoped, tag = 'input window, operand 2, single buffered']
    #allocation8 [shape = 'u8[1024]{0}', space=vmem, size = 0x400, scoped, tag = 'input window, operand 3, single buffered']
    #allocation9 [shape = 's32[1]{0}', space=sflag, size = 0x4, scoped, tag = 'scoped memory for tpu_custom_call.1']
    #allocation10 [shape = 'u8[1024]{0}', space=vmem, size = 0x400, scoped, tag = 'input window, operand 4, single buffered']
    #allocation11 [shape = 'u8[8192]{0}', space=vmem, size = 0x2000, scoped, tag = 'output window, operand 0, single buffered']
    %24 = vsyncpa [#allocation6], 0
    %25 = vsyncpa [#allocation4], 0
    %26 = vsyncpa [#allocation9], 0
    %27 = vsyncpa [#allocation5], 0
    // Predicated region
    $region2: #{tpu_custom_call.1} parent=1 // pred_check
      _
    $region3: #{tpu_custom_call.1} parent=1 // pred_check_branch
      %29 = sbr.rel (0) target = $region5
    $region4: #{tpu_custom_call.1} parent=1 // pred_region
      %s31 = ssub.s32 16, 16
      %32 = vsyncadd [#allocation6], %s31
      %35 = dma.hbm_to_smem %s0, 16, [#allocation3], [#allocation6]
    $region5: #{tpu_custom_call.1} parent=1 // pred_fallthru
      _
    // Predicated region
    $region6: #{tpu_custom_call.1} parent=1 // pred_check
      _
    $region7: #{tpu_custom_call.1} parent=1 // pred_check_branch
      %37 = sbr.rel (0) target = $region9
    $region8: #{tpu_custom_call.1} parent=1 // pred_region
      _
    $region9: #{tpu_custom_call.1} parent=1 // pred_fallthru
      _
    // Predicated region
    $region10: #{tpu_custom_call.1} parent=1 // pred_check
      _
    $region11: #{tpu_custom_call.1} parent=1 // pred_check_branch
      %39 = sbr.rel (0) target = $region13
    $region12: #{tpu_custom_call.1} parent=1 // pred_region
      %s41 = ssub.s32 128, 128
      %42 = vsyncadd [#allocation4], %s41
      %s44 = sshll.u32 [#allocation7], 4
      %s45 = int_to_ptr.vmem [resolvable:$true] %s44
      %47 = dma.hbm_to_vmem [thread:$0]  %s2, 128, %s45, [#allocation4]
    $region13: #{tpu_custom_call.1} parent=1 // pred_fallthru
      _
    // Predicated region
    $region14: #{tpu_custom_call.1} parent=1 // pred_check
      _
    $region15: #{tpu_custom_call.1} parent=1 // pred_check_branch
      %49 = sbr.rel (0) target = $region17
    $region16: #{tpu_custom_call.1} parent=1 // pred_region
      %s51 = ssub.s32 32, 32
      %52 = vsyncadd [#allocation9], %s51
      %s53 = sshll.u32 [#allocation8], 4
      %s54 = int_to_ptr.vmem [resolvable:$true] %s53
      %59 = dma.hbm_to_vmem [thread:$0]  %s3, 32, %s54, [#allocation9], 16, 16, 1
    $region17: #{tpu_custom_call.1} parent=1 // pred_fallthru
      _
    // Predicated region
    $region18: #{tpu_custom_call.1} parent=1 // pred_check
      _
    $region19: #{tpu_custom_call.1} parent=1 // pred_check_branch
      %61 = sbr.rel (0) target = $region21
    $region20: #{tpu_custom_call.1} parent=1 // pred_region
      %s63 = ssub.s32 32, 32
      %64 = vsyncadd [#allocation9], %s63
      %s65 = sshll.u32 [#allocation10], 4
      %s66 = int_to_ptr.vmem [resolvable:$true] %s65
      %71 = dma.hbm_to_vmem [thread:$0]  %s4, 32, %s66, [#allocation9], 16, 16, 1
    $region21: #{tpu_custom_call.1} parent=1 // pred_fallthru
      _
    // Predicated region
    $region22: #{tpu_custom_call.1} parent=1 // pred_check
      _
    $region23: #{tpu_custom_call.1} parent=1 // pred_check_branch
      %73 = sbr.rel (0) target = $region25
    $region24: #{tpu_custom_call.1} parent=1 // pred_region
      _
    $region25: #{tpu_custom_call.1} parent=1 // pred_fallthru
      _
    // Predicated region
    $region26: #{tpu_custom_call.1} parent=1 // pred_check
      _
    $region27: #{tpu_custom_call.1} parent=1 // pred_check_branch
      %75 = sbr.rel (0) target = $region29
    $region28: #{tpu_custom_call.1} parent=1 // pred_region
      _
    $region29: #{tpu_custom_call.1} parent=1 // pred_fallthru
      _
    // Predicated region
    $region30: #{tpu_custom_call.1} parent=1 // pred_check
      _
    $region31: #{tpu_custom_call.1} parent=1 // pred_check_branch
      %77 = sbr.rel (0) target = $region33
    $region32: #{tpu_custom_call.1} parent=1 // pred_region
      _
    $region33: #{tpu_custom_call.1} parent=1 // pred_fallthru
      _
    // Predicated region
    $region34: #{tpu_custom_call.1} parent=1 // pred_check
      _
    $region35: #{tpu_custom_call.1} parent=1 // pred_check_branch
      %79 = sbr.rel (0) target = $region37
    $region36: #{tpu_custom_call.1} parent=1 // pred_region
      _
    $region37: #{tpu_custom_call.1} parent=1 // pred_fallthru
      _
    // Predicated region
    $region38: #{tpu_custom_call.1} parent=1 // pred_check
      _
    $region39: #{tpu_custom_call.1} parent=1 // pred_check_branch
      %81 = sbr.rel (0) target = $region41
    $region40: #{tpu_custom_call.1} parent=1 // pred_region
      _
    $region41: #{tpu_custom_call.1} parent=1 // pred_fallthru
      _
    // Predicated region
    $region42: #{tpu_custom_call.1} parent=1 // pred_check
      _
    $region43: #{tpu_custom_call.1} parent=1 // pred_check_branch
      %83 = sbr.rel (0) target = $region45
    $region44: #{tpu_custom_call.1} parent=1 // pred_region
      _
    $region45: #{tpu_custom_call.1} parent=1 // pred_fallthru
      _
    // Predicated region
    $region46: #{tpu_custom_call.1} parent=1 // pred_check
      _
    $region47: #{tpu_custom_call.1} parent=1 // pred_check_branch
      %85 = sbr.rel (0) target = $region49
    $region48: #{tpu_custom_call.1} parent=1 // pred_region
      _
    $region49: #{tpu_custom_call.1} parent=1 // pred_fallthru
      _
    // Predicated region
    $region50: #{tpu_custom_call.1} parent=1 // pred_check
      _
    $region51: #{tpu_custom_call.1} parent=1 // pred_check_branch
      %87 = sbr.rel (0) target = $region53
    $region52: #{tpu_custom_call.1} parent=1 // pred_region
      _
    $region53: #{tpu_custom_call.1} parent=1 // pred_fallthru
      _
    // Predicated region
    $region54: #{tpu_custom_call.1} parent=1 // pred_check
      _
    $region55: #{tpu_custom_call.1} parent=1 // pred_check_branch
      %89 = sbr.rel (0) target = $region57
    $region56: #{tpu_custom_call.1} parent=1 // pred_region
      _
    $region57: #{tpu_custom_call.1} parent=1 // pred_fallthru
      _
    // Predicated region
    $region58: #{tpu_custom_call.1} parent=1 // pred_check
      _
    $region59: #{tpu_custom_call.1} parent=1 // pred_check_branch
      %91 = sbr.rel (0) target = $region61
    $region60: #{tpu_custom_call.1} parent=1 // pred_region
      _
    $region61: #{tpu_custom_call.1} parent=1 // pred_fallthru
      _
    // Predicated region
    $region62: #{tpu_custom_call.1} parent=1 // pred_check
      _
    $region63: #{tpu_custom_call.1} parent=1 // pred_check_branch
      %93 = sbr.rel (0) target = $region65
    $region64: #{tpu_custom_call.1} parent=1 // pred_region
      _
    $region65: #{tpu_custom_call.1} parent=1 // pred_fallthru
      _
    // Predicated region
    $region66: #{tpu_custom_call.1} parent=1 // pred_check
      _
    $region67: #{tpu_custom_call.1} parent=1 // pred_check_branch
      %95 = sbr.rel (0) target = $region69
    $region68: #{tpu_custom_call.1} parent=1 // pred_region
      _
    $region69: #{tpu_custom_call.1} parent=1 // pred_fallthru
      _
    // Predicated region
    $region70: #{tpu_custom_call.1} parent=1 // pred_check
      _
    $region71: #{tpu_custom_call.1} parent=1 // pred_check_branch
      %97 = sbr.rel (0) target = $region73
    $region72: #{tpu_custom_call.1} parent=1 // pred_region
      _
    $region73: #{tpu_custom_call.1} parent=1 // pred_fallthru
      _
    // Predicated region
    $region74: #{tpu_custom_call.1} parent=1 // pred_check
      _
    $region75: #{tpu_custom_call.1} parent=1 // pred_check_branch
      %99 = sbr.rel (0) target = $region77
    $region76: #{tpu_custom_call.1} parent=1 // pred_region
      _
    $region77: #{tpu_custom_call.1} parent=1 // pred_fallthru
      _
    // Predicated region
    $region78: #{tpu_custom_call.1} parent=1 // pred_check
      _
    $region79: #{tpu_custom_call.1} parent=1 // pred_check_branch
      %101 = sbr.rel (0) target = $region81
    $region80: #{tpu_custom_call.1} parent=1 // pred_region
      %102 = dma.done [#allocation6], 16
    $region81: #{tpu_custom_call.1} parent=1 // pred_fallthru
      _
    // Predicated region
    $region82: #{tpu_custom_call.1} parent=1 // pred_check
      _
    $region83: #{tpu_custom_call.1} parent=1 // pred_check_branch
      %104 = sbr.rel (0) target = $region85
    $region84: #{tpu_custom_call.1} parent=1 // pred_region
      %105 = dma.done [#allocation4], 128
    $region85: #{tpu_custom_call.1} parent=1 // pred_fallthru
      _
    // Predicated region
    $region86: #{tpu_custom_call.1} parent=1 // pred_check
      _
    $region87: #{tpu_custom_call.1} parent=1 // pred_check_branch
      %107 = sbr.rel (0) target = $region89
    $region88: #{tpu_custom_call.1} parent=1 // pred_region
      %108 = dma.done [#allocation9], 32
    $region89: #{tpu_custom_call.1} parent=1 // pred_fallthru
      _
    // Predicated region
    $region90: #{tpu_custom_call.1} parent=1 // pred_check
      _
    $region91: #{tpu_custom_call.1} parent=1 // pred_check_branch
      %110 = sbr.rel (0) target = $region93
    $region92: #{tpu_custom_call.1} parent=1 // pred_region
      %111 = dma.done [#allocation9], 32
    $region93: #{tpu_custom_call.1} parent=1 // pred_fallthru
      _
    %112 = sfence
    %s114 = sld [smem:[#allocation3]]
    %s115 = scalar_lea.vmem %s1, %s114
    %v116 = vld [vmem:[%s115] sm:$0x1]
    %v117 = vld [vmem:[#allocation7] sm:$0x1]
    %v118 = vadd.f32 %v116, %v117
    %vm119 = vcmask 253952
    %120 = vst.msk [vmem:[#allocation2] sm:$0x1] %vm119, %v118
    %s121 = sld [smem:[#allocation3 + $0x1]]
    %s122 = scalar_lea.vmem %s1, %s121
    %v123 = vld [vmem:[%s122] sm:$0x1]
    %v124 = vld [vmem:[#allocation7 + $0x1] sm:$0x1]
    %v125 = vadd.f32 %v123, %v124
    %126 = vst.msk [vmem:[#allocation2 + $0x1] sm:$0x1] %vm119, %v125
    %s127 = sld [smem:[#allocation3 + $0x2]]
    %s128 = scalar_lea.vmem %s1, %s127
    %v129 = vld [vmem:[%s128] sm:$0x1]
    %v130 = vld [vmem:[#allocation7 + $0x2] sm:$0x1]
    %v131 = vadd.f32 %v129, %v130
    %132 = vst.msk [vmem:[#allocation2 + $0x2] sm:$0x1] %vm119, %v131
    %s133 = sld [smem:[#allocation3 + $0x3]]
    %s134 = scalar_lea.vmem %s1, %s133
    %v135 = vld [vmem:[%s134] sm:$0x1]
    %v136 = vld [vmem:[#allocation7 + $0x3] sm:$0x1]
    %v137 = vadd.f32 %v135, %v136
    %138 = vst.msk [vmem:[#allocation2 + $0x3] sm:$0x1] %vm119, %v137
    %s139 = sld [smem:[#allocation3 + $0x4]]
    %s140 = scalar_lea.vmem %s1, %s139
    %v141 = vld [vmem:[%s140] sm:$0x1]
    %v142 = vld [vmem:[#allocation7 + $0x4] sm:$0x1]
    %v143 = vadd.f32 %v141, %v142
    %144 = vst.msk [vmem:[#allocation2 + $0x4] sm:$0x1] %vm119, %v143
    %s145 = sld [smem:[#allocation3 + $0x5]]
    %s146 = scalar_lea.vmem %s1, %s145
    %v147 = vld [vmem:[%s146] sm:$0x1]
    %v148 = vld [vmem:[#allocation7 + $0x5] sm:$0x1]
    %v149 = vadd.f32 %v147, %v148
    %150 = vst.msk [vmem:[#allocation2 + $0x5] sm:$0x1] %vm119, %v149
    %s151 = sld [smem:[#allocation3 + $0x6]]
    %s152 = scalar_lea.vmem %s1, %s151
    %v153 = vld [vmem:[%s152] sm:$0x1]
    %v154 = vld [vmem:[#allocation7 + $0x6] sm:$0x1]
    %v155 = vadd.f32 %v153, %v154
    %156 = vst.msk [vmem:[#allocation2 + $0x6] sm:$0x1] %vm119, %v155
    %s157 = sld [smem:[#allocation3 + $0x7]]
    %s158 = scalar_lea.vmem %s1, %s157
    %v159 = vld [vmem:[%s158] sm:$0x1]
    %v160 = vld [vmem:[#allocation7 + $0x7] sm:$0x1]
    %v161 = vadd.f32 %v159, %v160
    %162 = vst.msk [vmem:[#allocation2 + $0x7] sm:$0x1] %vm119, %v161
    %s163 = sld [smem:[#allocation3 + $0x8]]
    %s164 = scalar_lea.vmem %s1, %s163
    %v165 = vld [vmem:[%s164] sm:$0x1]
    %v166 = vld [vmem:[#allocation7] sm:$0x1]
    %v167 = vadd.f32 %v165, %v166
    %168 = vst.msk [vmem:[#allocation2 + $0x8] sm:$0x1] %vm119, %v167
    %s169 = sld [smem:[#allocation3 + $0x9]]
    %s170 = scalar_lea.vmem %s1, %s169
    %v171 = vld [vmem:[%s170] sm:$0x1]
    %v172 = vld [vmem:[#allocation7 + $0x1] sm:$0x1]
    %v173 = vadd.f32 %v171, %v172
    %174 = vst.msk [vmem:[#allocation2 + $0x9] sm:$0x1] %vm119, %v173
    %s175 = sld [smem:[#allocation3 + $0xa]]
    %s176 = scalar_lea.vmem %s1, %s175
    %v177 = vld [vmem:[%s176] sm:$0x1]
    %v178 = vld [vmem:[#allocation7 + $0x2] sm:$0x1]
    %v179 = vadd.f32 %v177, %v178
    %180 = vst.msk [vmem:[#allocation2 + $0xa] sm:$0x1] %vm119, %v179
    %s181 = sld [smem:[#allocation3 + $0xb]]
    %s182 = scalar_lea.vmem %s1, %s181
    %v183 = vld [vmem:[%s182] sm:$0x1]
    %v184 = vld [vmem:[#allocation7 + $0x3] sm:$0x1]
    %v185 = vadd.f32 %v183, %v184
    %186 = vst.msk [vmem:[#allocation2 + $0xb] sm:$0x1] %vm119, %v185
    %s187 = sld [smem:[#allocation3 + $0xc]]
    %s188 = scalar_lea.vmem %s1, %s187
    %v189 = vld [vmem:[%s188] sm:$0x1]
    %v190 = vld [vmem:[#allocation7 + $0x4] sm:$0x1]
    %v191 = vadd.f32 %v189, %v190
    %192 = vst.msk [vmem:[#allocation2 + $0xc] sm:$0x1] %vm119, %v191
    %s193 = sld [smem:[#allocation3 + $0xd]]
    %s194 = scalar_lea.vmem %s1, %s193
    %v195 = vld [vmem:[%s194] sm:$0x1]
    %v196 = vld [vmem:[#allocation7 + $0x5] sm:$0x1]
    %v197 = vadd.f32 %v195, %v196
    %198 = vst.msk [vmem:[#allocation2 + $0xd] sm:$0x1] %vm119, %v197
    %s199 = sld [smem:[#allocation3 + $0xe]]
    %s200 = scalar_lea.vmem %s1, %s199
    %v201 = vld [vmem:[%s200] sm:$0x1]
    %v202 = vld [vmem:[#allocation7 + $0x6] sm:$0x1]
    %v203 = vadd.f32 %v201, %v202
    %204 = vst.msk [vmem:[#allocation2 + $0xe] sm:$0x1] %vm119, %v203
    %s205 = sld [smem:[#allocation3 + $0xf]]
    %s206 = scalar_lea.vmem %s1, %s205
    %v207 = vld [vmem:[%s206] sm:$0x1]
    %v208 = vld [vmem:[#allocation7 + $0x7] sm:$0x1]
    %v209 = vadd.f32 %v207, %v208
    %210 = vst.msk [vmem:[#allocation2 + $0xf] sm:$0x1] %vm119, %v209
    %v211 = vld [vmem:[#allocation2] sm:$0xff]
    %v212 = vld [vmem:[#allocation2 + $0x8] sm:$0xff]
    %v213 = vld [vmem:[#allocation8] sm:$0x1]
    %v214 = vld [vmem:[#allocation10] sm:$0x1]
    %vm215 = vcmask 261120
    %v216 = vsel %vm215, %v211, 0.0
    %217 = vadd.xlane.f32.xlu0 %v216
    %v218 = vpop.xlane.xlu0 %217
    %v219 = vsel %vm215, %v212, 0.0
    %220 = vadd.xlane.f32.xlu0 %v219
    %v221 = vpop.xlane.xlu0 %220
    %v222 = vrcp.pop 32.0
    %v223 = vmul.f32 %v218, %v222
    %v224 = vmul.f32 %v221, %v222
    %v225 = vsub.f32 %v211, %v223
    %v226 = vsub.f32 %v212, %v224
    %v227 = vmul.f32 %v225, %v225
    %v228 = vmul.f32 %v226, %v226
    %v229 = vsel %vm215, %v227, 0.0
    %230 = vadd.xlane.f32.xlu0 %v229
    %v231 = vpop.xlane.xlu0 %230
    %v232 = vsel %vm215, %v228, 0.0
    %233 = vadd.xlane.f32.xlu0 %v232
    %v234 = vpop.xlane.xlu0 %233
    %v235 = vmul.f32 %v231, %v222
    %v236 = vmul.f32 %v234, %v222
    %v237 = vadd.f32 %v235, 1e-05
    %v238 = vadd.f32 %v236, 1e-05
    %v239 = vrsqrt.pop %v237
    %v240 = vrsqrt.pop %v238
    %v241 = vmul.f32 %v225, %v239
    %v242 = vmul.f32 %v226, %v240
    %v244 = vlaneseq
    %v245 = vshrl.u32 %v244, 7
    %v246 = vsub.s32 0, %v245
    %v247 = vrot.slane %v213, %v246
    %v249 = vmul.f32 %v241, %v247
    %v250 = vmul.f32 %v242, %v247
    %v252 = vlaneseq
    %v253 = vshrl.u32 %v252, 7
    %v254 = vsub.s32 0, %v253
    %v255 = vrot.slane %v214, %v254
    %v257 = vadd.f32 %v249, %v255
    %v258 = vadd.f32 %v250, %v255
    %v259 = vpack.c.bf16 %v258, %v257
    %v260 = vld [vmem:[%s5] sm:$0xf]
    %v261 = vld [vmem:[%s5 + $0x4] sm:$0xf]
    %v262 = vld [vmem:[%s5 + $0x8] sm:$0xf]
    %v263 = vld [vmem:[%s5 + $0xc] sm:$0xf]
    %v264 = vld [vmem:[%s6] sm:$0x1]
    %v266 = vlaneseq
    %v267 = vshrl.u32 %v266, 7
    %v268 = vsub.s32 0, %v267
    %v269 = vrot.slane %v264, %v268
    %v275 = vunpack.c.l.b16 %v260
    %v276 = vunpack.c.l.b16 %v261
    %v277 = vunpack.c.l.b16 %v262
    %v278 = vunpack.c.l.b16 %v263
    %v279 = vpack.c.b16 %v276, %v275
    %v280 = vpack.c.b16 %v278, %v277
    %v284 = vsel %vm215, %v259, 0
    %286 = vmatprep.subr.bf16.mxu0 0
    %287 = vmatpush1.bf16.msra.mxu0 0
    %288 = vmatprep.subr.bf16.mxu0 0
    %289 = vmatpush1.bf16.msra.mxu0 0
    %290 = vmatprep.subr.bf16.mxu0 0
    %291 = vmatpush1.bf16.msra.mxu0 0
    %292 = vmatprep.subr.bf16.mxu0 0
    %293 = vmatpush1.bf16.msra.mxu0 0
    %294 = vmatprep.subr.bf16.mxu0 0
    %295 = vmatpush1.bf16.msra.mxu0 0
    %296 = vmatprep.subr.bf16.mxu0 0
    %297 = vmatpush1.bf16.msra.mxu0 0
    %298 = vmatprep.subr.bf16.mxu0 0
    %299 = vmatpush1.bf16.msra.mxu0 %v280
    %300 = vmatprep.subr.bf16.mxu0 0
    %301 = vmatpush1.bf16.msra.mxu0 %v279
    %302 = vmatprep.subr.bf16.mxu0 0
    %303 = vmatpush2.bf16.msra.mxu0 0
    %304 = vmatprep.subr.bf16.mxu0 0
    %305 = vmatpush2.bf16.msra.mxu0 0
    %306 = vmatprep.subr.bf16.mxu0 0
    %307 = vmatpush2.bf16.msra.mxu0 0
    %308 = vmatprep.subr.bf16.mxu0 0
    %309 = vmatpush2.bf16.msra.mxu0 0
    %310 = vmatprep.subr.bf16.mxu0 0
    %311 = vmatpush2.bf16.msra.mxu0 0
    %312 = vmatprep.subr.bf16.mxu0 0
    %313 = vmatpush2.bf16.msra.mxu0 0
    %314 = vmatprep.subr.bf16.mxu0 0
    %315 = vmatpush2.bf16.msra.mxu0 0
    %316 = vmatprep.subr.bf16.mxu0 0
    %317 = vmatpush2.bf16.msra.mxu0 0
    %318 = vmatprep.mubr.bf16.mxu0 0
    %319 = vmatmul.mubr.bf16.gmra.mxu0 %v284
    %v320 = vpop.f32.mrf.mxu0
    %v321 = vadd.f32 %v269, %v320
    %v322 = vpop.f32.mrf.mxu0
    %v323 = vpop.f32.mrf.mxu0
    %v324 = vadd.f32 %v269, %v323
    %v325 = vpop.f32.mrf.mxu0
    %326 = vdwg.mxu0
    %v327 = vld [vmem:[%s7] sm:$0xf]
    %v328 = vld [vmem:[%s7 + $0x4] sm:$0xf]
    %v329 = vld [vmem:[%s7 + $0x8] sm:$0xf]
    %v330 = vld [vmem:[%s7 + $0xc] sm:$0xf]
    %v331 = vld [vmem:[%s8] sm:$0x1]
    %v333 = vlaneseq
    %v334 = vshrl.u32 %v333, 7
    %v335 = vsub.s32 0, %v334
    %v336 = vrot.slane %v331, %v335
    %v342 = vunpack.c.l.b16 %v327
    %v343 = vunpack.c.l.b16 %v328
    %v344 = vunpack.c.l.b16 %v329
    %v345 = vunpack.c.l.b16 %v330
    %v346 = vpack.c.b16 %v343, %v342
    %v347 = vpack.c.b16 %v345, %v344
    %350 = vmatprep.subr.bf16.mxu0 0
    %351 = vmatpush1.bf16.msra.mxu0 0
    %352 = vmatprep.subr.bf16.mxu0 0
    %353 = vmatpush1.bf16.msra.mxu0 0
    %354 = vmatprep.subr.bf16.mxu0 0
    %355 = vmatpush1.bf16.msra.mxu0 0
    %356 = vmatprep.subr.bf16.mxu0 0
    %357 = vmatpush1.bf16.msra.mxu0 0
    %358 = vmatprep.subr.bf16.mxu0 0
    %359 = vmatpush1.bf16.msra.mxu0 0
    %360 = vmatprep.subr.bf16.mxu0 0
    %361 = vmatpush1.bf16.msra.mxu0 0
    %362 = vmatprep.subr.bf16.mxu0 0
    %363 = vmatpush1.bf16.msra.mxu0 %v347
    %364 = vmatprep.subr.bf16.mxu0 0
    %365 = vmatpush1.bf16.msra.mxu0 %v346
    %366 = vmatprep.subr.bf16.mxu0 0
    %367 = vmatpush2.bf16.msra.mxu0 0
    %368 = vmatprep.subr.bf16.mxu0 0
    %369 = vmatpush2.bf16.msra.mxu0 0
    %370 = vmatprep.subr.bf16.mxu0 0
    %371 = vmatpush2.bf16.msra.mxu0 0
    %372 = vmatprep.subr.bf16.mxu0 0
    %373 = vmatpush2.bf16.msra.mxu0 0
    %374 = vmatprep.subr.bf16.mxu0 0
    %375 = vmatpush2.bf16.msra.mxu0 0
    %376 = vmatprep.subr.bf16.mxu0 0
    %377 = vmatpush2.bf16.msra.mxu0 0
    %378 = vmatprep.subr.bf16.mxu0 0
    %379 = vmatpush2.bf16.msra.mxu0 0
    %380 = vmatprep.subr.bf16.mxu0 0
    %381 = vmatpush2.bf16.msra.mxu0 0
    %382 = vmatprep.mubr.bf16.mxu0 0
    %383 = vmatmul.mubr.bf16.gmra.mxu0 %v284
    %v384 = vpop.f32.mrf.mxu0
    %v385 = vadd.f32 %v336, %v384
    %v386 = vpop.f32.mrf.mxu0
    %v387 = vpop.f32.mrf.mxu0
    %v388 = vadd.f32 %v336, %v387
    %v389 = vpop.f32.mrf.mxu0
    %390 = vdwg.mxu0
    %v391 = vld [vmem:[%s9] sm:$0xf]
    %v392 = vld [vmem:[%s9 + $0x4] sm:$0xf]
    %v393 = vld [vmem:[%s9 + $0x8] sm:$0xf]
    %v394 = vld [vmem:[%s9 + $0xc] sm:$0xf]
    %v395 = vld [vmem:[%s10] sm:$0x1]
    %v397 = vlaneseq
    %v398 = vshrl.u32 %v397, 7
    %v399 = vsub.s32 0, %v398
    %v400 = vrot.slane %v395, %v399
    %v406 = vunpack.c.l.b16 %v391
    %v407 = vunpack.c.l.b16 %v392
    %v408 = vunpack.c.l.b16 %v393
    %v409 = vunpack.c.l.b16 %v394
    %v410 = vpack.c.b16 %v407, %v406
    %v411 = vpack.c.b16 %v409, %v408
    %414 = vmatprep.subr.bf16.mxu0 0
    %415 = vmatpush1.bf16.msra.mxu0 0
    %416 = vmatprep.subr.bf16.mxu0 0
    %417 = vmatpush1.bf16.msra.mxu0 0
    %418 = vmatprep.subr.bf16.mxu0 0
    %419 = vmatpush1.bf16.msra.mxu0 0
    %420 = vmatprep.subr.bf16.mxu0 0
    %421 = vmatpush1.bf16.msra.mxu0 0
    %422 = vmatprep.subr.bf16.mxu0 0
    %423 = vmatpush1.bf16.msra.mxu0 0
    %424 = vmatprep.subr.bf16.mxu0 0
    %425 = vmatpush1.bf16.msra.mxu0 0
    %426 = vmatprep.subr.bf16.mxu0 0
    %427 = vmatpush1.bf16.msra.mxu0 %v411
    %428 = vmatprep.subr.bf16.mxu0 0
    %429 = vmatpush1.bf16.msra.mxu0 %v410
    %430 = vmatprep.subr.bf16.mxu0 0
    %431 = vmatpush2.bf16.msra.mxu0 0
    %432 = vmatprep.subr.bf16.mxu0 0
    %433 = vmatpush2.bf16.msra.mxu0 0
    %434 = vmatprep.subr.bf16.mxu0 0
    %435 = vmatpush2.bf16.msra.mxu0 0
    %436 = vmatprep.subr.bf16.mxu0 0
    %437 = vmatpush2.bf16.msra.mxu0 0
    %438 = vmatprep.subr.bf16.mxu0 0
    %439 = vmatpush2.bf16.msra.mxu0 0
    %440 = vmatprep.subr.bf16.mxu0 0
    %441 = vmatpush2.bf16.msra.mxu0 0
    %442 = vmatprep.subr.bf16.mxu0 0
    %443 = vmatpush2.bf16.msra.mxu0 0
    %444 = vmatprep.subr.bf16.mxu0 0
    %445 = vmatpush2.bf16.msra.mxu0 0
    %446 = vmatprep.mubr.bf16.mxu0 0
    %447 = vmatmul.mubr.bf16.gmra.mxu0 %v284
    %v448 = vpop.f32.mrf.mxu0
    %v449 = vadd.f32 %v400, %v448
    %v450 = vpop.f32.mrf.mxu0
    %v451 = vpop.f32.mrf.mxu0
    %v452 = vadd.f32 %v400, %v451
    %v453 = vpop.f32.mrf.mxu0
    %454 = vdwg.mxu0
    %v455 = vld [vmem:[%s11] sm:$0xf]
    %v456 = vld [vmem:[%s11 + $0x4] sm:$0xf]
    %v457 = vld [vmem:[%s11 + $0x8] sm:$0xf]
    %v458 = vld [vmem:[%s11 + $0xc] sm:$0xf]
    %v459 = vpack.c.bf16 %v321, %v321
    %v460 = vpack.c.bf16 %v324, %v324
    %v461 = vpack.c.bf16 %v385, %v385
    %v462 = vpack.c.bf16 %v388, %v388
    %v463 = vpack.c.bf16 %v449, %v449
    %v464 = vpack.c.bf16 %v452, %v452
    %vm465 = vcmask 64512
    %v467 = vsel %vm465, %v459, 0
    %v470 = vsel %vm465, %v461, 0
    %472 = vmatprep.subr.bf16.mxu0 0
    %473 = vmatpush1.bf16.xpose.msra.mxu0 0
    %474 = vmatprep.subr.bf16.mxu0 0
    %475 = vmatpush1.bf16.xpose.msra.mxu0 0
    %476 = vmatprep.subr.bf16.mxu0 0
    %477 = vmatpush1.bf16.xpose.msra.mxu0 0
    %478 = vmatprep.subr.bf16.mxu0 0
    %479 = vmatpush1.bf16.xpose.msra.mxu0 0
    %480 = vmatprep.subr.bf16.mxu0 0
    %481 = vmatpush1.bf16.xpose.msra.mxu0 0
    %482 = vmatprep.subr.bf16.mxu0 0
    %483 = vmatpush1.bf16.xpose.msra.mxu0 0
    %484 = vmatprep.subr.bf16.mxu0 0
    %485 = vmatpush1.bf16.xpose.msra.mxu0 0
    %486 = vmatprep.subr.bf16.mxu0 0
    %487 = vmatpush1.bf16.xpose.msra.mxu0 %v470
    %488 = vmatprep.subr.bf16.mxu0 0
    %489 = vmatpush2.bf16.xpose.msra.mxu0 0
    %490 = vmatprep.subr.bf16.mxu0 0
    %491 = vmatpush2.bf16.xpose.msra.mxu0 0
    %492 = vmatprep.subr.bf16.mxu0 0
    %493 = vmatpush2.bf16.xpose.msra.mxu0 0
    %494 = vmatprep.subr.bf16.mxu0 0
    %495 = vmatpush2.bf16.xpose.msra.mxu0 0
    %496 = vmatprep.subr.bf16.mxu0 0
    %497 = vmatpush2.bf16.xpose.msra.mxu0 0
    %498 = vmatprep.subr.bf16.mxu0 0
    %499 = vmatpush2.bf16.xpose.msra.mxu0 0
    %500 = vmatprep.subr.bf16.mxu0 0
    %501 = vmatpush2.bf16.xpose.msra.mxu0 0
    %502 = vmatprep.subr.bf16.mxu0 0
    %503 = vmatpush2.bf16.xpose.msra.mxu0 0
    %504 = vmatprep.mubr.bf16.mxu0 0
    %505 = vmatmul.mubr.bf16.gmra.mxu0 %v467
    %v506 = vpop.f32.mrf.mxu0
    %v507 = vadd.f32 0.0, %v506
    %v508 = vpop.f32.mrf.mxu0
    %v509 = vpop.f32.mrf.mxu0
    %v510 = vpop.f32.mrf.mxu0
    %511 = vdwg.mxu0
    %v513 = vsel %vm465, %v460, 0
    %v516 = vsel %vm465, %v462, 0
    %518 = vmatprep.subr.bf16.mxu0 0
    %519 = vmatpush1.bf16.xpose.msra.mxu0 0
    %520 = vmatprep.subr.bf16.mxu0 0
    %521 = vmatpush1.bf16.xpose.msra.mxu0 0
    %522 = vmatprep.subr.bf16.mxu0 0
    %523 = vmatpush1.bf16.xpose.msra.mxu0 0
    %524 = vmatprep.subr.bf16.mxu0 0
    %525 = vmatpush1.bf16.xpose.msra.mxu0 0
    %526 = vmatprep.subr.bf16.mxu0 0
    %527 = vmatpush1.bf16.xpose.msra.mxu0 0
    %528 = vmatprep.subr.bf16.mxu0 0
    %529 = vmatpush1.bf16.xpose.msra.mxu0 0
    %530 = vmatprep.subr.bf16.mxu0 0
    %531 = vmatpush1.bf16.xpose.msra.mxu0 0
    %532 = vmatprep.subr.bf16.mxu0 0
    %533 = vmatpush1.bf16.xpose.msra.mxu0 %v516
    %534 = vmatprep.subr.bf16.mxu0 0
    %535 = vmatpush2.bf16.xpose.msra.mxu0 0
    %536 = vmatprep.subr.bf16.mxu0 0
    %537 = vmatpush2.bf16.xpose.msra.mxu0 0
    %538 = vmatprep.subr.bf16.mxu0 0
    %539 = vmatpush2.bf16.xpose.msra.mxu0 0
    %540 = vmatprep.subr.bf16.mxu0 0
    %541 = vmatpush2.bf16.xpose.msra.mxu0 0
    %542 = vmatprep.subr.bf16.mxu0 0
    %543 = vmatpush2.bf16.xpose.msra.mxu0 0
    %544 = vmatprep.subr.bf16.mxu0 0
    %545 = vmatpush2.bf16.xpose.msra.mxu0 0
    %546 = vmatprep.subr.bf16.mxu0 0
    %547 = vmatpush2.bf16.xpose.msra.mxu0 0
    %548 = vmatprep.subr.bf16.mxu0 0
    %549 = vmatpush2.bf16.xpose.msra.mxu0 0
    %550 = vmatprep.mubr.bf16.mxu0 0
    %551 = vmatmul.mubr.bf16.gmra.mxu0 %v513
    %v552 = vpop.f32.mrf.mxu0
    %v553 = vadd.f32 0.0, %v552
    %v554 = vpop.f32.mrf.mxu0
    %v555 = vpop.f32.mrf.mxu0
    %v556 = vpop.f32.mrf.mxu0
    %557 = vdwg.mxu0
    %v558 = vmul.f32 %v507, 0.35355338
    %v559 = vmul.f32 %v553, 0.35355338
    %v560 = vsel %vm465, %v558, -inf
    %561 = vmax.xlane.f32.xlu0 %v560
    %v562 = vpop.xlane.xlu0 %561
    %v563 = vsel %vm465, %v559, -inf
    %564 = vmax.xlane.f32.xlu0 %v563
    %v565 = vpop.xlane.xlu0 %564
    %v566 = vsub.f32 %v558, %v562
    %v567 = vsub.f32 %v559, %v565
    %v568 = vmul.f32 %v566, 1.442695
    %v569 = vpow.pop %v568
    %v570 = vmul.f32 %v567, 1.442695
    %v571 = vpow.pop %v570
    %v572 = vsel %vm465, %v569, 0.0
    %573 = vadd.xlane.f32.xlu0 %v572
    %v574 = vpop.xlane.xlu0 %573
    %v575 = vsel %vm465, %v571, 0.0
    %576 = vadd.xlane.f32.xlu0 %v575
    %v577 = vpop.xlane.xlu0 %576
    %v578 = vrcp.pop %v574
    %v579 = vrcp.pop %v577
    %v580 = vmul.f32 %v569, %v578
    %v581 = vmul.f32 %v571, %v579
    %v582 = vpack.c.bf16 %v580, %v580
    %v583 = vpack.c.bf16 %v581, %v581
    %v585 = vsel %vm465, %v582, 0
    %vm587 = vcmask 1043456
    %v589 = vsel %vm587, %v463, 0
    %591 = vmatprep.subr.bf16.mxu0 0
    %592 = vmatpush1.bf16.msra.mxu0 0
    %593 = vmatprep.subr.bf16.mxu0 0
    %594 = vmatpush1.bf16.msra.mxu0 0
    %595 = vmatprep.subr.bf16.mxu0 0
    %596 = vmatpush1.bf16.msra.mxu0 0
    %597 = vmatprep.subr.bf16.mxu0 0
    %598 = vmatpush1.bf16.msra.mxu0 0
    %599 = vmatprep.subr.bf16.mxu0 0
    %600 = vmatpush1.bf16.msra.mxu0 0
    %601 = vmatprep.subr.bf16.mxu0 0
    %602 = vmatpush1.bf16.msra.mxu0 0
    %603 = vmatprep.subr.bf16.mxu0 0
    %604 = vmatpush1.bf16.msra.mxu0 0
    %605 = vmatprep.subr.bf16.mxu0 0
    %606 = vmatpush1.bf16.msra.mxu0 %v589
    %607 = vmatprep.subr.bf16.mxu0 0
    %608 = vmatpush2.bf16.msra.mxu0 0
    %609 = vmatprep.subr.bf16.mxu0 0
    %610 = vmatpush2.bf16.msra.mxu0 0
    %611 = vmatprep.subr.bf16.mxu0 0
    %612 = vmatpush2.bf16.msra.mxu0 0
    %613 = vmatprep.subr.bf16.mxu0 0
    %614 = vmatpush2.bf16.msra.mxu0 0
    %615 = vmatprep.subr.bf16.mxu0 0
    %616 = vmatpush2.bf16.msra.mxu0 0
    %617 = vmatprep.subr.bf16.mxu0 0
    %618 = vmatpush2.bf16.msra.mxu0 0
    %619 = vmatprep.subr.bf16.mxu0 0
    %620 = vmatpush2.bf16.msra.mxu0 0
    %621 = vmatprep.subr.bf16.mxu0 0
    %622 = vmatpush2.bf16.msra.mxu0 0
    %623 = vmatprep.mubr.bf16.mxu0 0
    %624 = vmatmul.mubr.bf16.gmra.mxu0 %v585
    %v625 = vpop.f32.mrf.mxu0
    %v626 = vadd.f32 0.0, %v625
    %v627 = vpop.f32.mrf.mxu0
    %v628 = vpop.f32.mrf.mxu0
    %v629 = vpop.f32.mrf.mxu0
    %630 = vdwg.mxu0
    %v632 = vsel %vm465, %v583, 0
    %v635 = vsel %vm587, %v464, 0
    %637 = vmatprep.subr.bf16.mxu0 0
    %638 = vmatpush1.bf16.msra.mxu0 0
    %639 = vmatprep.subr.bf16.mxu0 0
    %640 = vmatpush1.bf16.msra.mxu0 0
    %641 = vmatprep.subr.bf16.mxu0 0
    %642 = vmatpush1.bf16.msra.mxu0 0
    %643 = vmatprep.subr.bf16.mxu0 0
    %644 = vmatpush1.bf16.msra.mxu0 0
    %645 = vmatprep.subr.bf16.mxu0 0
    %646 = vmatpush1.bf16.msra.mxu0 0
    %647 = vmatprep.subr.bf16.mxu0 0
    %648 = vmatpush1.bf16.msra.mxu0 0
    %649 = vmatprep.subr.bf16.mxu0 0
    %650 = vmatpush1.bf16.msra.mxu0 0
    %651 = vmatprep.subr.bf16.mxu0 0
    %652 = vmatpush1.bf16.msra.mxu0 %v635
    %653 = vmatprep.subr.bf16.mxu0 0
    %654 = vmatpush2.bf16.msra.mxu0 0
    %655 = vmatprep.subr.bf16.mxu0 0
    %656 = vmatpush2.bf16.msra.mxu0 0
    %657 = vmatprep.subr.bf16.mxu0 0
    %658 = vmatpush2.bf16.msra.mxu0 0
    %659 = vmatprep.subr.bf16.mxu0 0
    %660 = vmatpush2.bf16.msra.mxu0 0
    %661 = vmatprep.subr.bf16.mxu0 0
    %662 = vmatpush2.bf16.msra.mxu0 0
    %663 = vmatprep.subr.bf16.mxu0 0
    %664 = vmatpush2.bf16.msra.mxu0 0
    %665 = vmatprep.subr.bf16.mxu0 0
    %666 = vmatpush2.bf16.msra.mxu0 0
    %667 = vmatprep.subr.bf16.mxu0 0
    %668 = vmatpush2.bf16.msra.mxu0 0
    %669 = vmatprep.mubr.bf16.mxu0 0
    %670 = vmatmul.mubr.bf16.gmra.mxu0 %v632
    %v671 = vpop.f32.mrf.mxu0
    %v672 = vadd.f32 0.0, %v671
    %v673 = vpop.f32.mrf.mxu0
    %v674 = vpop.f32.mrf.mxu0
    %v675 = vpop.f32.mrf.mxu0
    %676 = vdwg.mxu0
    %v677 = vpack.c.bf16 %v672, %v626
    %679 = vrot.lane.b32.xlu0 %v459, 120
    %v680 = vpop.permute.xlu0 %679
    %682 = vrot.lane.b32.xlu0 %v461, 120
    %v683 = vpop.permute.xlu0 %682
    %v685 = vsel %vm465, %v680, 0
    %v688 = vsel %vm465, %v683, 0
    %690 = vmatprep.subr.bf16.mxu0 0
    %691 = vmatpush1.bf16.xpose.msra.mxu0 0
    %692 = vmatprep.subr.bf16.mxu0 0
    %693 = vmatpush1.bf16.xpose.msra.mxu0 0
    %694 = vmatprep.subr.bf16.mxu0 0
    %695 = vmatpush1.bf16.xpose.msra.mxu0 0
    %696 = vmatprep.subr.bf16.mxu0 0
    %697 = vmatpush1.bf16.xpose.msra.mxu0 0
    %698 = vmatprep.subr.bf16.mxu0 0
    %699 = vmatpush1.bf16.xpose.msra.mxu0 0
    %700 = vmatprep.subr.bf16.mxu0 0
    %701 = vmatpush1.bf16.xpose.msra.mxu0 0
    %702 = vmatprep.subr.bf16.mxu0 0
    %703 = vmatpush1.bf16.xpose.msra.mxu0 0
    %704 = vmatprep.subr.bf16.mxu0 0
    %705 = vmatpush1.bf16.xpose.msra.mxu0 %v688
    %706 = vmatprep.subr.bf16.mxu0 0
    %707 = vmatpush2.bf16.xpose.msra.mxu0 0
    %708 = vmatprep.subr.bf16.mxu0 0
    %709 = vmatpush2.bf16.xpose.msra.mxu0 0
    %710 = vmatprep.subr.bf16.mxu0 0
    %711 = vmatpush2.bf16.xpose.msra.mxu0 0
    %712 = vmatprep.subr.bf16.mxu0 0
    %713 = vmatpush2.bf16.xpose.msra.mxu0 0
    %714 = vmatprep.subr.bf16.mxu0 0
    %715 = vmatpush2.bf16.xpose.msra.mxu0 0
    %716 = vmatprep.subr.bf16.mxu0 0
    %717 = vmatpush2.bf16.xpose.msra.mxu0 0
    %718 = vmatprep.subr.bf16.mxu0 0
    %719 = vmatpush2.bf16.xpose.msra.mxu0 0
    %720 = vmatprep.subr.bf16.mxu0 0
    %721 = vmatpush2.bf16.xpose.msra.mxu0 0
    %722 = vmatprep.mubr.bf16.mxu0 0
    %723 = vmatmul.mubr.bf16.gmra.mxu0 %v685
    %v724 = vpop.f32.mrf.mxu0
    %v725 = vadd.f32 0.0, %v724
    %v726 = vpop.f32.mrf.mxu0
    %v727 = vpop.f32.mrf.mxu0
    %v728 = vpop.f32.mrf.mxu0
    %729 = vdwg.mxu0
    %731 = vrot.lane.b32.xlu0 %v460, 120
    %v732 = vpop.permute.xlu0 %731
    %734 = vrot.lane.b32.xlu0 %v462, 120
    %v735 = vpop.permute.xlu0 %734
    %v737 = vsel %vm465, %v732, 0
    %v740 = vsel %vm465, %v735, 0
    %742 = vmatprep.subr.bf16.mxu0 0
    %743 = vmatpush1.bf16.xpose.msra.mxu0 0
    %744 = vmatprep.subr.bf16.mxu0 0
    %745 = vmatpush1.bf16.xpose.msra.mxu0 0
    %746 = vmatprep.subr.bf16.mxu0 0
    %747 = vmatpush1.bf16.xpose.msra.mxu0 0
    %748 = vmatprep.subr.bf16.mxu0 0
    %749 = vmatpush1.bf16.xpose.msra.mxu0 0
    %750 = vmatprep.subr.bf16.mxu0 0
    %751 = vmatpush1.bf16.xpose.msra.mxu0 0
    %752 = vmatprep.subr.bf16.mxu0 0
    %753 = vmatpush1.bf16.xpose.msra.mxu0 0
    %754 = vmatprep.subr.bf16.mxu0 0
    %755 = vmatpush1.bf16.xpose.msra.mxu0 0
    %756 = vmatprep.subr.bf16.mxu0 0
    %757 = vmatpush1.bf16.xpose.msra.mxu0 %v740
    %758 = vmatprep.subr.bf16.mxu0 0
    %759 = vmatpush2.bf16.xpose.msra.mxu0 0
    %760 = vmatprep.subr.bf16.mxu0 0
    %761 = vmatpush2.bf16.xpose.msra.mxu0 0
    %762 = vmatprep.subr.bf16.mxu0 0
    %763 = vmatpush2.bf16.xpose.msra.mxu0 0
    %764 = vmatprep.subr.bf16.mxu0 0
    %765 = vmatpush2.bf16.xpose.msra.mxu0 0
    %766 = vmatprep.subr.bf16.mxu0 0
    %767 = vmatpush2.bf16.xpose.msra.mxu0 0
    %768 = vmatprep.subr.bf16.mxu0 0
    %769 = vmatpush2.bf16.xpose.msra.mxu0 0
    %770 = vmatprep.subr.bf16.mxu0 0
    %771 = vmatpush2.bf16.xpose.msra.mxu0 0
    %772 = vmatprep.subr.bf16.mxu0 0
    %773 = vmatpush2.bf16.xpose.msra.mxu0 0
    %774 = vmatprep.mubr.bf16.mxu0 0
    %775 = vmatmul.mubr.bf16.gmra.mxu0 %v737
    %v776 = vpop.f32.mrf.mxu0
    %v777 = vadd.f32 0.0, %v776
    %v778 = vpop.f32.mrf.mxu0
    %v779 = vpop.f32.mrf.mxu0
    %v780 = vpop.f32.mrf.mxu0
    %781 = vdwg.mxu0
    %v782 = vmul.f32 %v725, 0.35355338
    %v783 = vmul.f32 %v777, 0.35355338
    %v784 = vsel %vm465, %v782, -inf
    %785 = vmax.xlane.f32.xlu0 %v784
    %v786 = vpop.xlane.xlu0 %785
    %v787 = vsel %vm465, %v783, -inf
    %788 = vmax.xlane.f32.xlu0 %v787
    %v789 = vpop.xlane.xlu0 %788
    %v790 = vsub.f32 %v782, %v786
    %v791 = vsub.f32 %v783, %v789
    %v792 = vmul.f32 %v790, 1.442695
    %v793 = vpow.pop %v792
    %v794 = vmul.f32 %v791, 1.442695
    %v795 = vpow.pop %v794
    %v796 = vsel %vm465, %v793, 0.0
    %797 = vadd.xlane.f32.xlu0 %v796
    %v798 = vpop.xlane.xlu0 %797
    %v799 = vsel %vm465, %v795, 0.0
    %800 = vadd.xlane.f32.xlu0 %v799
    %v801 = vpop.xlane.xlu0 %800
    %v802 = vrcp.pop %v798
    %v803 = vrcp.pop %v801
    %v804 = vmul.f32 %v793, %v802
    %v805 = vmul.f32 %v795, %v803
    %v806 = vpack.c.bf16 %v804, %v804
    %v807 = vpack.c.bf16 %v805, %v805
    %809 = vrot.lane.b32.xlu0 %v463, 120
    %v810 = vpop.permute.xlu0 %809
    %v812 = vsel %vm465, %v806, 0
    %v815 = vsel %vm587, %v810, 0
    %817 = vmatprep.subr.bf16.mxu0 0
    %818 = vmatpush1.bf16.msra.mxu0 0
    %819 = vmatprep.subr.bf16.mxu0 0
    %820 = vmatpush1.bf16.msra.mxu0 0
    %821 = vmatprep.subr.bf16.mxu0 0
    %822 = vmatpush1.bf16.msra.mxu0 0
    %823 = vmatprep.subr.bf16.mxu0 0
    %824 = vmatpush1.bf16.msra.mxu0 0
    %825 = vmatprep.subr.bf16.mxu0 0
    %826 = vmatpush1.bf16.msra.mxu0 0
    %827 = vmatprep.subr.bf16.mxu0 0
    %828 = vmatpush1.bf16.msra.mxu0 0
    %829 = vmatprep.subr.bf16.mxu0 0
    %830 = vmatpush1.bf16.msra.mxu0 0
    %831 = vmatprep.subr.bf16.mxu0 0
    %832 = vmatpush1.bf16.msra.mxu0 %v815
    %833 = vmatprep.subr.bf16.mxu0 0
    %834 = vmatpush2.bf16.msra.mxu0 0
    %835 = vmatprep.subr.bf16.mxu0 0
    %836 = vmatpush2.bf16.msra.mxu0 0
    %837 = vmatprep.subr.bf16.mxu0 0
    %838 = vmatpush2.bf16.msra.mxu0 0
    %839 = vmatprep.subr.bf16.mxu0 0
    %840 = vmatpush2.bf16.msra.mxu0 0
    %841 = vmatprep.subr.bf16.mxu0 0
    %842 = vmatpush2.bf16.msra.mxu0 0
    %843 = vmatprep.subr.bf16.mxu0 0
    %844 = vmatpush2.bf16.msra.mxu0 0
    %845 = vmatprep.subr.bf16.mxu0 0
    %846 = vmatpush2.bf16.msra.mxu0 0
    %847 = vmatprep.subr.bf16.mxu0 0
    %848 = vmatpush2.bf16.msra.mxu0 0
    %849 = vmatprep.mubr.bf16.mxu0 0
    %850 = vmatmul.mubr.bf16.gmra.mxu0 %v812
    %v851 = vpop.f32.mrf.mxu0
    %v852 = vadd.f32 0.0, %v851
    %v853 = vpop.f32.mrf.mxu0
    %v854 = vpop.f32.mrf.mxu0
    %v855 = vpop.f32.mrf.mxu0
    %856 = vdwg.mxu0
    %858 = vrot.lane.b32.xlu0 %v464, 120
    %v859 = vpop.permute.xlu0 %858
    %v861 = vsel %vm465, %v807, 0
    %v864 = vsel %vm587, %v859, 0
    %866 = vmatprep.subr.bf16.mxu0 0
    %867 = vmatpush1.bf16.msra.mxu0 0
    %868 = vmatprep.subr.bf16.mxu0 0
    %869 = vmatpush1.bf16.msra.mxu0 0
    %870 = vmatprep.subr.bf16.mxu0 0
    %871 = vmatpush1.bf16.msra.mxu0 0
    %872 = vmatprep.subr.bf16.mxu0 0
    %873 = vmatpush1.bf16.msra.mxu0 0
    %874 = vmatprep.subr.bf16.mxu0 0
    %875 = vmatpush1.bf16.msra.mxu0 0
    %876 = vmatprep.subr.bf16.mxu0 0
    %877 = vmatpush1.bf16.msra.mxu0 0
    %878 = vmatprep.subr.bf16.mxu0 0
    %879 = vmatpush1.bf16.msra.mxu0 0
    %880 = vmatprep.subr.bf16.mxu0 0
    %881 = vmatpush1.bf16.msra.mxu0 %v864
    %882 = vmatprep.subr.bf16.mxu0 0
    %883 = vmatpush2.bf16.msra.mxu0 0
    %884 = vmatprep.subr.bf16.mxu0 0
    %885 = vmatpush2.bf16.msra.mxu0 0
    %886 = vmatprep.subr.bf16.mxu0 0
    %887 = vmatpush2.bf16.msra.mxu0 0
    %888 = vmatprep.subr.bf16.mxu0 0
    %889 = vmatpush2.bf16.msra.mxu0 0
    %890 = vmatprep.subr.bf16.mxu0 0
    %891 = vmatpush2.bf16.msra.mxu0 0
    %892 = vmatprep.subr.bf16.mxu0 0
    %893 = vmatpush2.bf16.msra.mxu0 0
    %894 = vmatprep.subr.bf16.mxu0 0
    %895 = vmatpush2.bf16.msra.mxu0 0
    %896 = vmatprep.subr.bf16.mxu0 0
    %897 = vmatpush2.bf16.msra.mxu0 0
    %898 = vmatprep.mubr.bf16.mxu0 0
    %899 = vmatmul.mubr.bf16.gmra.mxu0 %v861
    %v900 = vpop.f32.mrf.mxu0
    %v901 = vadd.f32 0.0, %v900
    %v902 = vpop.f32.mrf.mxu0
    %v903 = vpop.f32.mrf.mxu0
    %v904 = vpop.f32.mrf.mxu0
    %905 = vdwg.mxu0
    %v906 = vpack.c.bf16 %v901, %v852
    %v908 = vsel %vm465, %v906, 0
    %v911 = vsel %vm587, %v456, 0
    %913 = vmatprep.subr.bf16.mxu0 0
    %914 = vmatpush1.bf16.msra.mxu0 0
    %915 = vmatprep.subr.bf16.mxu0 0
    %916 = vmatpush1.bf16.msra.mxu0 0
    %917 = vmatprep.subr.bf16.mxu0 0
    %918 = vmatpush1.bf16.msra.mxu0 0
    %919 = vmatprep.subr.bf16.mxu0 0
    %920 = vmatpush1.bf16.msra.mxu0 0
    %921 = vmatprep.subr.bf16.mxu0 0
    %922 = vmatpush1.bf16.msra.mxu0 0
    %923 = vmatprep.subr.bf16.mxu0 0
    %924 = vmatpush1.bf16.msra.mxu0 0
    %925 = vmatprep.subr.bf16.mxu0 0
    %926 = vmatpush1.bf16.msra.mxu0 0
    %927 = vmatprep.subr.bf16.mxu0 0
    %928 = vmatpush1.bf16.msra.mxu0 %v911
    %929 = vmatprep.subr.bf16.mxu0 0
    %930 = vmatpush2.bf16.msra.mxu0 0
    %931 = vmatprep.subr.bf16.mxu0 0
    %932 = vmatpush2.bf16.msra.mxu0 0
    %933 = vmatprep.subr.bf16.mxu0 0
    %934 = vmatpush2.bf16.msra.mxu0 0
    %935 = vmatprep.subr.bf16.mxu0 0
    %936 = vmatpush2.bf16.msra.mxu0 0
    %937 = vmatprep.subr.bf16.mxu0 0
    %938 = vmatpush2.bf16.msra.mxu0 0
    %939 = vmatprep.subr.bf16.mxu0 0
    %940 = vmatpush2.bf16.msra.mxu0 0
    %941 = vmatprep.subr.bf16.mxu0 0
    %942 = vmatpush2.bf16.msra.mxu0 0
    %943 = vmatprep.subr.bf16.mxu0 0
    %944 = vmatpush2.bf16.msra.mxu0 0
    %945 = vmatprep.mubr.bf16.mxu0 0
    %946 = vmatmul.mubr.bf16.gmra.mxu0 %v908
    %v947 = vpop.f32.mrf.mxu0
    %v948 = vadd.f32 0.0, %v947
    %v949 = vpop.f32.mrf.mxu0
    %v950 = vpop.f32.mrf.mxu0
    %v951 = vadd.f32 0.0, %v950
    %v952 = vpop.f32.mrf.mxu0
    %953 = vdwg.mxu0
    %v955 = vsel %vm465, %v677, 0
    %v958 = vsel %vm587, %v455, 0
    %960 = vmatprep.subr.bf16.mxu0 0
    %961 = vmatpush1.bf16.msra.mxu0 0
    %962 = vmatprep.subr.bf16.mxu0 0
    %963 = vmatpush1.bf16.msra.mxu0 0
    %964 = vmatprep.subr.bf16.mxu0 0
    %965 = vmatpush1.bf16.msra.mxu0 0
    %966 = vmatprep.subr.bf16.mxu0 0
    %967 = vmatpush1.bf16.msra.mxu0 0
    %968 = vmatprep.subr.bf16.mxu0 0
    %969 = vmatpush1.bf16.msra.mxu0 0
    %970 = vmatprep.subr.bf16.mxu0 0
    %971 = vmatpush1.bf16.msra.mxu0 0
    %972 = vmatprep.subr.bf16.mxu0 0
    %973 = vmatpush1.bf16.msra.mxu0 0
    %974 = vmatprep.subr.bf16.mxu0 0
    %975 = vmatpush1.bf16.msra.mxu0 %v958
    %976 = vmatprep.subr.bf16.mxu0 0
    %977 = vmatpush2.bf16.msra.mxu0 0
    %978 = vmatprep.subr.bf16.mxu0 0
    %979 = vmatpush2.bf16.msra.mxu0 0
    %980 = vmatprep.subr.bf16.mxu0 0
    %981 = vmatpush2.bf16.msra.mxu0 0
    %982 = vmatprep.subr.bf16.mxu0 0
    %983 = vmatpush2.bf16.msra.mxu0 0
    %984 = vmatprep.subr.bf16.mxu0 0
    %985 = vmatpush2.bf16.msra.mxu0 0
    %986 = vmatprep.subr.bf16.mxu0 0
    %987 = vmatpush2.bf16.msra.mxu0 0
    %988 = vmatprep.subr.bf16.mxu0 0
    %989 = vmatpush2.bf16.msra.mxu0 0
    %990 = vmatprep.subr.bf16.mxu0 0
    %991 = vmatpush2.bf16.msra.mxu0 0
    %992 = vmatprep.mubr.bf16.mxu0 0
    %993 = vmatmul.mubr.bf16.gmra.mxu0 %v955
    %v994 = vpop.f32.mrf.mxu0
    %v995 = vadd.f32 %v948, %v994
    %v996 = vpop.f32.mrf.mxu0
    %v997 = vpop.f32.mrf.mxu0
    %v998 = vadd.f32 %v951, %v997
    %v999 = vpop.f32.mrf.mxu0
    %1000 = vdwg.mxu0
    %1001 = vrot.lane.b32.xlu0 %v459, 112
    %v1002 = vpop.permute.xlu0 %1001
    %1003 = vrot.lane.b32.xlu0 %v461, 112
    %v1004 = vpop.permute.xlu0 %1003
    %v1006 = vsel %vm465, %v1002, 0
    %v1009 = vsel %vm465, %v1004, 0
    %1011 = vmatprep.subr.bf16.mxu0 0
    %1012 = vmatpush1.bf16.xpose.msra.mxu0 0
    %1013 = vmatprep.subr.bf16.mxu0 0
    %1014 = vmatpush1.bf16.xpose.msra.mxu0 0
    %1015 = vmatprep.subr.bf16.mxu0 0
    %1016 = vmatpush1.bf16.xpose.msra.mxu0 0
    %1017 = vmatprep.subr.bf16.mxu0 0
    %1018 = vmatpush1.bf16.xpose.msra.mxu0 0
    %1019 = vmatprep.subr.bf16.mxu0 0
    %1020 = vmatpush1.bf16.xpose.msra.mxu0 0
    %1021 = vmatprep.subr.bf16.mxu0 0
    %1022 = vmatpush1.bf16.xpose.msra.mxu0 0
    %1023 = vmatprep.subr.bf16.mxu0 0
    %1024 = vmatpush1.bf16.xpose.msra.mxu0 0
    %1025 = vmatprep.subr.bf16.mxu0 0
    %1026 = vmatpush1.bf16.xpose.msra.mxu0 %v1009
    %1027 = vmatprep.subr.bf16.mxu0 0
    %1028 = vmatpush2.bf16.xpose.msra.mxu0 0
    %1029 = vmatprep.subr.bf16.mxu0 0
    %1030 = vmatpush2.bf16.xpose.msra.mxu0 0
    %1031 = vmatprep.subr.bf16.mxu0 0
    %1032 = vmatpush2.bf16.xpose.msra.mxu0 0
    %1033 = vmatprep.subr.bf16.mxu0 0
    %1034 = vmatpush2.bf16.xpose.msra.mxu0 0
    %1035 = vmatprep.subr.bf16.mxu0 0
    %1036 = vmatpush2.bf16.xpose.msra.mxu0 0
    %1037 = vmatprep.subr.bf16.mxu0 0
    %1038 = vmatpush2.bf16.xpose.msra.mxu0 0
    %1039 = vmatprep.subr.bf16.mxu0 0
    %1040 = vmatpush2.bf16.xpose.msra.mxu0 0
    %1041 = vmatprep.subr.bf16.mxu0 0
    %1042 = vmatpush2.bf16.xpose.msra.mxu0 0
    %1043 = vmatprep.mubr.bf16.mxu0 0
    %1044 = vmatmul.mubr.bf16.gmra.mxu0 %v1006
    %v1045 = vpop.f32.mrf.mxu0
    %v1046 = vadd.f32 0.0, %v1045
    %v1047 = vpop.f32.mrf.mxu0
    %v1048 = vpop.f32.mrf.mxu0
    %v1049 = vpop.f32.mrf.mxu0
    %1050 = vdwg.mxu0
    %1051 = vrot.lane.b32.xlu0 %v460, 112
    %v1052 = vpop.permute.xlu0 %1051
    %1053 = vrot.lane.b32.xlu0 %v462, 112
    %v1054 = vpop.permute.xlu0 %1053
    %v1056 = vsel %vm465, %v1052, 0
    %v1059 = vsel %vm465, %v1054, 0
    %1061 = vmatprep.subr.bf16.mxu0 0
    %1062 = vmatpush1.bf16.xpose.msra.mxu0 0
    %1063 = vmatprep.subr.bf16.mxu0 0
    %1064 = vmatpush1.bf16.xpose.msra.mxu0 0
    %1065 = vmatprep.subr.bf16.mxu0 0
    %1066 = vmatpush1.bf16.xpose.msra.mxu0 0
    %1067 = vmatprep.subr.bf16.mxu0 0
    %1068 = vmatpush1.bf16.xpose.msra.mxu0 0
    %1069 = vmatprep.subr.bf16.mxu0 0
    %1070 = vmatpush1.bf16.xpose.msra.mxu0 0
    %1071 = vmatprep.subr.bf16.mxu0 0
    %1072 = vmatpush1.bf16.xpose.msra.mxu0 0
    %1073 = vmatprep.subr.bf16.mxu0 0
    %1074 = vmatpush1.bf16.xpose.msra.mxu0 0
    %1075 = vmatprep.subr.bf16.mxu0 0
    %1076 = vmatpush1.bf16.xpose.msra.mxu0 %v1059
    %1077 = vmatprep.subr.bf16.mxu0 0
    %1078 = vmatpush2.bf16.xpose.msra.mxu0 0
    %1079 = vmatprep.subr.bf16.mxu0 0
    %1080 = vmatpush2.bf16.xpose.msra.mxu0 0
    %1081 = vmatprep.subr.bf16.mxu0 0
    %1082 = vmatpush2.bf16.xpose.msra.mxu0 0
    %1083 = vmatprep.subr.bf16.mxu0 0
    %1084 = vmatpush2.bf16.xpose.msra.mxu0 0
    %1085 = vmatprep.subr.bf16.mxu0 0
    %1086 = vmatpush2.bf16.xpose.msra.mxu0 0
    %1087 = vmatprep.subr.bf16.mxu0 0
    %1088 = vmatpush2.bf16.xpose.msra.mxu0 0
    %1089 = vmatprep.subr.bf16.mxu0 0
    %1090 = vmatpush2.bf16.xpose.msra.mxu0 0
    %1091 = vmatprep.subr.bf16.mxu0 0
    %1092 = vmatpush2.bf16.xpose.msra.mxu0 0
    %1093 = vmatprep.mubr.bf16.mxu0 0
    %1094 = vmatmul.mubr.bf16.gmra.mxu0 %v1056
    %v1095 = vpop.f32.mrf.mxu0
    %v1096 = vadd.f32 0.0, %v1095
    %v1097 = vpop.f32.mrf.mxu0
    %v1098 = vpop.f32.mrf.mxu0
    %v1099 = vpop.f32.mrf.mxu0
    %1100 = vdwg.mxu0
    %v1101 = vmul.f32 %v1046, 0.35355338
    %v1102 = vmul.f32 %v1096, 0.35355338
    %v1103 = vsel %vm465, %v1101, -inf
    %1104 = vmax.xlane.f32.xlu0 %v1103
    %v1105 = vpop.xlane.xlu0 %1104
    %v1106 = vsel %vm465, %v1102, -inf
    %1107 = vmax.xlane.f32.xlu0 %v1106
    %v1108 = vpop.xlane.xlu0 %1107
    %v1109 = vsub.f32 %v1101, %v1105
    %v1110 = vsub.f32 %v1102, %v1108
    %v1111 = vmul.f32 %v1109, 1.442695
    %v1112 = vpow.pop %v1111
    %v1113 = vmul.f32 %v1110, 1.442695
    %v1114 = vpow.pop %v1113
    %v1115 = vsel %vm465, %v1112, 0.0
    %1116 = vadd.xlane.f32.xlu0 %v1115
    %v1117 = vpop.xlane.xlu0 %1116
    %v1118 = vsel %vm465, %v1114, 0.0
    %1119 = vadd.xlane.f32.xlu0 %v1118
    %v1120 = vpop.xlane.xlu0 %1119
    %v1121 = vrcp.pop %v1117
    %v1122 = vrcp.pop %v1120
    %v1123 = vmul.f32 %v1112, %v1121
    %v1124 = vmul.f32 %v1114, %v1122
    %v1125 = vpack.c.bf16 %v1123, %v1123
    %v1126 = vpack.c.bf16 %v1124, %v1124
    %1127 = vrot.lane.b32.xlu0 %v463, 112
    %v1128 = vpop.permute.xlu0 %1127
    %v1130 = vsel %vm465, %v1125, 0
    %v1133 = vsel %vm587, %v1128, 0
    %1135 = vmatprep.subr.bf16.mxu0 0
    %1136 = vmatpush1.bf16.msra.mxu0 0
    %1137 = vmatprep.subr.bf16.mxu0 0
    %1138 = vmatpush1.bf16.msra.mxu0 0
    %1139 = vmatprep.subr.bf16.mxu0 0
    %1140 = vmatpush1.bf16.msra.mxu0 0
    %1141 = vmatprep.subr.bf16.mxu0 0
    %1142 = vmatpush1.bf16.msra.mxu0 0
    %1143 = vmatprep.subr.bf16.mxu0 0
    %1144 = vmatpush1.bf16.msra.mxu0 0
    %1145 = vmatprep.subr.bf16.mxu0 0
    %1146 = vmatpush1.bf16.msra.mxu0 0
    %1147 = vmatprep.subr.bf16.mxu0 0
    %1148 = vmatpush1.bf16.msra.mxu0 0
    %1149 = vmatprep.subr.bf16.mxu0 0
    %1150 = vmatpush1.bf16.msra.mxu0 %v1133
    %1151 = vmatprep.subr.bf16.mxu0 0
    %1152 = vmatpush2.bf16.msra.mxu0 0
    %1153 = vmatprep.subr.bf16.mxu0 0
    %1154 = vmatpush2.bf16.msra.mxu0 0
    %1155 = vmatprep.subr.bf16.mxu0 0
    %1156 = vmatpush2.bf16.msra.mxu0 0
    %1157 = vmatprep.subr.bf16.mxu0 0
    %1158 = vmatpush2.bf16.msra.mxu0 0
    %1159 = vmatprep.subr.bf16.mxu0 0
    %1160 = vmatpush2.bf16.msra.mxu0 0
    %1161 = vmatprep.subr.bf16.mxu0 0
    %1162 = vmatpush2.bf16.msra.mxu0 0
    %1163 = vmatprep.subr.bf16.mxu0 0
    %1164 = vmatpush2.bf16.msra.mxu0 0
    %1165 = vmatprep.subr.bf16.mxu0 0
    %1166 = vmatpush2.bf16.msra.mxu0 0
    %1167 = vmatprep.mubr.bf16.mxu0 0
    %1168 = vmatmul.mubr.bf16.gmra.mxu0 %v1130
    %v1169 = vpop.f32.mrf.mxu0
    %v1170 = vadd.f32 0.0, %v1169
    %v1171 = vpop.f32.mrf.mxu0
    %v1172 = vpop.f32.mrf.mxu0
    %v1173 = vpop.f32.mrf.mxu0
    %1174 = vdwg.mxu0
    %1175 = vrot.lane.b32.xlu0 %v464, 112
    %v1176 = vpop.permute.xlu0 %1175
    %v1178 = vsel %vm465, %v1126, 0
    %v1181 = vsel %vm587, %v1176, 0
    %1183 = vmatprep.subr.bf16.mxu0 0
    %1184 = vmatpush1.bf16.msra.mxu0 0
    %1185 = vmatprep.subr.bf16.mxu0 0
    %1186 = vmatpush1.bf16.msra.mxu0 0
    %1187 = vmatprep.subr.bf16.mxu0 0
    %1188 = vmatpush1.bf16.msra.mxu0 0
    %1189 = vmatprep.subr.bf16.mxu0 0
    %1190 = vmatpush1.bf16.msra.mxu0 0
    %1191 = vmatprep.subr.bf16.mxu0 0
    %1192 = vmatpush1.bf16.msra.mxu0 0
    %1193 = vmatprep.subr.bf16.mxu0 0
    %1194 = vmatpush1.bf16.msra.mxu0 0
    %1195 = vmatprep.subr.bf16.mxu0 0
    %1196 = vmatpush1.bf16.msra.mxu0 0
    %1197 = vmatprep.subr.bf16.mxu0 0
    %1198 = vmatpush1.bf16.msra.mxu0 %v1181
    %1199 = vmatprep.subr.bf16.mxu0 0
    %1200 = vmatpush2.bf16.msra.mxu0 0
    %1201 = vmatprep.subr.bf16.mxu0 0
    %1202 = vmatpush2.bf16.msra.mxu0 0
    %1203 = vmatprep.subr.bf16.mxu0 0
    %1204 = vmatpush2.bf16.msra.mxu0 0
    %1205 = vmatprep.subr.bf16.mxu0 0
    %1206 = vmatpush2.bf16.msra.mxu0 0
    %1207 = vmatprep.subr.bf16.mxu0 0
    %1208 = vmatpush2.bf16.msra.mxu0 0
    %1209 = vmatprep.subr.bf16.mxu0 0
    %1210 = vmatpush2.bf16.msra.mxu0 0
    %1211 = vmatprep.subr.bf16.mxu0 0
    %1212 = vmatpush2.bf16.msra.mxu0 0
    %1213 = vmatprep.subr.bf16.mxu0 0
    %1214 = vmatpush2.bf16.msra.mxu0 0
    %1215 = vmatprep.mubr.bf16.mxu0 0
    %1216 = vmatmul.mubr.bf16.gmra.mxu0 %v1178
    %v1217 = vpop.f32.mrf.mxu0
    %v1218 = vadd.f32 0.0, %v1217
    %v1219 = vpop.f32.mrf.mxu0
    %v1220 = vpop.f32.mrf.mxu0
    %v1221 = vpop.f32.mrf.mxu0
    %1222 = vdwg.mxu0
    %v1223 = vpack.c.bf16 %v1218, %v1170
    %v1225 = vsel %vm465, %v1223, 0
    %v1228 = vsel %vm587, %v457, 0
    %1230 = vmatprep.subr.bf16.mxu0 0
    %1231 = vmatpush1.bf16.msra.mxu0 0
    %1232 = vmatprep.subr.bf16.mxu0 0
    %1233 = vmatpush1.bf16.msra.mxu0 0
    %1234 = vmatprep.subr.bf16.mxu0 0
    %1235 = vmatpush1.bf16.msra.mxu0 0
    %1236 = vmatprep.subr.bf16.mxu0 0
    %1237 = vmatpush1.bf16.msra.mxu0 0
    %1238 = vmatprep.subr.bf16.mxu0 0
    %1239 = vmatpush1.bf16.msra.mxu0 0
    %1240 = vmatprep.subr.bf16.mxu0 0
    %1241 = vmatpush1.bf16.msra.mxu0 0
    %1242 = vmatprep.subr.bf16.mxu0 0
    %1243 = vmatpush1.bf16.msra.mxu0 0
    %1244 = vmatprep.subr.bf16.mxu0 0
    %1245 = vmatpush1.bf16.msra.mxu0 %v1228
    %1246 = vmatprep.subr.bf16.mxu0 0
    %1247 = vmatpush2.bf16.msra.mxu0 0
    %1248 = vmatprep.subr.bf16.mxu0 0
    %1249 = vmatpush2.bf16.msra.mxu0 0
    %1250 = vmatprep.subr.bf16.mxu0 0
    %1251 = vmatpush2.bf16.msra.mxu0 0
    %1252 = vmatprep.subr.bf16.mxu0 0
    %1253 = vmatpush2.bf16.msra.mxu0 0
    %1254 = vmatprep.subr.bf16.mxu0 0
    %1255 = vmatpush2.bf16.msra.mxu0 0
    %1256 = vmatprep.subr.bf16.mxu0 0
    %1257 = vmatpush2.bf16.msra.mxu0 0
    %1258 = vmatprep.subr.bf16.mxu0 0
    %1259 = vmatpush2.bf16.msra.mxu0 0
    %1260 = vmatprep.subr.bf16.mxu0 0
    %1261 = vmatpush2.bf16.msra.mxu0 0
    %1262 = vmatprep.mubr.bf16.mxu0 0
    %1263 = vmatmul.mubr.bf16.gmra.mxu0 %v1225
    %v1264 = vpop.f32.mrf.mxu0
    %v1265 = vadd.f32 0.0, %v1264
    %v1266 = vpop.f32.mrf.mxu0
    %v1267 = vpop.f32.mrf.mxu0
    %v1268 = vadd.f32 0.0, %v1267
    %v1269 = vpop.f32.mrf.mxu0
    %1270 = vdwg.mxu0
    %v1271 = vadd.f32 %v995, %v1265
    %v1272 = vadd.f32 %v998, %v1268
    %1273 = vrot.lane.b32.xlu0 %v459, 104
    %v1274 = vpop.permute.xlu0 %1273
    %1275 = vrot.lane.b32.xlu0 %v461, 104
    %v1276 = vpop.permute.xlu0 %1275
    %v1278 = vsel %vm465, %v1274, 0
    %v1281 = vsel %vm465, %v1276, 0
    %1283 = vmatprep.subr.bf16.mxu0 0
    %1284 = vmatpush1.bf16.xpose.msra.mxu0 0
    %1285 = vmatprep.subr.bf16.mxu0 0
    %1286 = vmatpush1.bf16.xpose.msra.mxu0 0
    %1287 = vmatprep.subr.bf16.mxu0 0
    %1288 = vmatpush1.bf16.xpose.msra.mxu0 0
    %1289 = vmatprep.subr.bf16.mxu0 0
    %1290 = vmatpush1.bf16.xpose.msra.mxu0 0
    %1291 = vmatprep.subr.bf16.mxu0 0
    %1292 = vmatpush1.bf16.xpose.msra.mxu0 0
    %1293 = vmatprep.subr.bf16.mxu0 0
    %1294 = vmatpush1.bf16.xpose.msra.mxu0 0
    %1295 = vmatprep.subr.bf16.mxu0 0
    %1296 = vmatpush1.bf16.xpose.msra.mxu0 0
    %1297 = vmatprep.subr.bf16.mxu0 0
    %1298 = vmatpush1.bf16.xpose.msra.mxu0 %v1281
    %1299 = vmatprep.subr.bf16.mxu0 0
    %1300 = vmatpush2.bf16.xpose.msra.mxu0 0
    %1301 = vmatprep.subr.bf16.mxu0 0
    %1302 = vmatpush2.bf16.xpose.msra.mxu0 0
    %1303 = vmatprep.subr.bf16.mxu0 0
    %1304 = vmatpush2.bf16.xpose.msra.mxu0 0
    %1305 = vmatprep.subr.bf16.mxu0 0
    %1306 = vmatpush2.bf16.xpose.msra.mxu0 0
    %1307 = vmatprep.subr.bf16.mxu0 0
    %1308 = vmatpush2.bf16.xpose.msra.mxu0 0
    %1309 = vmatprep.subr.bf16.mxu0 0
    %1310 = vmatpush2.bf16.xpose.msra.mxu0 0
    %1311 = vmatprep.subr.bf16.mxu0 0
    %1312 = vmatpush2.bf16.xpose.msra.mxu0 0
    %1313 = vmatprep.subr.bf16.mxu0 0
    %1314 = vmatpush2.bf16.xpose.msra.mxu0 0
    %1315 = vmatprep.mubr.bf16.mxu0 0
    %1316 = vmatmul.mubr.bf16.gmra.mxu0 %v1278
    %v1317 = vpop.f32.mrf.mxu0
    %v1318 = vadd.f32 0.0, %v1317
    %v1319 = vpop.f32.mrf.mxu0
    %v1320 = vpop.f32.mrf.mxu0
    %v1321 = vpop.f32.mrf.mxu0
    %1322 = vdwg.mxu0
    %1323 = vrot.lane.b32.xlu0 %v460, 104
    %v1324 = vpop.permute.xlu0 %1323
    %1325 = vrot.lane.b32.xlu0 %v462, 104
    %v1326 = vpop.permute.xlu0 %1325
    %v1328 = vsel %vm465, %v1324, 0
    %v1331 = vsel %vm465, %v1326, 0
    %1333 = vmatprep.subr.bf16.mxu0 0
    %1334 = vmatpush1.bf16.xpose.msra.mxu0 0
    %1335 = vmatprep.subr.bf16.mxu0 0
    %1336 = vmatpush1.bf16.xpose.msra.mxu0 0
    %1337 = vmatprep.subr.bf16.mxu0 0
    %1338 = vmatpush1.bf16.xpose.msra.mxu0 0
    %1339 = vmatprep.subr.bf16.mxu0 0
    %1340 = vmatpush1.bf16.xpose.msra.mxu0 0
    %1341 = vmatprep.subr.bf16.mxu0 0
    %1342 = vmatpush1.bf16.xpose.msra.mxu0 0
    %1343 = vmatprep.subr.bf16.mxu0 0
    %1344 = vmatpush1.bf16.xpose.msra.mxu0 0
    %1345 = vmatprep.subr.bf16.mxu0 0
    %1346 = vmatpush1.bf16.xpose.msra.mxu0 0
    %1347 = vmatprep.subr.bf16.mxu0 0
    %1348 = vmatpush1.bf16.xpose.msra.mxu0 %v1331
    %1349 = vmatprep.subr.bf16.mxu0 0
    %1350 = vmatpush2.bf16.xpose.msra.mxu0 0
    %1351 = vmatprep.subr.bf16.mxu0 0
    %1352 = vmatpush2.bf16.xpose.msra.mxu0 0
    %1353 = vmatprep.subr.bf16.mxu0 0
    %1354 = vmatpush2.bf16.xpose.msra.mxu0 0
    %1355 = vmatprep.subr.bf16.mxu0 0
    %1356 = vmatpush2.bf16.xpose.msra.mxu0 0
    %1357 = vmatprep.subr.bf16.mxu0 0
    %1358 = vmatpush2.bf16.xpose.msra.mxu0 0
    %1359 = vmatprep.subr.bf16.mxu0 0
    %1360 = vmatpush2.bf16.xpose.msra.mxu0 0
    %1361 = vmatprep.subr.bf16.mxu0 0
    %1362 = vmatpush2.bf16.xpose.msra.mxu0 0
    %1363 = vmatprep.subr.bf16.mxu0 0
    %1364 = vmatpush2.bf16.xpose.msra.mxu0 0
    %1365 = vmatprep.mubr.bf16.mxu0 0
    %1366 = vmatmul.mubr.bf16.gmra.mxu0 %v1328
    %v1367 = vpop.f32.mrf.mxu0
    %v1368 = vadd.f32 0.0, %v1367
    %v1369 = vpop.f32.mrf.mxu0
    %v1370 = vpop.f32.mrf.mxu0
    %v1371 = vpop.f32.mrf.mxu0
    %1372 = vdwg.mxu0
    %v1373 = vmul.f32 %v1318, 0.35355338
    %v1374 = vmul.f32 %v1368, 0.35355338
    %v1375 = vsel %vm465, %v1373, -inf
    %1376 = vmax.xlane.f32.xlu0 %v1375
    %v1377 = vpop.xlane.xlu0 %1376
    %v1378 = vsel %vm465, %v1374, -inf
    %1379 = vmax.xlane.f32.xlu0 %v1378
    %v1380 = vpop.xlane.xlu0 %1379
    %v1381 = vsub.f32 %v1373, %v1377
    %v1382 = vsub.f32 %v1374, %v1380
    %v1383 = vmul.f32 %v1381, 1.442695
    %v1384 = vpow.pop %v1383
    %v1385 = vmul.f32 %v1382, 1.442695
    %v1386 = vpow.pop %v1385
    %v1387 = vsel %vm465, %v1384, 0.0
    %1388 = vadd.xlane.f32.xlu0 %v1387
    %v1389 = vpop.xlane.xlu0 %1388
    %v1390 = vsel %vm465, %v1386, 0.0
    %1391 = vadd.xlane.f32.xlu0 %v1390
    %v1392 = vpop.xlane.xlu0 %1391
    %v1393 = vrcp.pop %v1389
    %v1394 = vrcp.pop %v1392
    %v1395 = vmul.f32 %v1384, %v1393
    %v1396 = vmul.f32 %v1386, %v1394
    %v1397 = vpack.c.bf16 %v1395, %v1395
    %v1398 = vpack.c.bf16 %v1396, %v1396
    %1399 = vrot.lane.b32.xlu0 %v463, 104
    %v1400 = vpop.permute.xlu0 %1399
    %v1402 = vsel %vm465, %v1397, 0
    %v1405 = vsel %vm587, %v1400, 0
    %1407 = vmatprep.subr.bf16.mxu0 0
    %1408 = vmatpush1.bf16.msra.mxu0 0
    %1409 = vmatprep.subr.bf16.mxu0 0
    %1410 = vmatpush1.bf16.msra.mxu0 0
    %1411 = vmatprep.subr.bf16.mxu0 0
    %1412 = vmatpush1.bf16.msra.mxu0 0
    %1413 = vmatprep.subr.bf16.mxu0 0
    %1414 = vmatpush1.bf16.msra.mxu0 0
    %1415 = vmatprep.subr.bf16.mxu0 0
    %1416 = vmatpush1.bf16.msra.mxu0 0
    %1417 = vmatprep.subr.bf16.mxu0 0
    %1418 = vmatpush1.bf16.msra.mxu0 0
    %1419 = vmatprep.subr.bf16.mxu0 0
    %1420 = vmatpush1.bf16.msra.mxu0 0
    %1421 = vmatprep.subr.bf16.mxu0 0
    %1422 = vmatpush1.bf16.msra.mxu0 %v1405
    %1423 = vmatprep.subr.bf16.mxu0 0
    %1424 = vmatpush2.bf16.msra.mxu0 0
    %1425 = vmatprep.subr.bf16.mxu0 0
    %1426 = vmatpush2.bf16.msra.mxu0 0
    %1427 = vmatprep.subr.bf16.mxu0 0
    %1428 = vmatpush2.bf16.msra.mxu0 0
    %1429 = vmatprep.subr.bf16.mxu0 0
    %1430 = vmatpush2.bf16.msra.mxu0 0
    %1431 = vmatprep.subr.bf16.mxu0 0
    %1432 = vmatpush2.bf16.msra.mxu0 0
    %1433 = vmatprep.subr.bf16.mxu0 0
    %1434 = vmatpush2.bf16.msra.mxu0 0
    %1435 = vmatprep.subr.bf16.mxu0 0
    %1436 = vmatpush2.bf16.msra.mxu0 0
    %1437 = vmatprep.subr.bf16.mxu0 0
    %1438 = vmatpush2.bf16.msra.mxu0 0
    %1439 = vmatprep.mubr.bf16.mxu0 0
    %1440 = vmatmul.mubr.bf16.gmra.mxu0 %v1402
    %v1441 = vpop.f32.mrf.mxu0
    %v1442 = vadd.f32 0.0, %v1441
    %v1443 = vpop.f32.mrf.mxu0
    %v1444 = vpop.f32.mrf.mxu0
    %v1445 = vpop.f32.mrf.mxu0
    %1446 = vdwg.mxu0
    %1447 = vrot.lane.b32.xlu0 %v464, 104
    %v1448 = vpop.permute.xlu0 %1447
    %v1450 = vsel %vm465, %v1398, 0
    %v1453 = vsel %vm587, %v1448, 0
    %1455 = vmatprep.subr.bf16.mxu0 0
    %1456 = vmatpush1.bf16.msra.mxu0 0
    %1457 = vmatprep.subr.bf16.mxu0 0
    %1458 = vmatpush1.bf16.msra.mxu0 0
    %1459 = vmatprep.subr.bf16.mxu0 0
    %1460 = vmatpush1.bf16.msra.mxu0 0
    %1461 = vmatprep.subr.bf16.mxu0 0
    %1462 = vmatpush1.bf16.msra.mxu0 0
    %1463 = vmatprep.subr.bf16.mxu0 0
    %1464 = vmatpush1.bf16.msra.mxu0 0
    %1465 = vmatprep.subr.bf16.mxu0 0
    %1466 = vmatpush1.bf16.msra.mxu0 0
    %1467 = vmatprep.subr.bf16.mxu0 0
    %1468 = vmatpush1.bf16.msra.mxu0 0
    %1469 = vmatprep.subr.bf16.mxu0 0
    %1470 = vmatpush1.bf16.msra.mxu0 %v1453
    %1471 = vmatprep.subr.bf16.mxu0 0
    %1472 = vmatpush2.bf16.msra.mxu0 0
    %1473 = vmatprep.subr.bf16.mxu0 0
    %1474 = vmatpush2.bf16.msra.mxu0 0
    %1475 = vmatprep.subr.bf16.mxu0 0
    %1476 = vmatpush2.bf16.msra.mxu0 0
    %1477 = vmatprep.subr.bf16.mxu0 0
    %1478 = vmatpush2.bf16.msra.mxu0 0
    %1479 = vmatprep.subr.bf16.mxu0 0
    %1480 = vmatpush2.bf16.msra.mxu0 0
    %1481 = vmatprep.subr.bf16.mxu0 0
    %1482 = vmatpush2.bf16.msra.mxu0 0
    %1483 = vmatprep.subr.bf16.mxu0 0
    %1484 = vmatpush2.bf16.msra.mxu0 0
    %1485 = vmatprep.subr.bf16.mxu0 0
    %1486 = vmatpush2.bf16.msra.mxu0 0
    %1487 = vmatprep.mubr.bf16.mxu0 0
    %1488 = vmatmul.mubr.bf16.gmra.mxu0 %v1450
    %v1489 = vpop.f32.mrf.mxu0
    %v1490 = vadd.f32 0.0, %v1489
    %v1491 = vpop.f32.mrf.mxu0
    %v1492 = vpop.f32.mrf.mxu0
    %v1493 = vpop.f32.mrf.mxu0
    %1494 = vdwg.mxu0
    %v1495 = vpack.c.bf16 %v1490, %v1442
    %v1497 = vsel %vm465, %v1495, 0
    %v1500 = vsel %vm587, %v458, 0
    %1502 = vmatprep.subr.bf16.mxu0 0
    %1503 = vmatpush1.bf16.msra.mxu0 0
    %1504 = vmatprep.subr.bf16.mxu0 0
    %1505 = vmatpush1.bf16.msra.mxu0 0
    %1506 = vmatprep.subr.bf16.mxu0 0
    %1507 = vmatpush1.bf16.msra.mxu0 0
    %1508 = vmatprep.subr.bf16.mxu0 0
    %1509 = vmatpush1.bf16.msra.mxu0 0
    %1510 = vmatprep.subr.bf16.mxu0 0
    %1511 = vmatpush1.bf16.msra.mxu0 0
    %1512 = vmatprep.subr.bf16.mxu0 0
    %1513 = vmatpush1.bf16.msra.mxu0 0
    %1514 = vmatprep.subr.bf16.mxu0 0
    %1515 = vmatpush1.bf16.msra.mxu0 0
    %1516 = vmatprep.subr.bf16.mxu0 0
    %1517 = vmatpush1.bf16.msra.mxu0 %v1500
    %1518 = vmatprep.subr.bf16.mxu0 0
    %1519 = vmatpush2.bf16.msra.mxu0 0
    %1520 = vmatprep.subr.bf16.mxu0 0
    %1521 = vmatpush2.bf16.msra.mxu0 0
    %1522 = vmatprep.subr.bf16.mxu0 0
    %1523 = vmatpush2.bf16.msra.mxu0 0
    %1524 = vmatprep.subr.bf16.mxu0 0
    %1525 = vmatpush2.bf16.msra.mxu0 0
    %1526 = vmatprep.subr.bf16.mxu0 0
    %1527 = vmatpush2.bf16.msra.mxu0 0
    %1528 = vmatprep.subr.bf16.mxu0 0
    %1529 = vmatpush2.bf16.msra.mxu0 0
    %1530 = vmatprep.subr.bf16.mxu0 0
    %1531 = vmatpush2.bf16.msra.mxu0 0
    %1532 = vmatprep.subr.bf16.mxu0 0
    %1533 = vmatpush2.bf16.msra.mxu0 0
    %1534 = vmatprep.mubr.bf16.mxu0 0
    %1535 = vmatmul.mubr.bf16.gmra.mxu0 %v1497
    %v1536 = vpop.f32.mrf.mxu0
    %v1537 = vadd.f32 0.0, %v1536
    %v1538 = vpop.f32.mrf.mxu0
    %v1539 = vpop.f32.mrf.mxu0
    %v1540 = vadd.f32 0.0, %v1539
    %v1541 = vpop.f32.mrf.mxu0
    %1542 = vdwg.mxu0
    %v1543 = vadd.f32 %v1271, %v1537
    %v1544 = vadd.f32 %v1272, %v1540
    %v1545 = vadd.f32 %v211, %v1543
    %v1546 = vadd.f32 %v212, %v1544
    %v1547 = vld [vmem:[%s12] sm:$0x1]
    %v1549 = vlaneseq
    %v1550 = vshrl.u32 %v1549, 7
    %v1551 = vsub.s32 0, %v1550
    %v1552 = vrot.slane %v1547, %v1551
    %v1554 = vadd.f32 %v1545, %v1552
    %v1555 = vadd.f32 %v1546, %v1552
    %v1556 = vld [vmem:[%s13] sm:$0x1]
    %v1557 = vld [vmem:[%s14] sm:$0x1]
    %v1558 = vsel %vm215, %v1554, 0.0
    %1559 = vadd.xlane.f32.xlu0 %v1558
    %v1560 = vpop.xlane.xlu0 %1559
    %v1561 = vsel %vm215, %v1555, 0.0
    %1562 = vadd.xlane.f32.xlu0 %v1561
    %v1563 = vpop.xlane.xlu0 %1562
    %v1564 = vmul.f32 %v1560, %v222
    %v1565 = vmul.f32 %v1563, %v222
    %v1566 = vsub.f32 %v1554, %v1564
    %v1567 = vsub.f32 %v1555, %v1565
    %v1568 = vmul.f32 %v1566, %v1566
    %v1569 = vmul.f32 %v1567, %v1567
    %v1570 = vsel %vm215, %v1568, 0.0
    %1571 = vadd.xlane.f32.xlu0 %v1570
    %v1572 = vpop.xlane.xlu0 %1571
    %v1573 = vsel %vm215, %v1569, 0.0
    %1574 = vadd.xlane.f32.xlu0 %v1573
    %v1575 = vpop.xlane.xlu0 %1574
    %v1576 = vmul.f32 %v1572, %v222
    %v1577 = vmul.f32 %v1575, %v222
    %v1578 = vadd.f32 %v1576, 1e-05
    %v1579 = vadd.f32 %v1577, 1e-05
    %v1580 = vrsqrt.pop %v1578
    %v1581 = vrsqrt.pop %v1579
    %v1582 = vmul.f32 %v1566, %v1580
    %v1583 = vmul.f32 %v1567, %v1581
    %v1585 = vlaneseq
    %v1586 = vshrl.u32 %v1585, 7
    %v1587 = vsub.s32 0, %v1586
    %v1588 = vrot.slane %v1556, %v1587
    %v1590 = vmul.f32 %v1582, %v1588
    %v1591 = vmul.f32 %v1583, %v1588
    %v1593 = vlaneseq
    %v1594 = vshrl.u32 %v1593, 7
    %v1595 = vsub.s32 0, %v1594
    %v1596 = vrot.slane %v1557, %v1595
    %v1598 = vadd.f32 %v1590, %v1596
    %v1599 = vadd.f32 %v1591, %v1596
    %v1600 = vpack.c.bf16 %v1599, %v1598
    %v1601 = vld [vmem:[%s15] sm:$0xf]
    %v1602 = vld [vmem:[%s15 + $0x4] sm:$0xf]
    %v1603 = vld [vmem:[%s15 + $0x8] sm:$0xf]
    %v1604 = vld [vmem:[%s15 + $0xc] sm:$0xf]
    %v1605 = vld [vmem:[%s16] sm:$0x1]
    %v1607 = vlaneseq
    %v1608 = vshrl.u32 %v1607, 7
    %v1609 = vsub.s32 0, %v1608
    %v1610 = vrot.slane %v1605, %v1609
    %v1616 = vunpack.c.l.b16 %v1601
    %v1617 = vunpack.c.l.b16 %v1602
    %v1618 = vunpack.c.l.b16 %v1603
    %v1619 = vunpack.c.l.b16 %v1604
    %v1620 = vpack.c.b16 %v1617, %v1616
    %v1621 = vpack.c.b16 %v1619, %v1618
    %v1625 = vsel %vm215, %v1600, 0
    %1627 = vmatprep.subr.bf16.mxu0 0
    %1628 = vmatpush1.bf16.msra.mxu0 0
    %1629 = vmatprep.subr.bf16.mxu0 0
    %1630 = vmatpush1.bf16.msra.mxu0 0
    %1631 = vmatprep.subr.bf16.mxu0 0
    %1632 = vmatpush1.bf16.msra.mxu0 0
    %1633 = vmatprep.subr.bf16.mxu0 0
    %1634 = vmatpush1.bf16.msra.mxu0 0
    %1635 = vmatprep.subr.bf16.mxu0 0
    %1636 = vmatpush1.bf16.msra.mxu0 0
    %1637 = vmatprep.subr.bf16.mxu0 0
    %1638 = vmatpush1.bf16.msra.mxu0 0
    %1639 = vmatprep.subr.bf16.mxu0 0
    %1640 = vmatpush1.bf16.msra.mxu0 %v1621
    %1641 = vmatprep.subr.bf16.mxu0 0
    %1642 = vmatpush1.bf16.msra.mxu0 %v1620
    %1643 = vmatprep.subr.bf16.mxu0 0
    %1644 = vmatpush2.bf16.msra.mxu0 0
    %1645 = vmatprep.subr.bf16.mxu0 0
    %1646 = vmatpush2.bf16.msra.mxu0 0
    %1647 = vmatprep.subr.bf16.mxu0 0
    %1648 = vmatpush2.bf16.msra.mxu0 0
    %1649 = vmatprep.subr.bf16.mxu0 0
    %1650 = vmatpush2.bf16.msra.mxu0 0
    %1651 = vmatprep.subr.bf16.mxu0 0
    %1652 = vmatpush2.bf16.msra.mxu0 0
    %1653 = vmatprep.subr.bf16.mxu0 0
    %1654 = vmatpush2.bf16.msra.mxu0 0
    %1655 = vmatprep.subr.bf16.mxu0 0
    %1656 = vmatpush2.bf16.msra.mxu0 0
    %1657 = vmatprep.subr.bf16.mxu0 0
    %1658 = vmatpush2.bf16.msra.mxu0 0
    %1659 = vmatprep.mubr.bf16.mxu0 0
    %1660 = vmatmul.mubr.bf16.gmra.mxu0 %v1625
    %v1661 = vpop.f32.mrf.mxu0
    %v1662 = vadd.f32 %v1610, %v1661
    %v1663 = vpop.f32.mrf.mxu0
    %v1664 = vpop.f32.mrf.mxu0
    %v1665 = vadd.f32 %v1610, %v1664
    %v1666 = vpop.f32.mrf.mxu0
    %1667 = vdwg.mxu0
    %v1668 = vmul.f32 %v1662, %v1662
    %v1669 = vmul.f32 %v1665, %v1665
    %v1670 = vmul.f32 %v1662, %v1668
    %v1671 = vmul.f32 %v1665, %v1669
    %v1672 = vmul.f32 %v1670, 0.044715
    %v1673 = vmul.f32 %v1671, 0.044715
    %v1674 = vadd.f32 %v1662, %v1672
    %v1675 = vadd.f32 %v1665, %v1673
    %v1676 = vmul.f32 %v1674, 0.7978846
    %v1677 = vmul.f32 %v1675, 0.7978846
    %v1678 = vtanh.pop %v1676
    %v1679 = vtanh.pop %v1677
    %v1680 = vadd.f32 %v1678, 1.0
    %v1681 = vadd.f32 %v1679, 1.0
    %v1682 = vmul.f32 %v1680, 0.5
    %v1683 = vmul.f32 %v1681, 0.5
    %v1684 = vmul.f32 %v1662, %v1682
    %v1685 = vmul.f32 %v1665, %v1683
    %v1686 = vpack.c.bf16 %v1685, %v1684
    %v1687 = vld [vmem:[%s17] sm:$0xf]
    %v1688 = vld [vmem:[%s17 + $0x4] sm:$0xf]
    %v1689 = vld [vmem:[%s17 + $0x8] sm:$0xf]
    %v1690 = vld [vmem:[%s17 + $0xc] sm:$0xf]
    %v1691 = vld [vmem:[%s17 + $0x10] sm:$0xf]
    %v1692 = vld [vmem:[%s17 + $0x14] sm:$0xf]
    %v1693 = vld [vmem:[%s17 + $0x18] sm:$0xf]
    %v1694 = vld [vmem:[%s17 + $0x1c] sm:$0xf]
    %v1695 = vld [vmem:[%s18] sm:$0x1]
    %v1697 = vlaneseq
    %v1698 = vshrl.u32 %v1697, 7
    %v1699 = vsub.s32 0, %v1698
    %v1700 = vrot.slane %v1695, %v1699
    %v1710 = vunpack.c.l.b16 %v1687
    %v1711 = vunpack.c.l.b16 %v1688
    %v1712 = vunpack.c.l.b16 %v1689
    %v1713 = vunpack.c.l.b16 %v1690
    %v1714 = vunpack.c.l.b16 %v1691
    %v1715 = vunpack.c.l.b16 %v1692
    %v1716 = vunpack.c.l.b16 %v1693
    %v1717 = vunpack.c.l.b16 %v1694
    %v1718 = vpack.c.b16 %v1711, %v1710
    %v1719 = vpack.c.b16 %v1713, %v1712
    %v1720 = vpack.c.b16 %v1715, %v1714
    %v1721 = vpack.c.b16 %v1717, %v1716
    %vm1726 = vcmask 523264
    %v1728 = vsel %vm1726, %v1686, 0
    %1730 = vmatprep.subr.bf16.mxu0 0
    %1731 = vmatpush1.bf16.msra.mxu0 0
    %1732 = vmatprep.subr.bf16.mxu0 0
    %1733 = vmatpush1.bf16.msra.mxu0 0
    %1734 = vmatprep.subr.bf16.mxu0 0
    %1735 = vmatpush1.bf16.msra.mxu0 0
    %1736 = vmatprep.subr.bf16.mxu0 0
    %1737 = vmatpush1.bf16.msra.mxu0 0
    %1738 = vmatprep.subr.bf16.mxu0 0
    %1739 = vmatpush1.bf16.msra.mxu0 %v1721
    %1740 = vmatprep.subr.bf16.mxu0 0
    %1741 = vmatpush1.bf16.msra.mxu0 %v1720
    %1742 = vmatprep.subr.bf16.mxu0 0
    %1743 = vmatpush1.bf16.msra.mxu0 %v1719
    %1744 = vmatprep.subr.bf16.mxu0 0
    %1745 = vmatpush1.bf16.msra.mxu0 %v1718
    %1746 = vmatprep.subr.bf16.mxu0 0
    %1747 = vmatpush2.bf16.msra.mxu0 0
    %1748 = vmatprep.subr.bf16.mxu0 0
    %1749 = vmatpush2.bf16.msra.mxu0 0
    %1750 = vmatprep.subr.bf16.mxu0 0
    %1751 = vmatpush2.bf16.msra.mxu0 0
    %1752 = vmatprep.subr.bf16.mxu0 0
    %1753 = vmatpush2.bf16.msra.mxu0 0
    %1754 = vmatprep.subr.bf16.mxu0 0
    %1755 = vmatpush2.bf16.msra.mxu0 0
    %1756 = vmatprep.subr.bf16.mxu0 0
    %1757 = vmatpush2.bf16.msra.mxu0 0
    %1758 = vmatprep.subr.bf16.mxu0 0
    %1759 = vmatpush2.bf16.msra.mxu0 0
    %1760 = vmatprep.subr.bf16.mxu0 0
    %1761 = vmatpush2.bf16.msra.mxu0 0
    %1762 = vmatprep.mubr.bf16.mxu0 0
    %1763 = vmatmul.mubr.bf16.gmra.mxu0 %v1728
    %v1764 = vpop.f32.mrf.mxu0
    %v1765 = vadd.f32 %v1700, %v1764
    %v1766 = vpop.f32.mrf.mxu0
    %v1767 = vpop.f32.mrf.mxu0
    %v1768 = vadd.f32 %v1700, %v1767
    %v1769 = vpop.f32.mrf.mxu0
    %1770 = vdwg.mxu0
    %v1771 = vadd.f32 %v1554, %v1765
    %v1772 = vadd.f32 %v1555, %v1768
    %s1773 = scalar_lea.vmem [#allocation8], 1
    %v1774 = vld [vmem:[%s1773] sm:$0x1]
    %s1775 = scalar_lea.vmem [#allocation10], 1
    %v1776 = vld [vmem:[%s1775] sm:$0x1]
    %v1777 = vsel %vm215, %v1771, 0.0
    %1778 = vadd.xlane.f32.xlu0 %v1777
    %v1779 = vpop.xlane.xlu0 %1778
    %v1780 = vsel %vm215, %v1772, 0.0
    %1781 = vadd.xlane.f32.xlu0 %v1780
    %v1782 = vpop.xlane.xlu0 %1781
    %v1783 = vmul.f32 %v1779, %v222
    %v1784 = vmul.f32 %v1782, %v222
    %v1785 = vsub.f32 %v1771, %v1783
    %v1786 = vsub.f32 %v1772, %v1784
    %v1787 = vmul.f32 %v1785, %v1785
    %v1788 = vmul.f32 %v1786, %v1786
    %v1789 = vsel %vm215, %v1787, 0.0
    %1790 = vadd.xlane.f32.xlu0 %v1789
    %v1791 = vpop.xlane.xlu0 %1790
    %v1792 = vsel %vm215, %v1788, 0.0
    %1793 = vadd.xlane.f32.xlu0 %v1792
    %v1794 = vpop.xlane.xlu0 %1793
    %v1795 = vmul.f32 %v1791, %v222
    %v1796 = vmul.f32 %v1794, %v222
    %v1797 = vadd.f32 %v1795, 1e-05
    %v1798 = vadd.f32 %v1796, 1e-05
    %v1799 = vrsqrt.pop %v1797
    %v1800 = vrsqrt.pop %v1798
    %v1801 = vmul.f32 %v1785, %v1799
    %v1802 = vmul.f32 %v1786, %v1800
    %v1804 = vlaneseq
    %v1805 = vshrl.u32 %v1804, 7
    %v1806 = vsub.s32 0, %v1805
    %v1807 = vrot.slane %v1774, %v1806
    %v1809 = vmul.f32 %v1801, %v1807
    %v1810 = vmul.f32 %v1802, %v1807
    %v1812 = vlaneseq
    %v1813 = vshrl.u32 %v1812, 7
    %v1814 = vsub.s32 0, %v1813
    %v1815 = vrot.slane %v1776, %v1814
    %v1817 = vadd.f32 %v1809, %v1815
    %v1818 = vadd.f32 %v1810, %v1815
    %v1819 = vpack.c.bf16 %v1818, %v1817
    %s1820 = scalar_lea.vmem %s5, 16
    %v1821 = vld [vmem:[%s1820] sm:$0xf]
    %v1822 = vld [vmem:[%s1820 + $0x4] sm:$0xf]
    %v1823 = vld [vmem:[%s1820 + $0x8] sm:$0xf]
    %v1824 = vld [vmem:[%s1820 + $0xc] sm:$0xf]
    %s1825 = scalar_lea.vmem %s6, 1
    %v1826 = vld [vmem:[%s1825] sm:$0x1]
    %v1828 = vlaneseq
    %v1829 = vshrl.u32 %v1828, 7
    %v1830 = vsub.s32 0, %v1829
    %v1831 = vrot.slane %v1826, %v1830
    %v1837 = vunpack.c.l.b16 %v1821
    %v1838 = vunpack.c.l.b16 %v1822
    %v1839 = vunpack.c.l.b16 %v1823
    %v1840 = vunpack.c.l.b16 %v1824
    %v1841 = vpack.c.b16 %v1838, %v1837
    %v1842 = vpack.c.b16 %v1840, %v1839
    %v1846 = vsel %vm215, %v1819, 0
    %1848 = vmatprep.subr.bf16.mxu0 0
    %1849 = vmatpush1.bf16.msra.mxu0 0
    %1850 = vmatprep.subr.bf16.mxu0 0
    %1851 = vmatpush1.bf16.msra.mxu0 0
    %1852 = vmatprep.subr.bf16.mxu0 0
    %1853 = vmatpush1.bf16.msra.mxu0 0
    %1854 = vmatprep.subr.bf16.mxu0 0
    %1855 = vmatpush1.bf16.msra.mxu0 0
    %1856 = vmatprep.subr.bf16.mxu0 0
    %1857 = vmatpush1.bf16.msra.mxu0 0
    %1858 = vmatprep.subr.bf16.mxu0 0
    %1859 = vmatpush1.bf16.msra.mxu0 0
    %1860 = vmatprep.subr.bf16.mxu0 0
    %1861 = vmatpush1.bf16.msra.mxu0 %v1842
    %1862 = vmatprep.subr.bf16.mxu0 0
    %1863 = vmatpush1.bf16.msra.mxu0 %v1841
    %1864 = vmatprep.subr.bf16.mxu0 0
    %1865 = vmatpush2.bf16.msra.mxu0 0
    %1866 = vmatprep.subr.bf16.mxu0 0
    %1867 = vmatpush2.bf16.msra.mxu0 0
    %1868 = vmatprep.subr.bf16.mxu0 0
    %1869 = vmatpush2.bf16.msra.mxu0 0
    %1870 = vmatprep.subr.bf16.mxu0 0
    %1871 = vmatpush2.bf16.msra.mxu0 0
    %1872 = vmatprep.subr.bf16.mxu0 0
    %1873 = vmatpush2.bf16.msra.mxu0 0
    %1874 = vmatprep.subr.bf16.mxu0 0
    %1875 = vmatpush2.bf16.msra.mxu0 0
    %1876 = vmatprep.subr.bf16.mxu0 0
    %1877 = vmatpush2.bf16.msra.mxu0 0
    %1878 = vmatprep.subr.bf16.mxu0 0
    %1879 = vmatpush2.bf16.msra.mxu0 0
    %1880 = vmatprep.mubr.bf16.mxu0 0
    %1881 = vmatmul.mubr.bf16.gmra.mxu0 %v1846
    %v1882 = vpop.f32.mrf.mxu0
    %v1883 = vadd.f32 %v1831, %v1882
    %v1884 = vpop.f32.mrf.mxu0
    %v1885 = vpop.f32.mrf.mxu0
    %v1886 = vadd.f32 %v1831, %v1885
    %v1887 = vpop.f32.mrf.mxu0
    %1888 = vdwg.mxu0
    %s1889 = scalar_lea.vmem %s7, 16
    %v1890 = vld [vmem:[%s1889] sm:$0xf]
    %v1891 = vld [vmem:[%s1889 + $0x4] sm:$0xf]
    %v1892 = vld [vmem:[%s1889 + $0x8] sm:$0xf]
    %v1893 = vld [vmem:[%s1889 + $0xc] sm:$0xf]
    %s1894 = scalar_lea.vmem %s8, 1
    %v1895 = vld [vmem:[%s1894] sm:$0x1]
    %v1897 = vlaneseq
    %v1898 = vshrl.u32 %v1897, 7
    %v1899 = vsub.s32 0, %v1898
    %v1900 = vrot.slane %v1895, %v1899
    %v1906 = vunpack.c.l.b16 %v1890
    %v1907 = vunpack.c.l.b16 %v1891
    %v1908 = vunpack.c.l.b16 %v1892
    %v1909 = vunpack.c.l.b16 %v1893
    %v1910 = vpack.c.b16 %v1907, %v1906
    %v1911 = vpack.c.b16 %v1909, %v1908
    %1914 = vmatprep.subr.bf16.mxu0 0
    %1915 = vmatpush1.bf16.msra.mxu0 0
    %1916 = vmatprep.subr.bf16.mxu0 0
    %1917 = vmatpush1.bf16.msra.mxu0 0
    %1918 = vmatprep.subr.bf16.mxu0 0
    %1919 = vmatpush1.bf16.msra.mxu0 0
    %1920 = vmatprep.subr.bf16.mxu0 0
    %1921 = vmatpush1.bf16.msra.mxu0 0
    %1922 = vmatprep.subr.bf16.mxu0 0
    %1923 = vmatpush1.bf16.msra.mxu0 0
    %1924 = vmatprep.subr.bf16.mxu0 0
    %1925 = vmatpush1.bf16.msra.mxu0 0
    %1926 = vmatprep.subr.bf16.mxu0 0
    %1927 = vmatpush1.bf16.msra.mxu0 %v1911
    %1928 = vmatprep.subr.bf16.mxu0 0
    %1929 = vmatpush1.bf16.msra.mxu0 %v1910
    %1930 = vmatprep.subr.bf16.mxu0 0
    %1931 = vmatpush2.bf16.msra.mxu0 0
    %1932 = vmatprep.subr.bf16.mxu0 0
    %1933 = vmatpush2.bf16.msra.mxu0 0
    %1934 = vmatprep.subr.bf16.mxu0 0
    %1935 = vmatpush2.bf16.msra.mxu0 0
    %1936 = vmatprep.subr.bf16.mxu0 0
    %1937 = vmatpush2.bf16.msra.mxu0 0
    %1938 = vmatprep.subr.bf16.mxu0 0
    %1939 = vmatpush2.bf16.msra.mxu0 0
    %1940 = vmatprep.subr.bf16.mxu0 0
    %1941 = vmatpush2.bf16.msra.mxu0 0
    %1942 = vmatprep.subr.bf16.mxu0 0
    %1943 = vmatpush2.bf16.msra.mxu0 0
    %1944 = vmatprep.subr.bf16.mxu0 0
    %1945 = vmatpush2.bf16.msra.mxu0 0
    %1946 = vmatprep.mubr.bf16.mxu0 0
    %1947 = vmatmul.mubr.bf16.gmra.mxu0 %v1846
    %v1948 = vpop.f32.mrf.mxu0
    %v1949 = vadd.f32 %v1900, %v1948
    %v1950 = vpop.f32.mrf.mxu0
    %v1951 = vpop.f32.mrf.mxu0
    %v1952 = vadd.f32 %v1900, %v1951
    %v1953 = vpop.f32.mrf.mxu0
    %1954 = vdwg.mxu0
    %s1955 = scalar_lea.vmem %s9, 16
    %v1956 = vld [vmem:[%s1955] sm:$0xf]
    %v1957 = vld [vmem:[%s1955 + $0x4] sm:$0xf]
    %v1958 = vld [vmem:[%s1955 + $0x8] sm:$0xf]
    %v1959 = vld [vmem:[%s1955 + $0xc] sm:$0xf]
    %s1960 = scalar_lea.vmem %s10, 1
    %v1961 = vld [vmem:[%s1960] sm:$0x1]
    %v1963 = vlaneseq
    %v1964 = vshrl.u32 %v1963, 7
    %v1965 = vsub.s32 0, %v1964
    %v1966 = vrot.slane %v1961, %v1965
    %v1972 = vunpack.c.l.b16 %v1956
    %v1973 = vunpack.c.l.b16 %v1957
    %v1974 = vunpack.c.l.b16 %v1958
    %v1975 = vunpack.c.l.b16 %v1959
    %v1976 = vpack.c.b16 %v1973, %v1972
    %v1977 = vpack.c.b16 %v1975, %v1974
    %1980 = vmatprep.subr.bf16.mxu0 0
    %1981 = vmatpush1.bf16.msra.mxu0 0
    %1982 = vmatprep.subr.bf16.mxu0 0
    %1983 = vmatpush1.bf16.msra.mxu0 0
    %1984 = vmatprep.subr.bf16.mxu0 0
    %1985 = vmatpush1.bf16.msra.mxu0 0
    %1986 = vmatprep.subr.bf16.mxu0 0
    %1987 = vmatpush1.bf16.msra.mxu0 0
    %1988 = vmatprep.subr.bf16.mxu0 0
    %1989 = vmatpush1.bf16.msra.mxu0 0
    %1990 = vmatprep.subr.bf16.mxu0 0
    %1991 = vmatpush1.bf16.msra.mxu0 0
    %1992 = vmatprep.subr.bf16.mxu0 0
    %1993 = vmatpush1.bf16.msra.mxu0 %v1977
    %1994 = vmatprep.subr.bf16.mxu0 0
    %1995 = vmatpush1.bf16.msra.mxu0 %v1976
    %1996 = vmatprep.subr.bf16.mxu0 0
    %1997 = vmatpush2.bf16.msra.mxu0 0
    %1998 = vmatprep.subr.bf16.mxu0 0
    %1999 = vmatpush2.bf16.msra.mxu0 0
    %2000 = vmatprep.subr.bf16.mxu0 0
    %2001 = vmatpush2.bf16.msra.mxu0 0
    %2002 = vmatprep.subr.bf16.mxu0 0
    %2003 = vmatpush2.bf16.msra.mxu0 0
    %2004 = vmatprep.subr.bf16.mxu0 0
    %2005 = vmatpush2.bf16.msra.mxu0 0
    %2006 = vmatprep.subr.bf16.mxu0 0
    %2007 = vmatpush2.bf16.msra.mxu0 0
    %2008 = vmatprep.subr.bf16.mxu0 0
    %2009 = vmatpush2.bf16.msra.mxu0 0
    %2010 = vmatprep.subr.bf16.mxu0 0
    %2011 = vmatpush2.bf16.msra.mxu0 0
    %2012 = vmatprep.mubr.bf16.mxu0 0
    %2013 = vmatmul.mubr.bf16.gmra.mxu0 %v1846
    %v2014 = vpop.f32.mrf.mxu0
    %v2015 = vadd.f32 %v1966, %v2014
    %v2016 = vpop.f32.mrf.mxu0
    %v2017 = vpop.f32.mrf.mxu0
    %v2018 = vadd.f32 %v1966, %v2017
    %v2019 = vpop.f32.mrf.mxu0
    %2020 = vdwg.mxu0
    %s2021 = scalar_lea.vmem %s11, 16
    %v2022 = vld [vmem:[%s2021] sm:$0xf]
    %v2023 = vld [vmem:[%s2021 + $0x4] sm:$0xf]
    %v2024 = vld [vmem:[%s2021 + $0x8] sm:$0xf]
    %v2025 = vld [vmem:[%s2021 + $0xc] sm:$0xf]
    %v2026 = vpack.c.bf16 %v1883, %v1883
    %v2027 = vpack.c.bf16 %v1886, %v1886
    %v2028 = vpack.c.bf16 %v1949, %v1949
    %v2029 = vpack.c.bf16 %v1952, %v1952
    %v2030 = vpack.c.bf16 %v2015, %v2015
    %v2031 = vpack.c.bf16 %v2018, %v2018
    %v2033 = vsel %vm465, %v2026, 0
    %v2036 = vsel %vm465, %v2028, 0
    %2038 = vmatprep.subr.bf16.mxu0 0
    %2039 = vmatpush1.bf16.xpose.msra.mxu0 0
    %2040 = vmatprep.subr.bf16.mxu0 0
    %2041 = vmatpush1.bf16.xpose.msra.mxu0 0
    %2042 = vmatprep.subr.bf16.mxu0 0
    %2043 = vmatpush1.bf16.xpose.msra.mxu0 0
    %2044 = vmatprep.subr.bf16.mxu0 0
    %2045 = vmatpush1.bf16.xpose.msra.mxu0 0
    %2046 = vmatprep.subr.bf16.mxu0 0
    %2047 = vmatpush1.bf16.xpose.msra.mxu0 0
    %2048 = vmatprep.subr.bf16.mxu0 0
    %2049 = vmatpush1.bf16.xpose.msra.mxu0 0
    %2050 = vmatprep.subr.bf16.mxu0 0
    %2051 = vmatpush1.bf16.xpose.msra.mxu0 0
    %2052 = vmatprep.subr.bf16.mxu0 0
    %2053 = vmatpush1.bf16.xpose.msra.mxu0 %v2036
    %2054 = vmatprep.subr.bf16.mxu0 0
    %2055 = vmatpush2.bf16.xpose.msra.mxu0 0
    %2056 = vmatprep.subr.bf16.mxu0 0
    %2057 = vmatpush2.bf16.xpose.msra.mxu0 0
    %2058 = vmatprep.subr.bf16.mxu0 0
    %2059 = vmatpush2.bf16.xpose.msra.mxu0 0
    %2060 = vmatprep.subr.bf16.mxu0 0
    %2061 = vmatpush2.bf16.xpose.msra.mxu0 0
    %2062 = vmatprep.subr.bf16.mxu0 0
    %2063 = vmatpush2.bf16.xpose.msra.mxu0 0
    %2064 = vmatprep.subr.bf16.mxu0 0
    %2065 = vmatpush2.bf16.xpose.msra.mxu0 0
    %2066 = vmatprep.subr.bf16.mxu0 0
    %2067 = vmatpush2.bf16.xpose.msra.mxu0 0
    %2068 = vmatprep.subr.bf16.mxu0 0
    %2069 = vmatpush2.bf16.xpose.msra.mxu0 0
    %2070 = vmatprep.mubr.bf16.mxu0 0
    %2071 = vmatmul.mubr.bf16.gmra.mxu0 %v2033
    %v2072 = vpop.f32.mrf.mxu0
    %v2073 = vadd.f32 0.0, %v2072
    %v2074 = vpop.f32.mrf.mxu0
    %v2075 = vpop.f32.mrf.mxu0
    %v2076 = vpop.f32.mrf.mxu0
    %2077 = vdwg.mxu0
    %v2079 = vsel %vm465, %v2027, 0
    %v2082 = vsel %vm465, %v2029, 0
    %2084 = vmatprep.subr.bf16.mxu0 0
    %2085 = vmatpush1.bf16.xpose.msra.mxu0 0
    %2086 = vmatprep.subr.bf16.mxu0 0
    %2087 = vmatpush1.bf16.xpose.msra.mxu0 0
    %2088 = vmatprep.subr.bf16.mxu0 0
    %2089 = vmatpush1.bf16.xpose.msra.mxu0 0
    %2090 = vmatprep.subr.bf16.mxu0 0
    %2091 = vmatpush1.bf16.xpose.msra.mxu0 0
    %2092 = vmatprep.subr.bf16.mxu0 0
    %2093 = vmatpush1.bf16.xpose.msra.mxu0 0
    %2094 = vmatprep.subr.bf16.mxu0 0
    %2095 = vmatpush1.bf16.xpose.msra.mxu0 0
    %2096 = vmatprep.subr.bf16.mxu0 0
    %2097 = vmatpush1.bf16.xpose.msra.mxu0 0
    %2098 = vmatprep.subr.bf16.mxu0 0
    %2099 = vmatpush1.bf16.xpose.msra.mxu0 %v2082
    %2100 = vmatprep.subr.bf16.mxu0 0
    %2101 = vmatpush2.bf16.xpose.msra.mxu0 0
    %2102 = vmatprep.subr.bf16.mxu0 0
    %2103 = vmatpush2.bf16.xpose.msra.mxu0 0
    %2104 = vmatprep.subr.bf16.mxu0 0
    %2105 = vmatpush2.bf16.xpose.msra.mxu0 0
    %2106 = vmatprep.subr.bf16.mxu0 0
    %2107 = vmatpush2.bf16.xpose.msra.mxu0 0
    %2108 = vmatprep.subr.bf16.mxu0 0
    %2109 = vmatpush2.bf16.xpose.msra.mxu0 0
    %2110 = vmatprep.subr.bf16.mxu0 0
    %2111 = vmatpush2.bf16.xpose.msra.mxu0 0
    %2112 = vmatprep.subr.bf16.mxu0 0
    %2113 = vmatpush2.bf16.xpose.msra.mxu0 0
    %2114 = vmatprep.subr.bf16.mxu0 0
    %2115 = vmatpush2.bf16.xpose.msra.mxu0 0
    %2116 = vmatprep.mubr.bf16.mxu0 0
    %2117 = vmatmul.mubr.bf16.gmra.mxu0 %v2079
    %v2118 = vpop.f32.mrf.mxu0
    %v2119 = vadd.f32 0.0, %v2118
    %v2120 = vpop.f32.mrf.mxu0
    %v2121 = vpop.f32.mrf.mxu0
    %v2122 = vpop.f32.mrf.mxu0
    %2123 = vdwg.mxu0
    %v2124 = vmul.f32 %v2073, 0.35355338
    %v2125 = vmul.f32 %v2119, 0.35355338
    %v2126 = vsel %vm465, %v2124, -inf
    %2127 = vmax.xlane.f32.xlu0 %v2126
    %v2128 = vpop.xlane.xlu0 %2127
    %v2129 = vsel %vm465, %v2125, -inf
    %2130 = vmax.xlane.f32.xlu0 %v2129
    %v2131 = vpop.xlane.xlu0 %2130
    %v2132 = vsub.f32 %v2124, %v2128
    %v2133 = vsub.f32 %v2125, %v2131
    %v2134 = vmul.f32 %v2132, 1.442695
    %v2135 = vpow.pop %v2134
    %v2136 = vmul.f32 %v2133, 1.442695
    %v2137 = vpow.pop %v2136
    %v2138 = vsel %vm465, %v2135, 0.0
    %2139 = vadd.xlane.f32.xlu0 %v2138
    %v2140 = vpop.xlane.xlu0 %2139
    %v2141 = vsel %vm465, %v2137, 0.0
    %2142 = vadd.xlane.f32.xlu0 %v2141
    %v2143 = vpop.xlane.xlu0 %2142
    %v2144 = vrcp.pop %v2140
    %v2145 = vrcp.pop %v2143
    %v2146 = vmul.f32 %v2135, %v2144
    %v2147 = vmul.f32 %v2137, %v2145
    %v2148 = vpack.c.bf16 %v2146, %v2146
    %v2149 = vpack.c.bf16 %v2147, %v2147
    %v2151 = vsel %vm465, %v2148, 0
    %v2154 = vsel %vm587, %v2030, 0
    %2156 = vmatprep.subr.bf16.mxu0 0
    %2157 = vmatpush1.bf16.msra.mxu0 0
    %2158 = vmatprep.subr.bf16.mxu0 0
    %2159 = vmatpush1.bf16.msra.mxu0 0
    %2160 = vmatprep.subr.bf16.mxu0 0
    %2161 = vmatpush1.bf16.msra.mxu0 0
    %2162 = vmatprep.subr.bf16.mxu0 0
    %2163 = vmatpush1.bf16.msra.mxu0 0
    %2164 = vmatprep.subr.bf16.mxu0 0
    %2165 = vmatpush1.bf16.msra.mxu0 0
    %2166 = vmatprep.subr.bf16.mxu0 0
    %2167 = vmatpush1.bf16.msra.mxu0 0
    %2168 = vmatprep.subr.bf16.mxu0 0
    %2169 = vmatpush1.bf16.msra.mxu0 0
    %2170 = vmatprep.subr.bf16.mxu0 0
    %2171 = vmatpush1.bf16.msra.mxu0 %v2154
    %2172 = vmatprep.subr.bf16.mxu0 0
    %2173 = vmatpush2.bf16.msra.mxu0 0
    %2174 = vmatprep.subr.bf16.mxu0 0
    %2175 = vmatpush2.bf16.msra.mxu0 0
    %2176 = vmatprep.subr.bf16.mxu0 0
    %2177 = vmatpush2.bf16.msra.mxu0 0
    %2178 = vmatprep.subr.bf16.mxu0 0
    %2179 = vmatpush2.bf16.msra.mxu0 0
    %2180 = vmatprep.subr.bf16.mxu0 0
    %2181 = vmatpush2.bf16.msra.mxu0 0
    %2182 = vmatprep.subr.bf16.mxu0 0
    %2183 = vmatpush2.bf16.msra.mxu0 0
    %2184 = vmatprep.subr.bf16.mxu0 0
    %2185 = vmatpush2.bf16.msra.mxu0 0
    %2186 = vmatprep.subr.bf16.mxu0 0
    %2187 = vmatpush2.bf16.msra.mxu0 0
    %2188 = vmatprep.mubr.bf16.mxu0 0
    %2189 = vmatmul.mubr.bf16.gmra.mxu0 %v2151
    %v2190 = vpop.f32.mrf.mxu0
    %v2191 = vadd.f32 0.0, %v2190
    %v2192 = vpop.f32.mrf.mxu0
    %v2193 = vpop.f32.mrf.mxu0
    %v2194 = vpop.f32.mrf.mxu0
    %2195 = vdwg.mxu0
    %v2197 = vsel %vm465, %v2149, 0
    %v2200 = vsel %vm587, %v2031, 0
    %2202 = vmatprep.subr.bf16.mxu0 0
    %2203 = vmatpush1.bf16.msra.mxu0 0
    %2204 = vmatprep.subr.bf16.mxu0 0
    %2205 = vmatpush1.bf16.msra.mxu0 0
    %2206 = vmatprep.subr.bf16.mxu0 0
    %2207 = vmatpush1.bf16.msra.mxu0 0
    %2208 = vmatprep.subr.bf16.mxu0 0
    %2209 = vmatpush1.bf16.msra.mxu0 0
    %2210 = vmatprep.subr.bf16.mxu0 0
    %2211 = vmatpush1.bf16.msra.mxu0 0
    %2212 = vmatprep.subr.bf16.mxu0 0
    %2213 = vmatpush1.bf16.msra.mxu0 0
    %2214 = vmatprep.subr.bf16.mxu0 0
    %2215 = vmatpush1.bf16.msra.mxu0 0
    %2216 = vmatprep.subr.bf16.mxu0 0
    %2217 = vmatpush1.bf16.msra.mxu0 %v2200
    %2218 = vmatprep.subr.bf16.mxu0 0
    %2219 = vmatpush2.bf16.msra.mxu0 0
    %2220 = vmatprep.subr.bf16.mxu0 0
    %2221 = vmatpush2.bf16.msra.mxu0 0
    %2222 = vmatprep.subr.bf16.mxu0 0
    %2223 = vmatpush2.bf16.msra.mxu0 0
    %2224 = vmatprep.subr.bf16.mxu0 0
    %2225 = vmatpush2.bf16.msra.mxu0 0
    %2226 = vmatprep.subr.bf16.mxu0 0
    %2227 = vmatpush2.bf16.msra.mxu0 0
    %2228 = vmatprep.subr.bf16.mxu0 0
    %2229 = vmatpush2.bf16.msra.mxu0 0
    %2230 = vmatprep.subr.bf16.mxu0 0
    %2231 = vmatpush2.bf16.msra.mxu0 0
    %2232 = vmatprep.subr.bf16.mxu0 0
    %2233 = vmatpush2.bf16.msra.mxu0 0
    %2234 = vmatprep.mubr.bf16.mxu0 0
    %2235 = vmatmul.mubr.bf16.gmra.mxu0 %v2197
    %v2236 = vpop.f32.mrf.mxu0
    %v2237 = vadd.f32 0.0, %v2236
    %v2238 = vpop.f32.mrf.mxu0
    %v2239 = vpop.f32.mrf.mxu0
    %v2240 = vpop.f32.mrf.mxu0
    %2241 = vdwg.mxu0
    %v2242 = vpack.c.bf16 %v2237, %v2191
    %2244 = vrot.lane.b32.xlu0 %v2026, 120
    %v2245 = vpop.permute.xlu0 %2244
    %2247 = vrot.lane.b32.xlu0 %v2028, 120
    %v2248 = vpop.permute.xlu0 %2247
    %v2250 = vsel %vm465, %v2245, 0
    %v2253 = vsel %vm465, %v2248, 0
    %2255 = vmatprep.subr.bf16.mxu0 0
    %2256 = vmatpush1.bf16.xpose.msra.mxu0 0
    %2257 = vmatprep.subr.bf16.mxu0 0
    %2258 = vmatpush1.bf16.xpose.msra.mxu0 0
    %2259 = vmatprep.subr.bf16.mxu0 0
    %2260 = vmatpush1.bf16.xpose.msra.mxu0 0
    %2261 = vmatprep.subr.bf16.mxu0 0
    %2262 = vmatpush1.bf16.xpose.msra.mxu0 0
    %2263 = vmatprep.subr.bf16.mxu0 0
    %2264 = vmatpush1.bf16.xpose.msra.mxu0 0
    %2265 = vmatprep.subr.bf16.mxu0 0
    %2266 = vmatpush1.bf16.xpose.msra.mxu0 0
    %2267 = vmatprep.subr.bf16.mxu0 0
    %2268 = vmatpush1.bf16.xpose.msra.mxu0 0
    %2269 = vmatprep.subr.bf16.mxu0 0
    %2270 = vmatpush1.bf16.xpose.msra.mxu0 %v2253
    %2271 = vmatprep.subr.bf16.mxu0 0
    %2272 = vmatpush2.bf16.xpose.msra.mxu0 0
    %2273 = vmatprep.subr.bf16.mxu0 0
    %2274 = vmatpush2.bf16.xpose.msra.mxu0 0
    %2275 = vmatprep.subr.bf16.mxu0 0
    %2276 = vmatpush2.bf16.xpose.msra.mxu0 0
    %2277 = vmatprep.subr.bf16.mxu0 0
    %2278 = vmatpush2.bf16.xpose.msra.mxu0 0
    %2279 = vmatprep.subr.bf16.mxu0 0
    %2280 = vmatpush2.bf16.xpose.msra.mxu0 0
    %2281 = vmatprep.subr.bf16.mxu0 0
    %2282 = vmatpush2.bf16.xpose.msra.mxu0 0
    %2283 = vmatprep.subr.bf16.mxu0 0
    %2284 = vmatpush2.bf16.xpose.msra.mxu0 0
    %2285 = vmatprep.subr.bf16.mxu0 0
    %2286 = vmatpush2.bf16.xpose.msra.mxu0 0
    %2287 = vmatprep.mubr.bf16.mxu0 0
    %2288 = vmatmul.mubr.bf16.gmra.mxu0 %v2250
    %v2289 = vpop.f32.mrf.mxu0
    %v2290 = vadd.f32 0.0, %v2289
    %v2291 = vpop.f32.mrf.mxu0
    %v2292 = vpop.f32.mrf.mxu0
    %v2293 = vpop.f32.mrf.mxu0
    %2294 = vdwg.mxu0
    %2296 = vrot.lane.b32.xlu0 %v2027, 120
    %v2297 = vpop.permute.xlu0 %2296
    %2299 = vrot.lane.b32.xlu0 %v2029, 120
    %v2300 = vpop.permute.xlu0 %2299
    %v2302 = vsel %vm465, %v2297, 0
    %v2305 = vsel %vm465, %v2300, 0
    %2307 = vmatprep.subr.bf16.mxu0 0
    %2308 = vmatpush1.bf16.xpose.msra.mxu0 0
    %2309 = vmatprep.subr.bf16.mxu0 0
    %2310 = vmatpush1.bf16.xpose.msra.mxu0 0
    %2311 = vmatprep.subr.bf16.mxu0 0
    %2312 = vmatpush1.bf16.xpose.msra.mxu0 0
    %2313 = vmatprep.subr.bf16.mxu0 0
    %2314 = vmatpush1.bf16.xpose.msra.mxu0 0
    %2315 = vmatprep.subr.bf16.mxu0 0
    %2316 = vmatpush1.bf16.xpose.msra.mxu0 0
    %2317 = vmatprep.subr.bf16.mxu0 0
    %2318 = vmatpush1.bf16.xpose.msra.mxu0 0
    %2319 = vmatprep.subr.bf16.mxu0 0
    %2320 = vmatpush1.bf16.xpose.msra.mxu0 0
    %2321 = vmatprep.subr.bf16.mxu0 0
    %2322 = vmatpush1.bf16.xpose.msra.mxu0 %v2305
    %2323 = vmatprep.subr.bf16.mxu0 0
    %2324 = vmatpush2.bf16.xpose.msra.mxu0 0
    %2325 = vmatprep.subr.bf16.mxu0 0
    %2326 = vmatpush2.bf16.xpose.msra.mxu0 0
    %2327 = vmatprep.subr.bf16.mxu0 0
    %2328 = vmatpush2.bf16.xpose.msra.mxu0 0
    %2329 = vmatprep.subr.bf16.mxu0 0
    %2330 = vmatpush2.bf16.xpose.msra.mxu0 0
    %2331 = vmatprep.subr.bf16.mxu0 0
    %2332 = vmatpush2.bf16.xpose.msra.mxu0 0
    %2333 = vmatprep.subr.bf16.mxu0 0
    %2334 = vmatpush2.bf16.xpose.msra.mxu0 0
    %2335 = vmatprep.subr.bf16.mxu0 0
    %2336 = vmatpush2.bf16.xpose.msra.mxu0 0
    %2337 = vmatprep.subr.bf16.mxu0 0
    %2338 = vmatpush2.bf16.xpose.msra.mxu0 0
    %2339 = vmatprep.mubr.bf16.mxu0 0
    %2340 = vmatmul.mubr.bf16.gmra.mxu0 %v2302
    %v2341 = vpop.f32.mrf.mxu0
    %v2342 = vadd.f32 0.0, %v2341
    %v2343 = vpop.f32.mrf.mxu0
    %v2344 = vpop.f32.mrf.mxu0
    %v2345 = vpop.f32.mrf.mxu0
    %2346 = vdwg.mxu0
    %v2347 = vmul.f32 %v2290, 0.35355338
    %v2348 = vmul.f32 %v2342, 0.35355338
    %v2349 = vsel %vm465, %v2347, -inf
    %2350 = vmax.xlane.f32.xlu0 %v2349
    %v2351 = vpop.xlane.xlu0 %2350
    %v2352 = vsel %vm465, %v2348, -inf
    %2353 = vmax.xlane.f32.xlu0 %v2352
    %v2354 = vpop.xlane.xlu0 %2353
    %v2355 = vsub.f32 %v2347, %v2351
    %v2356 = vsub.f32 %v2348, %v2354
    %v2357 = vmul.f32 %v2355, 1.442695
    %v2358 = vpow.pop %v2357
    %v2359 = vmul.f32 %v2356, 1.442695
    %v2360 = vpow.pop %v2359
    %v2361 = vsel %vm465, %v2358, 0.0
    %2362 = vadd.xlane.f32.xlu0 %v2361
    %v2363 = vpop.xlane.xlu0 %2362
    %v2364 = vsel %vm465, %v2360, 0.0
    %2365 = vadd.xlane.f32.xlu0 %v2364
    %v2366 = vpop.xlane.xlu0 %2365
    %v2367 = vrcp.pop %v2363
    %v2368 = vrcp.pop %v2366
    %v2369 = vmul.f32 %v2358, %v2367
    %v2370 = vmul.f32 %v2360, %v2368
    %v2371 = vpack.c.bf16 %v2369, %v2369
    %v2372 = vpack.c.bf16 %v2370, %v2370
    %2374 = vrot.lane.b32.xlu0 %v2030, 120
    %v2375 = vpop.permute.xlu0 %2374
    %v2377 = vsel %vm465, %v2371, 0
    %v2380 = vsel %vm587, %v2375, 0
    %2382 = vmatprep.subr.bf16.mxu0 0
    %2383 = vmatpush1.bf16.msra.mxu0 0
    %2384 = vmatprep.subr.bf16.mxu0 0
    %2385 = vmatpush1.bf16.msra.mxu0 0
    %2386 = vmatprep.subr.bf16.mxu0 0
    %2387 = vmatpush1.bf16.msra.mxu0 0
    %2388 = vmatprep.subr.bf16.mxu0 0
    %2389 = vmatpush1.bf16.msra.mxu0 0
    %2390 = vmatprep.subr.bf16.mxu0 0
    %2391 = vmatpush1.bf16.msra.mxu0 0
    %2392 = vmatprep.subr.bf16.mxu0 0
    %2393 = vmatpush1.bf16.msra.mxu0 0
    %2394 = vmatprep.subr.bf16.mxu0 0
    %2395 = vmatpush1.bf16.msra.mxu0 0
    %2396 = vmatprep.subr.bf16.mxu0 0
    %2397 = vmatpush1.bf16.msra.mxu0 %v2380
    %2398 = vmatprep.subr.bf16.mxu0 0
    %2399 = vmatpush2.bf16.msra.mxu0 0
    %2400 = vmatprep.subr.bf16.mxu0 0
    %2401 = vmatpush2.bf16.msra.mxu0 0
    %2402 = vmatprep.subr.bf16.mxu0 0
    %2403 = vmatpush2.bf16.msra.mxu0 0
    %2404 = vmatprep.subr.bf16.mxu0 0
    %2405 = vmatpush2.bf16.msra.mxu0 0
    %2406 = vmatprep.subr.bf16.mxu0 0
    %2407 = vmatpush2.bf16.msra.mxu0 0
    %2408 = vmatprep.subr.bf16.mxu0 0
    %2409 = vmatpush2.bf16.msra.mxu0 0
    %2410 = vmatprep.subr.bf16.mxu0 0
    %2411 = vmatpush2.bf16.msra.mxu0 0
    %2412 = vmatprep.subr.bf16.mxu0 0
    %2413 = vmatpush2.bf16.msra.mxu0 0
    %2414 = vmatprep.mubr.bf16.mxu0 0
    %2415 = vmatmul.mubr.bf16.gmra.mxu0 %v2377
    %v2416 = vpop.f32.mrf.mxu0
    %v2417 = vadd.f32 0.0, %v2416
    %v2418 = vpop.f32.mrf.mxu0
    %v2419 = vpop.f32.mrf.mxu0
    %v2420 = vpop.f32.mrf.mxu0
    %2421 = vdwg.mxu0
    %2423 = vrot.lane.b32.xlu0 %v2031, 120
    %v2424 = vpop.permute.xlu0 %2423
    %v2426 = vsel %vm465, %v2372, 0
    %v2429 = vsel %vm587, %v2424, 0
    %2431 = vmatprep.subr.bf16.mxu0 0
    %2432 = vmatpush1.bf16.msra.mxu0 0
    %2433 = vmatprep.subr.bf16.mxu0 0
    %2434 = vmatpush1.bf16.msra.mxu0 0
    %2435 = vmatprep.subr.bf16.mxu0 0
    %2436 = vmatpush1.bf16.msra.mxu0 0
    %2437 = vmatprep.subr.bf16.mxu0 0
    %2438 = vmatpush1.bf16.msra.mxu0 0
    %2439 = vmatprep.subr.bf16.mxu0 0
    %2440 = vmatpush1.bf16.msra.mxu0 0
    %2441 = vmatprep.subr.bf16.mxu0 0
    %2442 = vmatpush1.bf16.msra.mxu0 0
    %2443 = vmatprep.subr.bf16.mxu0 0
    %2444 = vmatpush1.bf16.msra.mxu0 0
    %2445 = vmatprep.subr.bf16.mxu0 0
    %2446 = vmatpush1.bf16.msra.mxu0 %v2429
    %2447 = vmatprep.subr.bf16.mxu0 0
    %2448 = vmatpush2.bf16.msra.mxu0 0
    %2449 = vmatprep.subr.bf16.mxu0 0
    %2450 = vmatpush2.bf16.msra.mxu0 0
    %2451 = vmatprep.subr.bf16.mxu0 0
    %2452 = vmatpush2.bf16.msra.mxu0 0
    %2453 = vmatprep.subr.bf16.mxu0 0
    %2454 = vmatpush2.bf16.msra.mxu0 0
    %2455 = vmatprep.subr.bf16.mxu0 0
    %2456 = vmatpush2.bf16.msra.mxu0 0
    %2457 = vmatprep.subr.bf16.mxu0 0
    %2458 = vmatpush2.bf16.msra.mxu0 0
    %2459 = vmatprep.subr.bf16.mxu0 0
    %2460 = vmatpush2.bf16.msra.mxu0 0
    %2461 = vmatprep.subr.bf16.mxu0 0
    %2462 = vmatpush2.bf16.msra.mxu0 0
    %2463 = vmatprep.mubr.bf16.mxu0 0
    %2464 = vmatmul.mubr.bf16.gmra.mxu0 %v2426
    %v2465 = vpop.f32.mrf.mxu0
    %v2466 = vadd.f32 0.0, %v2465
    %v2467 = vpop.f32.mrf.mxu0
    %v2468 = vpop.f32.mrf.mxu0
    %v2469 = vpop.f32.mrf.mxu0
    %2470 = vdwg.mxu0
    %v2471 = vpack.c.bf16 %v2466, %v2417
    %v2473 = vsel %vm465, %v2471, 0
    %v2476 = vsel %vm587, %v2023, 0
    %2478 = vmatprep.subr.bf16.mxu0 0
    %2479 = vmatpush1.bf16.msra.mxu0 0
    %2480 = vmatprep.subr.bf16.mxu0 0
    %2481 = vmatpush1.bf16.msra.mxu0 0
    %2482 = vmatprep.subr.bf16.mxu0 0
    %2483 = vmatpush1.bf16.msra.mxu0 0
    %2484 = vmatprep.subr.bf16.mxu0 0
    %2485 = vmatpush1.bf16.msra.mxu0 0
    %2486 = vmatprep.subr.bf16.mxu0 0
    %2487 = vmatpush1.bf16.msra.mxu0 0
    %2488 = vmatprep.subr.bf16.mxu0 0
    %2489 = vmatpush1.bf16.msra.mxu0 0
    %2490 = vmatprep.subr.bf16.mxu0 0
    %2491 = vmatpush1.bf16.msra.mxu0 0
    %2492 = vmatprep.subr.bf16.mxu0 0
    %2493 = vmatpush1.bf16.msra.mxu0 %v2476
    %2494 = vmatprep.subr.bf16.mxu0 0
    %2495 = vmatpush2.bf16.msra.mxu0 0
    %2496 = vmatprep.subr.bf16.mxu0 0
    %2497 = vmatpush2.bf16.msra.mxu0 0
    %2498 = vmatprep.subr.bf16.mxu0 0
    %2499 = vmatpush2.bf16.msra.mxu0 0
    %2500 = vmatprep.subr.bf16.mxu0 0
    %2501 = vmatpush2.bf16.msra.mxu0 0
    %2502 = vmatprep.subr.bf16.mxu0 0
    %2503 = vmatpush2.bf16.msra.mxu0 0
    %2504 = vmatprep.subr.bf16.mxu0 0
    %2505 = vmatpush2.bf16.msra.mxu0 0
    %2506 = vmatprep.subr.bf16.mxu0 0
    %2507 = vmatpush2.bf16.msra.mxu0 0
    %2508 = vmatprep.subr.bf16.mxu0 0
    %2509 = vmatpush2.bf16.msra.mxu0 0
    %2510 = vmatprep.mubr.bf16.mxu0 0
    %2511 = vmatmul.mubr.bf16.gmra.mxu0 %v2473
    %v2512 = vpop.f32.mrf.mxu0
    %v2513 = vadd.f32 0.0, %v2512
    %v2514 = vpop.f32.mrf.mxu0
    %v2515 = vpop.f32.mrf.mxu0
    %v2516 = vadd.f32 0.0, %v2515
    %v2517 = vpop.f32.mrf.mxu0
    %2518 = vdwg.mxu0
    %v2520 = vsel %vm465, %v2242, 0
    %v2523 = vsel %vm587, %v2022, 0
    %2525 = vmatprep.subr.bf16.mxu0 0
    %2526 = vmatpush1.bf16.msra.mxu0 0
    %2527 = vmatprep.subr.bf16.mxu0 0
    %2528 = vmatpush1.bf16.msra.mxu0 0
    %2529 = vmatprep.subr.bf16.mxu0 0
    %2530 = vmatpush1.bf16.msra.mxu0 0
    %2531 = vmatprep.subr.bf16.mxu0 0
    %2532 = vmatpush1.bf16.msra.mxu0 0
    %2533 = vmatprep.subr.bf16.mxu0 0
    %2534 = vmatpush1.bf16.msra.mxu0 0
    %2535 = vmatprep.subr.bf16.mxu0 0
    %2536 = vmatpush1.bf16.msra.mxu0 0
    %2537 = vmatprep.subr.bf16.mxu0 0
    %2538 = vmatpush1.bf16.msra.mxu0 0
    %2539 = vmatprep.subr.bf16.mxu0 0
    %2540 = vmatpush1.bf16.msra.mxu0 %v2523
    %2541 = vmatprep.subr.bf16.mxu0 0
    %2542 = vmatpush2.bf16.msra.mxu0 0
    %2543 = vmatprep.subr.bf16.mxu0 0
    %2544 = vmatpush2.bf16.msra.mxu0 0
    %2545 = vmatprep.subr.bf16.mxu0 0
    %2546 = vmatpush2.bf16.msra.mxu0 0
    %2547 = vmatprep.subr.bf16.mxu0 0
    %2548 = vmatpush2.bf16.msra.mxu0 0
    %2549 = vmatprep.subr.bf16.mxu0 0
    %2550 = vmatpush2.bf16.msra.mxu0 0
    %2551 = vmatprep.subr.bf16.mxu0 0
    %2552 = vmatpush2.bf16.msra.mxu0 0
    %2553 = vmatprep.subr.bf16.mxu0 0
    %2554 = vmatpush2.bf16.msra.mxu0 0
    %2555 = vmatprep.subr.bf16.mxu0 0
    %2556 = vmatpush2.bf16.msra.mxu0 0
    %2557 = vmatprep.mubr.bf16.mxu0 0
    %2558 = vmatmul.mubr.bf16.gmra.mxu0 %v2520
    %v2559 = vpop.f32.mrf.mxu0
    %v2560 = vadd.f32 %v2513, %v2559
    %v2561 = vpop.f32.mrf.mxu0
    %v2562 = vpop.f32.mrf.mxu0
    %v2563 = vadd.f32 %v2516, %v2562
    %v2564 = vpop.f32.mrf.mxu0
    %2565 = vdwg.mxu0
    %2566 = vrot.lane.b32.xlu0 %v2026, 112
    %v2567 = vpop.permute.xlu0 %2566
    %2568 = vrot.lane.b32.xlu0 %v2028, 112
    %v2569 = vpop.permute.xlu0 %2568
    %v2571 = vsel %vm465, %v2567, 0
    %v2574 = vsel %vm465, %v2569, 0
    %2576 = vmatprep.subr.bf16.mxu0 0
    %2577 = vmatpush1.bf16.xpose.msra.mxu0 0
    %2578 = vmatprep.subr.bf16.mxu0 0
    %2579 = vmatpush1.bf16.xpose.msra.mxu0 0
    %2580 = vmatprep.subr.bf16.mxu0 0
    %2581 = vmatpush1.bf16.xpose.msra.mxu0 0
    %2582 = vmatprep.subr.bf16.mxu0 0
    %2583 = vmatpush1.bf16.xpose.msra.mxu0 0
    %2584 = vmatprep.subr.bf16.mxu0 0
    %2585 = vmatpush1.bf16.xpose.msra.mxu0 0
    %2586 = vmatprep.subr.bf16.mxu0 0
    %2587 = vmatpush1.bf16.xpose.msra.mxu0 0
    %2588 = vmatprep.subr.bf16.mxu0 0
    %2589 = vmatpush1.bf16.xpose.msra.mxu0 0
    %2590 = vmatprep.subr.bf16.mxu0 0
    %2591 = vmatpush1.bf16.xpose.msra.mxu0 %v2574
    %2592 = vmatprep.subr.bf16.mxu0 0
    %2593 = vmatpush2.bf16.xpose.msra.mxu0 0
    %2594 = vmatprep.subr.bf16.mxu0 0
    %2595 = vmatpush2.bf16.xpose.msra.mxu0 0
    %2596 = vmatprep.subr.bf16.mxu0 0
    %2597 = vmatpush2.bf16.xpose.msra.mxu0 0
    %2598 = vmatprep.subr.bf16.mxu0 0
    %2599 = vmatpush2.bf16.xpose.msra.mxu0 0
    %2600 = vmatprep.subr.bf16.mxu0 0
    %2601 = vmatpush2.bf16.xpose.msra.mxu0 0
    %2602 = vmatprep.subr.bf16.mxu0 0
    %2603 = vmatpush2.bf16.xpose.msra.mxu0 0
    %2604 = vmatprep.subr.bf16.mxu0 0
    %2605 = vmatpush2.bf16.xpose.msra.mxu0 0
    %2606 = vmatprep.subr.bf16.mxu0 0
    %2607 = vmatpush2.bf16.xpose.msra.mxu0 0
    %2608 = vmatprep.mubr.bf16.mxu0 0
    %2609 = vmatmul.mubr.bf16.gmra.mxu0 %v2571
    %v2610 = vpop.f32.mrf.mxu0
    %v2611 = vadd.f32 0.0, %v2610
    %v2612 = vpop.f32.mrf.mxu0
    %v2613 = vpop.f32.mrf.mxu0
    %v2614 = vpop.f32.mrf.mxu0
    %2615 = vdwg.mxu0
    %2616 = vrot.lane.b32.xlu0 %v2027, 112
    %v2617 = vpop.permute.xlu0 %2616
    %2618 = vrot.lane.b32.xlu0 %v2029, 112
    %v2619 = vpop.permute.xlu0 %2618
    %v2621 = vsel %vm465, %v2617, 0
    %v2624 = vsel %vm465, %v2619, 0
    %2626 = vmatprep.subr.bf16.mxu0 0
    %2627 = vmatpush1.bf16.xpose.msra.mxu0 0
    %2628 = vmatprep.subr.bf16.mxu0 0
    %2629 = vmatpush1.bf16.xpose.msra.mxu0 0
    %2630 = vmatprep.subr.bf16.mxu0 0
    %2631 = vmatpush1.bf16.xpose.msra.mxu0 0
    %2632 = vmatprep.subr.bf16.mxu0 0
    %2633 = vmatpush1.bf16.xpose.msra.mxu0 0
    %2634 = vmatprep.subr.bf16.mxu0 0
    %2635 = vmatpush1.bf16.xpose.msra.mxu0 0
    %2636 = vmatprep.subr.bf16.mxu0 0
    %2637 = vmatpush1.bf16.xpose.msra.mxu0 0
    %2638 = vmatprep.subr.bf16.mxu0 0
    %2639 = vmatpush1.bf16.xpose.msra.mxu0 0
    %2640 = vmatprep.subr.bf16.mxu0 0
    %2641 = vmatpush1.bf16.xpose.msra.mxu0 %v2624
    %2642 = vmatprep.subr.bf16.mxu0 0
    %2643 = vmatpush2.bf16.xpose.msra.mxu0 0
    %2644 = vmatprep.subr.bf16.mxu0 0
    %2645 = vmatpush2.bf16.xpose.msra.mxu0 0
    %2646 = vmatprep.subr.bf16.mxu0 0
    %2647 = vmatpush2.bf16.xpose.msra.mxu0 0
    %2648 = vmatprep.subr.bf16.mxu0 0
    %2649 = vmatpush2.bf16.xpose.msra.mxu0 0
    %2650 = vmatprep.subr.bf16.mxu0 0
    %2651 = vmatpush2.bf16.xpose.msra.mxu0 0
    %2652 = vmatprep.subr.bf16.mxu0 0
    %2653 = vmatpush2.bf16.xpose.msra.mxu0 0
    %2654 = vmatprep.subr.bf16.mxu0 0
    %2655 = vmatpush2.bf16.xpose.msra.mxu0 0
    %2656 = vmatprep.subr.bf16.mxu0 0
    %2657 = vmatpush2.bf16.xpose.msra.mxu0 0
    %2658 = vmatprep.mubr.bf16.mxu0 0
    %2659 = vmatmul.mubr.bf16.gmra.mxu0 %v2621
    %v2660 = vpop.f32.mrf.mxu0
    %v2661 = vadd.f32 0.0, %v2660
    %v2662 = vpop.f32.mrf.mxu0
    %v2663 = vpop.f32.mrf.mxu0
    %v2664 = vpop.f32.mrf.mxu0
    %2665 = vdwg.mxu0
    %v2666 = vmul.f32 %v2611, 0.35355338
    %v2667 = vmul.f32 %v2661, 0.35355338
    %v2668 = vsel %vm465, %v2666, -inf
    %2669 = vmax.xlane.f32.xlu0 %v2668
    %v2670 = vpop.xlane.xlu0 %2669
    %v2671 = vsel %vm465, %v2667, -inf
    %2672 = vmax.xlane.f32.xlu0 %v2671
    %v2673 = vpop.xlane.xlu0 %2672
    %v2674 = vsub.f32 %v2666, %v2670
    %v2675 = vsub.f32 %v2667, %v2673
    %v2676 = vmul.f32 %v2674, 1.442695
    %v2677 = vpow.pop %v2676
    %v2678 = vmul.f32 %v2675, 1.442695
    %v2679 = vpow.pop %v2678
    %v2680 = vsel %vm465, %v2677, 0.0
    %2681 = vadd.xlane.f32.xlu0 %v2680
    %v2682 = vpop.xlane.xlu0 %2681
    %v2683 = vsel %vm465, %v2679, 0.0
    %2684 = vadd.xlane.f32.xlu0 %v2683
    %v2685 = vpop.xlane.xlu0 %2684
    %v2686 = vrcp.pop %v2682
    %v2687 = vrcp.pop %v2685
    %v2688 = vmul.f32 %v2677, %v2686
    %v2689 = vmul.f32 %v2679, %v2687
    %v2690 = vpack.c.bf16 %v2688, %v2688
    %v2691 = vpack.c.bf16 %v2689, %v2689
    %2692 = vrot.lane.b32.xlu0 %v2030, 112
    %v2693 = vpop.permute.xlu0 %2692
    %v2695 = vsel %vm465, %v2690, 0
    %v2698 = vsel %vm587, %v2693, 0
    %2700 = vmatprep.subr.bf16.mxu0 0
    %2701 = vmatpush1.bf16.msra.mxu0 0
    %2702 = vmatprep.subr.bf16.mxu0 0
    %2703 = vmatpush1.bf16.msra.mxu0 0
    %2704 = vmatprep.subr.bf16.mxu0 0
    %2705 = vmatpush1.bf16.msra.mxu0 0
    %2706 = vmatprep.subr.bf16.mxu0 0
    %2707 = vmatpush1.bf16.msra.mxu0 0
    %2708 = vmatprep.subr.bf16.mxu0 0
    %2709 = vmatpush1.bf16.msra.mxu0 0
    %2710 = vmatprep.subr.bf16.mxu0 0
    %2711 = vmatpush1.bf16.msra.mxu0 0
    %2712 = vmatprep.subr.bf16.mxu0 0
    %2713 = vmatpush1.bf16.msra.mxu0 0
    %2714 = vmatprep.subr.bf16.mxu0 0
    %2715 = vmatpush1.bf16.msra.mxu0 %v2698
    %2716 = vmatprep.subr.bf16.mxu0 0
    %2717 = vmatpush2.bf16.msra.mxu0 0
    %2718 = vmatprep.subr.bf16.mxu0 0
    %2719 = vmatpush2.bf16.msra.mxu0 0
    %2720 = vmatprep.subr.bf16.mxu0 0
    %2721 = vmatpush2.bf16.msra.mxu0 0
    %2722 = vmatprep.subr.bf16.mxu0 0
    %2723 = vmatpush2.bf16.msra.mxu0 0
    %2724 = vmatprep.subr.bf16.mxu0 0
    %2725 = vmatpush2.bf16.msra.mxu0 0
    %2726 = vmatprep.subr.bf16.mxu0 0
    %2727 = vmatpush2.bf16.msra.mxu0 0
    %2728 = vmatprep.subr.bf16.mxu0 0
    %2729 = vmatpush2.bf16.msra.mxu0 0
    %2730 = vmatprep.subr.bf16.mxu0 0
    %2731 = vmatpush2.bf16.msra.mxu0 0
    %2732 = vmatprep.mubr.bf16.mxu0 0
    %2733 = vmatmul.mubr.bf16.gmra.mxu0 %v2695
    %v2734 = vpop.f32.mrf.mxu0
    %v2735 = vadd.f32 0.0, %v2734
    %v2736 = vpop.f32.mrf.mxu0
    %v2737 = vpop.f32.mrf.mxu0
    %v2738 = vpop.f32.mrf.mxu0
    %2739 = vdwg.mxu0
    %2740 = vrot.lane.b32.xlu0 %v2031, 112
    %v2741 = vpop.permute.xlu0 %2740
    %v2743 = vsel %vm465, %v2691, 0
    %v2746 = vsel %vm587, %v2741, 0
    %2748 = vmatprep.subr.bf16.mxu0 0
    %2749 = vmatpush1.bf16.msra.mxu0 0
    %2750 = vmatprep.subr.bf16.mxu0 0
    %2751 = vmatpush1.bf16.msra.mxu0 0
    %2752 = vmatprep.subr.bf16.mxu0 0
    %2753 = vmatpush1.bf16.msra.mxu0 0
    %2754 = vmatprep.subr.bf16.mxu0 0
    %2755 = vmatpush1.bf16.msra.mxu0 0
    %2756 = vmatprep.subr.bf16.mxu0 0
    %2757 = vmatpush1.bf16.msra.mxu0 0
    %2758 = vmatprep.subr.bf16.mxu0 0
    %2759 = vmatpush1.bf16.msra.mxu0 0
    %2760 = vmatprep.subr.bf16.mxu0 0
    %2761 = vmatpush1.bf16.msra.mxu0 0
    %2762 = vmatprep.subr.bf16.mxu0 0
    %2763 = vmatpush1.bf16.msra.mxu0 %v2746
    %2764 = vmatprep.subr.bf16.mxu0 0
    %2765 = vmatpush2.bf16.msra.mxu0 0
    %2766 = vmatprep.subr.bf16.mxu0 0
    %2767 = vmatpush2.bf16.msra.mxu0 0
    %2768 = vmatprep.subr.bf16.mxu0 0
    %2769 = vmatpush2.bf16.msra.mxu0 0
    %2770 = vmatprep.subr.bf16.mxu0 0
    %2771 = vmatpush2.bf16.msra.mxu0 0
    %2772 = vmatprep.subr.bf16.mxu0 0
    %2773 = vmatpush2.bf16.msra.mxu0 0
    %2774 = vmatprep.subr.bf16.mxu0 0
    %2775 = vmatpush2.bf16.msra.mxu0 0
    %2776 = vmatprep.subr.bf16.mxu0 0
    %2777 = vmatpush2.bf16.msra.mxu0 0
    %2778 = vmatprep.subr.bf16.mxu0 0
    %2779 = vmatpush2.bf16.msra.mxu0 0
    %2780 = vmatprep.mubr.bf16.mxu0 0
    %2781 = vmatmul.mubr.bf16.gmra.mxu0 %v2743
    %v2782 = vpop.f32.mrf.mxu0
    %v2783 = vadd.f32 0.0, %v2782
    %v2784 = vpop.f32.mrf.mxu0
    %v2785 = vpop.f32.mrf.mxu0
    %v2786 = vpop.f32.mrf.mxu0
    %2787 = vdwg.mxu0
    %v2788 = vpack.c.bf16 %v2783, %v2735
    %v2790 = vsel %vm465, %v2788, 0
    %v2793 = vsel %vm587, %v2024, 0
    %2795 = vmatprep.subr.bf16.mxu0 0
    %2796 = vmatpush1.bf16.msra.mxu0 0
    %2797 = vmatprep.subr.bf16.mxu0 0
    %2798 = vmatpush1.bf16.msra.mxu0 0
    %2799 = vmatprep.subr.bf16.mxu0 0
    %2800 = vmatpush1.bf16.msra.mxu0 0
    %2801 = vmatprep.subr.bf16.mxu0 0
    %2802 = vmatpush1.bf16.msra.mxu0 0
    %2803 = vmatprep.subr.bf16.mxu0 0
    %2804 = vmatpush1.bf16.msra.mxu0 0
    %2805 = vmatprep.subr.bf16.mxu0 0
    %2806 = vmatpush1.bf16.msra.mxu0 0
    %2807 = vmatprep.subr.bf16.mxu0 0
    %2808 = vmatpush1.bf16.msra.mxu0 0
    %2809 = vmatprep.subr.bf16.mxu0 0
    %2810 = vmatpush1.bf16.msra.mxu0 %v2793
    %2811 = vmatprep.subr.bf16.mxu0 0
    %2812 = vmatpush2.bf16.msra.mxu0 0
    %2813 = vmatprep.subr.bf16.mxu0 0
    %2814 = vmatpush2.bf16.msra.mxu0 0
    %2815 = vmatprep.subr.bf16.mxu0 0
    %2816 = vmatpush2.bf16.msra.mxu0 0
    %2817 = vmatprep.subr.bf16.mxu0 0
    %2818 = vmatpush2.bf16.msra.mxu0 0
    %2819 = vmatprep.subr.bf16.mxu0 0
    %2820 = vmatpush2.bf16.msra.mxu0 0
    %2821 = vmatprep.subr.bf16.mxu0 0
    %2822 = vmatpush2.bf16.msra.mxu0 0
    %2823 = vmatprep.subr.bf16.mxu0 0
    %2824 = vmatpush2.bf16.msra.mxu0 0
    %2825 = vmatprep.subr.bf16.mxu0 0
    %2826 = vmatpush2.bf16.msra.mxu0 0
    %2827 = vmatprep.mubr.bf16.mxu0 0
    %2828 = vmatmul.mubr.bf16.gmra.mxu0 %v2790
    %v2829 = vpop.f32.mrf.mxu0
    %v2830 = vadd.f32 0.0, %v2829
    %v2831 = vpop.f32.mrf.mxu0
    %v2832 = vpop.f32.mrf.mxu0
    %v2833 = vadd.f32 0.0, %v2832
    %v2834 = vpop.f32.mrf.mxu0
    %2835 = vdwg.mxu0
    %v2836 = vadd.f32 %v2560, %v2830
    %v2837 = vadd.f32 %v2563, %v2833
    %2838 = vrot.lane.b32.xlu0 %v2026, 104
    %v2839 = vpop.permute.xlu0 %2838
    %2840 = vrot.lane.b32.xlu0 %v2028, 104
    %v2841 = vpop.permute.xlu0 %2840
    %v2843 = vsel %vm465, %v2839, 0
    %v2846 = vsel %vm465, %v2841, 0
    %2848 = vmatprep.subr.bf16.mxu0 0
    %2849 = vmatpush1.bf16.xpose.msra.mxu0 0
    %2850 = vmatprep.subr.bf16.mxu0 0
    %2851 = vmatpush1.bf16.xpose.msra.mxu0 0
    %2852 = vmatprep.subr.bf16.mxu0 0
    %2853 = vmatpush1.bf16.xpose.msra.mxu0 0
    %2854 = vmatprep.subr.bf16.mxu0 0
    %2855 = vmatpush1.bf16.xpose.msra.mxu0 0
    %2856 = vmatprep.subr.bf16.mxu0 0
    %2857 = vmatpush1.bf16.xpose.msra.mxu0 0
    %2858 = vmatprep.subr.bf16.mxu0 0
    %2859 = vmatpush1.bf16.xpose.msra.mxu0 0
    %2860 = vmatprep.subr.bf16.mxu0 0
    %2861 = vmatpush1.bf16.xpose.msra.mxu0 0
    %2862 = vmatprep.subr.bf16.mxu0 0
    %2863 = vmatpush1.bf16.xpose.msra.mxu0 %v2846
    %2864 = vmatprep.subr.bf16.mxu0 0
    %2865 = vmatpush2.bf16.xpose.msra.mxu0 0
    %2866 = vmatprep.subr.bf16.mxu0 0
    %2867 = vmatpush2.bf16.xpose.msra.mxu0 0
    %2868 = vmatprep.subr.bf16.mxu0 0
    %2869 = vmatpush2.bf16.xpose.msra.mxu0 0
    %2870 = vmatprep.subr.bf16.mxu0 0
    %2871 = vmatpush2.bf16.xpose.msra.mxu0 0
    %2872 = vmatprep.subr.bf16.mxu0 0
    %2873 = vmatpush2.bf16.xpose.msra.mxu0 0
    %2874 = vmatprep.subr.bf16.mxu0 0
    %2875 = vmatpush2.bf16.xpose.msra.mxu0 0
    %2876 = vmatprep.subr.bf16.mxu0 0
    %2877 = vmatpush2.bf16.xpose.msra.mxu0 0
    %2878 = vmatprep.subr.bf16.mxu0 0
    %2879 = vmatpush2.bf16.xpose.msra.mxu0 0
    %2880 = vmatprep.mubr.bf16.mxu0 0
    %2881 = vmatmul.mubr.bf16.gmra.mxu0 %v2843
    %v2882 = vpop.f32.mrf.mxu0
    %v2883 = vadd.f32 0.0, %v2882
    %v2884 = vpop.f32.mrf.mxu0
    %v2885 = vpop.f32.mrf.mxu0
    %v2886 = vpop.f32.mrf.mxu0
    %2887 = vdwg.mxu0
    %2888 = vrot.lane.b32.xlu0 %v2027, 104
    %v2889 = vpop.permute.xlu0 %2888
    %2890 = vrot.lane.b32.xlu0 %v2029, 104
    %v2891 = vpop.permute.xlu0 %2890
    %v2893 = vsel %vm465, %v2889, 0
    %v2896 = vsel %vm465, %v2891, 0
    %2898 = vmatprep.subr.bf16.mxu0 0
    %2899 = vmatpush1.bf16.xpose.msra.mxu0 0
    %2900 = vmatprep.subr.bf16.mxu0 0
    %2901 = vmatpush1.bf16.xpose.msra.mxu0 0
    %2902 = vmatprep.subr.bf16.mxu0 0
    %2903 = vmatpush1.bf16.xpose.msra.mxu0 0
    %2904 = vmatprep.subr.bf16.mxu0 0
    %2905 = vmatpush1.bf16.xpose.msra.mxu0 0
    %2906 = vmatprep.subr.bf16.mxu0 0
    %2907 = vmatpush1.bf16.xpose.msra.mxu0 0
    %2908 = vmatprep.subr.bf16.mxu0 0
    %2909 = vmatpush1.bf16.xpose.msra.mxu0 0
    %2910 = vmatprep.subr.bf16.mxu0 0
    %2911 = vmatpush1.bf16.xpose.msra.mxu0 0
    %2912 = vmatprep.subr.bf16.mxu0 0
    %2913 = vmatpush1.bf16.xpose.msra.mxu0 %v2896
    %2914 = vmatprep.subr.bf16.mxu0 0
    %2915 = vmatpush2.bf16.xpose.msra.mxu0 0
    %2916 = vmatprep.subr.bf16.mxu0 0
    %2917 = vmatpush2.bf16.xpose.msra.mxu0 0
    %2918 = vmatprep.subr.bf16.mxu0 0
    %2919 = vmatpush2.bf16.xpose.msra.mxu0 0
    %2920 = vmatprep.subr.bf16.mxu0 0
    %2921 = vmatpush2.bf16.xpose.msra.mxu0 0
    %2922 = vmatprep.subr.bf16.mxu0 0
    %2923 = vmatpush2.bf16.xpose.msra.mxu0 0
    %2924 = vmatprep.subr.bf16.mxu0 0
    %2925 = vmatpush2.bf16.xpose.msra.mxu0 0
    %2926 = vmatprep.subr.bf16.mxu0 0
    %2927 = vmatpush2.bf16.xpose.msra.mxu0 0
    %2928 = vmatprep.subr.bf16.mxu0 0
    %2929 = vmatpush2.bf16.xpose.msra.mxu0 0
    %2930 = vmatprep.mubr.bf16.mxu0 0
    %2931 = vmatmul.mubr.bf16.gmra.mxu0 %v2893
    %v2932 = vpop.f32.mrf.mxu0
    %v2933 = vadd.f32 0.0, %v2932
    %v2934 = vpop.f32.mrf.mxu0
    %v2935 = vpop.f32.mrf.mxu0
    %v2936 = vpop.f32.mrf.mxu0
    %2937 = vdwg.mxu0
    %v2938 = vmul.f32 %v2883, 0.35355338
    %v2939 = vmul.f32 %v2933, 0.35355338
    %v2940 = vsel %vm465, %v2938, -inf
    %2941 = vmax.xlane.f32.xlu0 %v2940
    %v2942 = vpop.xlane.xlu0 %2941
    %v2943 = vsel %vm465, %v2939, -inf
    %2944 = vmax.xlane.f32.xlu0 %v2943
    %v2945 = vpop.xlane.xlu0 %2944
    %v2946 = vsub.f32 %v2938, %v2942
    %v2947 = vsub.f32 %v2939, %v2945
    %v2948 = vmul.f32 %v2946, 1.442695
    %v2949 = vpow.pop %v2948
    %v2950 = vmul.f32 %v2947, 1.442695
    %v2951 = vpow.pop %v2950
    %v2952 = vsel %vm465, %v2949, 0.0
    %2953 = vadd.xlane.f32.xlu0 %v2952
    %v2954 = vpop.xlane.xlu0 %2953
    %v2955 = vsel %vm465, %v2951, 0.0
    %2956 = vadd.xlane.f32.xlu0 %v2955
    %v2957 = vpop.xlane.xlu0 %2956
    %v2958 = vrcp.pop %v2954
    %v2959 = vrcp.pop %v2957
    %v2960 = vmul.f32 %v2949, %v2958
    %v2961 = vmul.f32 %v2951, %v2959
    %v2962 = vpack.c.bf16 %v2960, %v2960
    %v2963 = vpack.c.bf16 %v2961, %v2961
    %2964 = vrot.lane.b32.xlu0 %v2030, 104
    %v2965 = vpop.permute.xlu0 %2964
    %v2967 = vsel %vm465, %v2962, 0
    %v2970 = vsel %vm587, %v2965, 0
    %2972 = vmatprep.subr.bf16.mxu0 0
    %2973 = vmatpush1.bf16.msra.mxu0 0
    %2974 = vmatprep.subr.bf16.mxu0 0
    %2975 = vmatpush1.bf16.msra.mxu0 0
    %2976 = vmatprep.subr.bf16.mxu0 0
    %2977 = vmatpush1.bf16.msra.mxu0 0
    %2978 = vmatprep.subr.bf16.mxu0 0
    %2979 = vmatpush1.bf16.msra.mxu0 0
    %2980 = vmatprep.subr.bf16.mxu0 0
    %2981 = vmatpush1.bf16.msra.mxu0 0
    %2982 = vmatprep.subr.bf16.mxu0 0
    %2983 = vmatpush1.bf16.msra.mxu0 0
    %2984 = vmatprep.subr.bf16.mxu0 0
    %2985 = vmatpush1.bf16.msra.mxu0 0
    %2986 = vmatprep.subr.bf16.mxu0 0
    %2987 = vmatpush1.bf16.msra.mxu0 %v2970
    %2988 = vmatprep.subr.bf16.mxu0 0
    %2989 = vmatpush2.bf16.msra.mxu0 0
    %2990 = vmatprep.subr.bf16.mxu0 0
    %2991 = vmatpush2.bf16.msra.mxu0 0
    %2992 = vmatprep.subr.bf16.mxu0 0
    %2993 = vmatpush2.bf16.msra.mxu0 0
    %2994 = vmatprep.subr.bf16.mxu0 0
    %2995 = vmatpush2.bf16.msra.mxu0 0
    %2996 = vmatprep.subr.bf16.mxu0 0
    %2997 = vmatpush2.bf16.msra.mxu0 0
    %2998 = vmatprep.subr.bf16.mxu0 0
    %2999 = vmatpush2.bf16.msra.mxu0 0
    %3000 = vmatprep.subr.bf16.mxu0 0
    %3001 = vmatpush2.bf16.msra.mxu0 0
    %3002 = vmatprep.subr.bf16.mxu0 0
    %3003 = vmatpush2.bf16.msra.mxu0 0
    %3004 = vmatprep.mubr.bf16.mxu0 0
    %3005 = vmatmul.mubr.bf16.gmra.mxu0 %v2967
    %v3006 = vpop.f32.mrf.mxu0
    %v3007 = vadd.f32 0.0, %v3006
    %v3008 = vpop.f32.mrf.mxu0
    %v3009 = vpop.f32.mrf.mxu0
    %v3010 = vpop.f32.mrf.mxu0
    %3011 = vdwg.mxu0
    %3012 = vrot.lane.b32.xlu0 %v2031, 104
    %v3013 = vpop.permute.xlu0 %3012
    %v3015 = vsel %vm465, %v2963, 0
    %v3018 = vsel %vm587, %v3013, 0
    %3020 = vmatprep.subr.bf16.mxu0 0
    %3021 = vmatpush1.bf16.msra.mxu0 0
    %3022 = vmatprep.subr.bf16.mxu0 0
    %3023 = vmatpush1.bf16.msra.mxu0 0
    %3024 = vmatprep.subr.bf16.mxu0 0
    %3025 = vmatpush1.bf16.msra.mxu0 0
    %3026 = vmatprep.subr.bf16.mxu0 0
    %3027 = vmatpush1.bf16.msra.mxu0 0
    %3028 = vmatprep.subr.bf16.mxu0 0
    %3029 = vmatpush1.bf16.msra.mxu0 0
    %3030 = vmatprep.subr.bf16.mxu0 0
    %3031 = vmatpush1.bf16.msra.mxu0 0
    %3032 = vmatprep.subr.bf16.mxu0 0
    %3033 = vmatpush1.bf16.msra.mxu0 0
    %3034 = vmatprep.subr.bf16.mxu0 0
    %3035 = vmatpush1.bf16.msra.mxu0 %v3018
    %3036 = vmatprep.subr.bf16.mxu0 0
    %3037 = vmatpush2.bf16.msra.mxu0 0
    %3038 = vmatprep.subr.bf16.mxu0 0
    %3039 = vmatpush2.bf16.msra.mxu0 0
    %3040 = vmatprep.subr.bf16.mxu0 0
    %3041 = vmatpush2.bf16.msra.mxu0 0
    %3042 = vmatprep.subr.bf16.mxu0 0
    %3043 = vmatpush2.bf16.msra.mxu0 0
    %3044 = vmatprep.subr.bf16.mxu0 0
    %3045 = vmatpush2.bf16.msra.mxu0 0
    %3046 = vmatprep.subr.bf16.mxu0 0
    %3047 = vmatpush2.bf16.msra.mxu0 0
    %3048 = vmatprep.subr.bf16.mxu0 0
    %3049 = vmatpush2.bf16.msra.mxu0 0
    %3050 = vmatprep.subr.bf16.mxu0 0
    %3051 = vmatpush2.bf16.msra.mxu0 0
    %3052 = vmatprep.mubr.bf16.mxu0 0
    %3053 = vmatmul.mubr.bf16.gmra.mxu0 %v3015
    %v3054 = vpop.f32.mrf.mxu0
    %v3055 = vadd.f32 0.0, %v3054
    %v3056 = vpop.f32.mrf.mxu0
    %v3057 = vpop.f32.mrf.mxu0
    %v3058 = vpop.f32.mrf.mxu0
    %3059 = vdwg.mxu0
    %v3060 = vpack.c.bf16 %v3055, %v3007
    %v3062 = vsel %vm465, %v3060, 0
    %v3065 = vsel %vm587, %v2025, 0
    %3067 = vmatprep.subr.bf16.mxu0 0
    %3068 = vmatpush1.bf16.msra.mxu0 0
    %3069 = vmatprep.subr.bf16.mxu0 0
    %3070 = vmatpush1.bf16.msra.mxu0 0
    %3071 = vmatprep.subr.bf16.mxu0 0
    %3072 = vmatpush1.bf16.msra.mxu0 0
    %3073 = vmatprep.subr.bf16.mxu0 0
    %3074 = vmatpush1.bf16.msra.mxu0 0
    %3075 = vmatprep.subr.bf16.mxu0 0
    %3076 = vmatpush1.bf16.msra.mxu0 0
    %3077 = vmatprep.subr.bf16.mxu0 0
    %3078 = vmatpush1.bf16.msra.mxu0 0
    %3079 = vmatprep.subr.bf16.mxu0 0
    %3080 = vmatpush1.bf16.msra.mxu0 0
    %3081 = vmatprep.subr.bf16.mxu0 0
    %3082 = vmatpush1.bf16.msra.mxu0 %v3065
    %3083 = vmatprep.subr.bf16.mxu0 0
    %3084 = vmatpush2.bf16.msra.mxu0 0
    %3085 = vmatprep.subr.bf16.mxu0 0
    %3086 = vmatpush2.bf16.msra.mxu0 0
    %3087 = vmatprep.subr.bf16.mxu0 0
    %3088 = vmatpush2.bf16.msra.mxu0 0
    %3089 = vmatprep.subr.bf16.mxu0 0
    %3090 = vmatpush2.bf16.msra.mxu0 0
    %3091 = vmatprep.subr.bf16.mxu0 0
    %3092 = vmatpush2.bf16.msra.mxu0 0
    %3093 = vmatprep.subr.bf16.mxu0 0
    %3094 = vmatpush2.bf16.msra.mxu0 0
    %3095 = vmatprep.subr.bf16.mxu0 0
    %3096 = vmatpush2.bf16.msra.mxu0 0
    %3097 = vmatprep.subr.bf16.mxu0 0
    %3098 = vmatpush2.bf16.msra.mxu0 0
    %3099 = vmatprep.mubr.bf16.mxu0 0
    %3100 = vmatmul.mubr.bf16.gmra.mxu0 %v3062
    %v3101 = vpop.f32.mrf.mxu0
    %v3102 = vadd.f32 0.0, %v3101
    %v3103 = vpop.f32.mrf.mxu0
    %v3104 = vpop.f32.mrf.mxu0
    %v3105 = vadd.f32 0.0, %v3104
    %v3106 = vpop.f32.mrf.mxu0
    %3107 = vdwg.mxu0
    %v3108 = vadd.f32 %v2836, %v3102
    %v3109 = vadd.f32 %v2837, %v3105
    %v3110 = vadd.f32 %v1771, %v3108
    %v3111 = vadd.f32 %v1772, %v3109
    %s3112 = scalar_lea.vmem %s12, 1
    %v3113 = vld [vmem:[%s3112] sm:$0x1]
    %v3115 = vlaneseq
    %v3116 = vshrl.u32 %v3115, 7
    %v3117 = vsub.s32 0, %v3116
    %v3118 = vrot.slane %v3113, %v3117
    %v3120 = vadd.f32 %v3110, %v3118
    %v3121 = vadd.f32 %v3111, %v3118
    %s3122 = scalar_lea.vmem %s13, 1
    %v3123 = vld [vmem:[%s3122] sm:$0x1]
    %s3124 = scalar_lea.vmem %s14, 1
    %v3125 = vld [vmem:[%s3124] sm:$0x1]
    %v3126 = vsel %vm215, %v3120, 0.0
    %3127 = vadd.xlane.f32.xlu0 %v3126
    %v3128 = vpop.xlane.xlu0 %3127
    %v3129 = vsel %vm215, %v3121, 0.0
    %3130 = vadd.xlane.f32.xlu0 %v3129
    %v3131 = vpop.xlane.xlu0 %3130
    %v3132 = vmul.f32 %v3128, %v222
    %v3133 = vmul.f32 %v3131, %v222
    %v3134 = vsub.f32 %v3120, %v3132
    %v3135 = vsub.f32 %v3121, %v3133
    %v3136 = vmul.f32 %v3134, %v3134
    %v3137 = vmul.f32 %v3135, %v3135
    %v3138 = vsel %vm215, %v3136, 0.0
    %3139 = vadd.xlane.f32.xlu0 %v3138
    %v3140 = vpop.xlane.xlu0 %3139
    %v3141 = vsel %vm215, %v3137, 0.0
    %3142 = vadd.xlane.f32.xlu0 %v3141
    %v3143 = vpop.xlane.xlu0 %3142
    %v3144 = vmul.f32 %v3140, %v222
    %v3145 = vmul.f32 %v3143, %v222
    %v3146 = vadd.f32 %v3144, 1e-05
    %v3147 = vadd.f32 %v3145, 1e-05
    %v3148 = vrsqrt.pop %v3146
    %v3149 = vrsqrt.pop %v3147
    %v3150 = vmul.f32 %v3134, %v3148
    %v3151 = vmul.f32 %v3135, %v3149
    %v3153 = vlaneseq
    %v3154 = vshrl.u32 %v3153, 7
    %v3155 = vsub.s32 0, %v3154
    %v3156 = vrot.slane %v3123, %v3155
    %v3158 = vmul.f32 %v3150, %v3156
    %v3159 = vmul.f32 %v3151, %v3156
    %v3161 = vlaneseq
    %v3162 = vshrl.u32 %v3161, 7
    %v3163 = vsub.s32 0, %v3162
    %v3164 = vrot.slane %v3125, %v3163
    %v3166 = vadd.f32 %v3158, %v3164
    %v3167 = vadd.f32 %v3159, %v3164
    %v3168 = vpack.c.bf16 %v3167, %v3166
    %s3169 = scalar_lea.vmem %s15, 16
    %v3170 = vld [vmem:[%s3169] sm:$0xf]
    %v3171 = vld [vmem:[%s3169 + $0x4] sm:$0xf]
    %v3172 = vld [vmem:[%s3169 + $0x8] sm:$0xf]
    %v3173 = vld [vmem:[%s3169 + $0xc] sm:$0xf]
    %s3174 = scalar_lea.vmem %s16, 1
    %v3175 = vld [vmem:[%s3174] sm:$0x1]
    %v3177 = vlaneseq
    %v3178 = vshrl.u32 %v3177, 7
    %v3179 = vsub.s32 0, %v3178
    %v3180 = vrot.slane %v3175, %v3179
    %v3186 = vunpack.c.l.b16 %v3170
    %v3187 = vunpack.c.l.b16 %v3171
    %v3188 = vunpack.c.l.b16 %v3172
    %v3189 = vunpack.c.l.b16 %v3173
    %v3190 = vpack.c.b16 %v3187, %v3186
    %v3191 = vpack.c.b16 %v3189, %v3188
    %v3195 = vsel %vm215, %v3168, 0
    %3197 = vmatprep.subr.bf16.mxu0 0
    %3198 = vmatpush1.bf16.msra.mxu0 0
    %3199 = vmatprep.subr.bf16.mxu0 0
    %3200 = vmatpush1.bf16.msra.mxu0 0
    %3201 = vmatprep.subr.bf16.mxu0 0
    %3202 = vmatpush1.bf16.msra.mxu0 0
    %3203 = vmatprep.subr.bf16.mxu0 0
    %3204 = vmatpush1.bf16.msra.mxu0 0
    %3205 = vmatprep.subr.bf16.mxu0 0
    %3206 = vmatpush1.bf16.msra.mxu0 0
    %3207 = vmatprep.subr.bf16.mxu0 0
    %3208 = vmatpush1.bf16.msra.mxu0 0
    %3209 = vmatprep.subr.bf16.mxu0 0
    %3210 = vmatpush1.bf16.msra.mxu0 %v3191
    %3211 = vmatprep.subr.bf16.mxu0 0
    %3212 = vmatpush1.bf16.msra.mxu0 %v3190
    %3213 = vmatprep.subr.bf16.mxu0 0
    %3214 = vmatpush2.bf16.msra.mxu0 0
    %3215 = vmatprep.subr.bf16.mxu0 0
    %3216 = vmatpush2.bf16.msra.mxu0 0
    %3217 = vmatprep.subr.bf16.mxu0 0
    %3218 = vmatpush2.bf16.msra.mxu0 0
    %3219 = vmatprep.subr.bf16.mxu0 0
    %3220 = vmatpush2.bf16.msra.mxu0 0
    %3221 = vmatprep.subr.bf16.mxu0 0
    %3222 = vmatpush2.bf16.msra.mxu0 0
    %3223 = vmatprep.subr.bf16.mxu0 0
    %3224 = vmatpush2.bf16.msra.mxu0 0
    %3225 = vmatprep.subr.bf16.mxu0 0
    %3226 = vmatpush2.bf16.msra.mxu0 0
    %3227 = vmatprep.subr.bf16.mxu0 0
    %3228 = vmatpush2.bf16.msra.mxu0 0
    %3229 = vmatprep.mubr.bf16.mxu0 0
    %3230 = vmatmul.mubr.bf16.gmra.mxu0 %v3195
    %v3231 = vpop.f32.mrf.mxu0
    %v3232 = vadd.f32 %v3180, %v3231
    %v3233 = vpop.f32.mrf.mxu0
    %v3234 = vpop.f32.mrf.mxu0
    %v3235 = vadd.f32 %v3180, %v3234
    %v3236 = vpop.f32.mrf.mxu0
    %3237 = vdwg.mxu0
    %v3238 = vmul.f32 %v3232, %v3232
    %v3239 = vmul.f32 %v3235, %v3235
    %v3240 = vmul.f32 %v3232, %v3238
    %v3241 = vmul.f32 %v3235, %v3239
    %v3242 = vmul.f32 %v3240, 0.044715
    %v3243 = vmul.f32 %v3241, 0.044715
    %v3244 = vadd.f32 %v3232, %v3242
    %v3245 = vadd.f32 %v3235, %v3243
    %v3246 = vmul.f32 %v3244, 0.7978846
    %v3247 = vmul.f32 %v3245, 0.7978846
    %v3248 = vtanh.pop %v3246
    %v3249 = vtanh.pop %v3247
    %v3250 = vadd.f32 %v3248, 1.0
    %v3251 = vadd.f32 %v3249, 1.0
    %v3252 = vmul.f32 %v3250, 0.5
    %v3253 = vmul.f32 %v3251, 0.5
    %v3254 = vmul.f32 %v3232, %v3252
    %v3255 = vmul.f32 %v3235, %v3253
    %v3256 = vpack.c.bf16 %v3255, %v3254
    %s3257 = scalar_lea.vmem %s17, 32
    %v3258 = vld [vmem:[%s3257] sm:$0xf]
    %v3259 = vld [vmem:[%s3257 + $0x4] sm:$0xf]
    %v3260 = vld [vmem:[%s3257 + $0x8] sm:$0xf]
    %v3261 = vld [vmem:[%s3257 + $0xc] sm:$0xf]
    %v3262 = vld [vmem:[%s3257 + $0x10] sm:$0xf]
    %v3263 = vld [vmem:[%s3257 + $0x14] sm:$0xf]
    %v3264 = vld [vmem:[%s3257 + $0x18] sm:$0xf]
    %v3265 = vld [vmem:[%s3257 + $0x1c] sm:$0xf]
    %s3266 = scalar_lea.vmem %s18, 1
    %v3267 = vld [vmem:[%s3266] sm:$0x1]
    %v3269 = vlaneseq
    %v3270 = vshrl.u32 %v3269, 7
    %v3271 = vsub.s32 0, %v3270
    %v3272 = vrot.slane %v3267, %v3271
    %v3282 = vunpack.c.l.b16 %v3258
    %v3283 = vunpack.c.l.b16 %v3259
    %v3284 = vunpack.c.l.b16 %v3260
    %v3285 = vunpack.c.l.b16 %v3261
    %v3286 = vunpack.c.l.b16 %v3262
    %v3287 = vunpack.c.l.b16 %v3263
    %v3288 = vunpack.c.l.b16 %v3264
    %v3289 = vunpack.c.l.b16 %v3265
    %v3290 = vpack.c.b16 %v3283, %v3282
    %v3291 = vpack.c.b16 %v3285, %v3284
    %v3292 = vpack.c.b16 %v3287, %v3286
    %v3293 = vpack.c.b16 %v3289, %v3288
    %v3299 = vsel %vm1726, %v3256, 0
    %3301 = vmatprep.subr.bf16.mxu0 0
    %3302 = vmatpush1.bf16.msra.mxu0 0
    %3303 = vmatprep.subr.bf16.mxu0 0
    %3304 = vmatpush1.bf16.msra.mxu0 0
    %3305 = vmatprep.subr.bf16.mxu0 0
    %3306 = vmatpush1.bf16.msra.mxu0 0
    %3307 = vmatprep.subr.bf16.mxu0 0
    %3308 = vmatpush1.bf16.msra.mxu0 0
    %3309 = vmatprep.subr.bf16.mxu0 0
    %3310 = vmatpush1.bf16.msra.mxu0 %v3293
    %3311 = vmatprep.subr.bf16.mxu0 0
    %3312 = vmatpush1.bf16.msra.mxu0 %v3292
    %3313 = vmatprep.subr.bf16.mxu0 0
    %3314 = vmatpush1.bf16.msra.mxu0 %v3291
    %3315 = vmatprep.subr.bf16.mxu0 0
    %3316 = vmatpush1.bf16.msra.mxu0 %v3290
    %3317 = vmatprep.subr.bf16.mxu0 0
    %3318 = vmatpush2.bf16.msra.mxu0 0
    %3319 = vmatprep.subr.bf16.mxu0 0
    %3320 = vmatpush2.bf16.msra.mxu0 0
    %3321 = vmatprep.subr.bf16.mxu0 0
    %3322 = vmatpush2.bf16.msra.mxu0 0
    %3323 = vmatprep.subr.bf16.mxu0 0
    %3324 = vmatpush2.bf16.msra.mxu0 0
    %3325 = vmatprep.subr.bf16.mxu0 0
    %3326 = vmatpush2.bf16.msra.mxu0 0
    %3327 = vmatprep.subr.bf16.mxu0 0
    %3328 = vmatpush2.bf16.msra.mxu0 0
    %3329 = vmatprep.subr.bf16.mxu0 0
    %3330 = vmatpush2.bf16.msra.mxu0 0
    %3331 = vmatprep.subr.bf16.mxu0 0
    %3332 = vmatpush2.bf16.msra.mxu0 0
    %3333 = vmatprep.mubr.bf16.mxu0 0
    %3334 = vmatmul.mubr.bf16.gmra.mxu0 %v3299
    %v3335 = vpop.f32.mrf.mxu0
    %v3336 = vadd.f32 %v3272, %v3335
    %v3337 = vpop.f32.mrf.mxu0
    %v3338 = vpop.f32.mrf.mxu0
    %v3339 = vadd.f32 %v3272, %v3338
    %v3340 = vpop.f32.mrf.mxu0
    %3341 = vdwg.mxu0
    %v3342 = vadd.f32 %v3120, %v3336
    %v3343 = vadd.f32 %v3121, %v3339
    %3344 = vst.msk [vmem:[#allocation11] sm:$0xff] %vm215, %v3342
    %3345 = vst.msk [vmem:[#allocation11 + $0x8] sm:$0xff] %vm215, %v3343
    // Predicated region
    $region94: #{tpu_custom_call.1} parent=1 // pred_check
      _
    $region95: #{tpu_custom_call.1} parent=1 // pred_check_branch
      %3347 = sbr.rel (0) target = $region97
    $region96: #{tpu_custom_call.1} parent=1 // pred_region
      %s3349 = ssub.s32 256, 256
      %3350 = vsyncadd [#allocation5], %s3349
      %s3351 = sshll.u32 [#allocation11], 4
      %s3352 = int_to_ptr.vmem [resolvable:$true] %s3351
      %3357 = dma.vmem_to_hbm [thread:$0]  %s3352, 256, %s19, [#allocation5], 128, 128, 8
    $region97: #{tpu_custom_call.1} parent=1 // pred_fallthru
      _
    // Predicated region
    $region98: #{tpu_custom_call.1} parent=1 // pred_check
      _
    $region99: #{tpu_custom_call.1} parent=1 // pred_check_branch
      %3359 = sbr.rel (0) target = $region101
    $region100: #{tpu_custom_call.1} parent=1 // pred_region
      %3360 = dma.done [#allocation5], 256
    $region101: #{tpu_custom_call.1} parent=1 // pred_fallthru
      _
    %3361 = vsyncpa [#allocation4], 1
    %3362 = vsyncpa [#allocation9], 1
    %3363 = vsyncpa [#allocation5], 1
    %3364 = vsyncpa [#allocation6], 1

</llo_original>
